<compile_context>
chip_gen: v6e
topology: v6e:2x2x1
jax: 0.10.0
libtpu: 0.0.40
codegen_flags: <defaults>
</compile_context>

<pallas_src>
import functools
import math

import jax
import jax.numpy as jnp
from jax.experimental import pallas as pl
from jax.experimental.pallas import tpu as pltpu

_EPS = 1e-5


def _ln_last(x, gamma, beta, eps=_EPS):
    # PyTorch nn.LayerNorm: biased variance over the last axis, f32 stats.
    mu = jnp.mean(x, axis=-1, keepdims=True)
    var = jnp.mean(jnp.square(x - mu), axis=-1, keepdims=True)
    return (x - mu) * jax.lax.rsqrt(var + eps) * gamma + beta


def _gelu_exact(x):
    # nn.GELU() default = exact erf-based GELU.
    return 0.5 * x * (1.0 + jax.lax.erf(x * (1.0 / math.sqrt(2.0))))


def _mm(a, wt):
    """a[..., K] @ wt[K, N] -> [..., N].

    wt is the pre-transposed (K, N) weight, so the contraction is lhs-minor x
    rhs-second-minor (MXU native, no relayout); bf16 operands, f32 accumulate.
    """
    return jax.lax.dot_general(
        a.astype(jnp.bfloat16), wt.astype(jnp.bfloat16),
        dimension_numbers=(((a.ndim - 1,), (0,)), ((), ())),
        preferred_element_type=jnp.float32)


def _mm_nt(a, w):
    """Reference-side matmul against a PyTorch-layout (N, K) weight."""
    return jax.lax.dot_general(
        a.astype(jnp.bfloat16), w.astype(jnp.bfloat16),
        dimension_numbers=(((a.ndim - 1,), (1,)), ((), ())),
        preferred_element_type=jnp.float32)


def lmlp_kernel(*refs, has_skip):
    if has_skip:
        x_ref, skip_ref = refs[0], refs[1]
        rest = refs[2:]
    else:
        x_ref, skip_ref = refs[0], None
        rest = refs[1:]
    (vecd_ref, f1b_ref, vecl_ref, lw_ref,
     rwt_ref, pwt_ref, f1wt_ref, f2wt_ref, o_ref) = rest

    Bb, L, D = x_ref.shape
    M = Bb * L

    x3 = x_ref[...].astype(jnp.float32)
    if skip_ref is not None:
        x3 = x3 + skip_ref[...].astype(jnp.float32)          # fused skip add

    vecd = vecd_ref[...]                                      # (5, D) f32
    n1g, n1b = vecd[0], vecd[1]
    r_b, p_b, f2_b = vecd[2], vecd[3], vecd[4]
    f1_b = f1b_ref[...][0]                                    # (H,)
    vecl = vecl_ref[...]                                      # (L, 3) f32
    g2 = vecl[:, 0:1].reshape(1, L, 1)                        # norm2 gamma (per token)
    b2 = vecl[:, 1:2].reshape(1, L, 1)                        # norm2 beta
    l_b = vecl[:, 2:3].reshape(1, L, 1)                       # token-mix bias

    x2d = x3.reshape(M, D)                                    # folded (Bb*L, D) row slab

    # ---- r = Linear(D, D)(norm1(x)). norm1(x) is NOT kept live across the
    # token mix; it is recomputed later (cheap VPU) to cut vreg/spill pressure.
    r = _mm(_ln_last(x2d, n1g, n1b), rwt_ref[...]) + r_b      # (M, D) f32

    # ---- norm2 over the token dim L (vectorized over the Bb slab) + token mix.
    mu2 = jnp.mean(x3, axis=1, keepdims=True)                 # (Bb, 1, D)
    var2 = jnp.mean(jnp.square(x3 - mu2), axis=1, keepdims=True)
    xn2 = (x3 - mu2) * jax.lax.rsqrt(var2 + _EPS) * g2 + b2   # (Bb, L, D) f32
    # (Bb,L,L) @ (Bb,L,D): lhs contracts its minor dim, rhs its second-minor
    # dim -- MXU-native layout, no relayout; the (L,L) broadcast over Bb is tiny.
    # TODO(synk): for very small L (<=32) an unrolled VPU broadcast-FMA would
    # overlap with the big channel matmuls instead of under-filling the MXU.
    lw_b = jnp.broadcast_to(lw_ref[...][None], (Bb, L, L))    # bf16
    lmix = jax.lax.dot_general(
        lw_b, xn2.astype(jnp.bfloat16),
        dimension_numbers=(((2,), (1,)), ((0,), (0,))),
        preferred_element_type=jnp.float32) + l_b             # (Bb, L, D) f32
    lmix = lmix.reshape(M, D)

    # ---- x = norm1(x) + proj(l + r)  (residual uses the *normalized* x: the
    # PyTorch forward rebinds x = self.norm1(x) before this residual).
    proj = _mm(lmix + r, pwt_ref[...]) + p_b                  # (M, D)
    x2 = _ln_last(x2d, n1g, n1b) + proj                       # recomputed norm1

    # ---- MLP branch: fc2(gelu(fc1(norm1(x2)))), exact erf GELU (PyTorch default).
    xn = _ln_last(x2, n1g, n1b)
    h = _gelu_exact(_mm(xn, f1wt_ref[...]) + f1_b)            # (M, H) f32
    mlp = _mm(h, f2wt_ref[...]) + f2_b                        # (M, D)

    o_ref[...] = (x2 + mlp).reshape(Bb, L, D).astype(o_ref.dtype)


def _vmem_estimate(block_b, L, D, H, param_bytes, has_skip, weight_buffers):
    """Rough per-step VMEM footprint (bytes): pipelined activation blocks +
    weight buffers + in-kernel f32 temporaries (upper bound)."""
    rows = block_b * L
    n_act = 2 + (1 if has_skip else 0)             # x, out, (skip)
    act = n_act * 2 * rows * D * 4                 # double-buffered f32 blocks
    interm = (10 * rows * D + 2 * rows * H) * 4    # f32 temporaries / spills
    return act + interm + weight_buffers * param_bytes


def _pick_block_b(B, L, vmem_est_fn, target_rows=1024, min_split_rows=256,
                  vmem_budget=40 << 20):
    """Largest divisor of B that keeps block_b*L <= target_rows and fits the
    VMEM budget. Splits into >=2 grid steps only when each step still feeds
    >= min_split_rows rows to the MXU (only useful on v7x megacore); on 1-TC
    chips extra grid steps are pure overhead."""
    divisors = [d for d in range(1, B + 1) if B % d == 0]
    fitting = [d for d in divisors
               if d * L <= target_rows and vmem_est_fn(d) <= vmem_budget]
    if not fitting:
        fitting = [1]
    best = max(fitting)
    if best == B and B >= 2:
        split = [d for d in fitting if d < B and d * L >= min_split_rows]
        if split:
            best = max(split)
    return best


def lmlp_forward(x, params, skip=None, block_b=None, single_buffer_weights=True):
    """x: (B, L, D) float32, optional skip (B, L, D). Returns (B, L, D)."""
    B, L, D = x.shape
    H = params["fc1_w"].shape[0]
    has_skip = skip is not None
    single_buffer_weights = single_buffer_weights and hasattr(pl, "Buffered")

    f32, bf16 = jnp.float32, jnp.bfloat16
    # Pack the tiny per-feature params into two slabs and pre-transpose the
    # channel weights once (one-time XLA ops, outside the kernel).
    vec_d = jnp.concatenate(
        [params["n1_g"], params["n1_b"], params["r_b"],
         params["proj_b"], params["fc2_b"]], axis=0).astype(f32)          # (5, D)
    vec_l = jnp.concatenate(
        [params["n2_g"], params["n2_b"], params["l_b"]], axis=1).astype(f32)  # (L, 3)
    f1_b = params["fc1_b"].astype(f32)                                    # (1, H)
    l_w = params["l_w"].astype(bf16)                                      # (L, L) lhs
    r_wt = params["r_w"].T.astype(bf16)                                   # (D, D)
    proj_wt = params["proj_w"].T.astype(bf16)                             # (D, D)
    fc1_wt = params["fc1_w"].T.astype(bf16)                               # (D, H)
    fc2_wt = params["fc2_w"].T.astype(bf16)                               # (H, D)

    param_inputs = [vec_d, f1_b, vec_l, l_w, r_wt, proj_wt, fc1_wt, fc2_wt]
    param_bytes = sum(int(a.size) * a.dtype.itemsize for a in param_inputs)
    wbufs = 1 if single_buffer_weights else 2
    est = lambda bb: _vmem_estimate(bb, L, D, H, param_bytes, has_skip, wbufs)

    if block_b is None:
        block_b = _pick_block_b(B, L, est)
    assert B % block_b == 0, (B, block_b)

    def full(shape):
        idx = lambda i: (0,) * len(shape)
        if single_buffer_weights:
            # Constant block index -> second buffer buys nothing; single-buffer.
            return pl.BlockSpec(shape, idx, pipeline_mode=pl.Buffered(1))
        return pl.BlockSpec(shape, idx)

    xspec = pl.BlockSpec((block_b, L, D), lambda i: (i, 0, 0))
    in_specs = [xspec] + ([xspec] if has_skip else []) + [
        full((5, D)),          # packed norm1 gamma/beta, r/proj/fc2 biases
        full((1, H)),          # fc1 bias
        full((L, 3)),          # packed norm2 gamma/beta, token-mix bias
        full((L, L)),          # token-mix weight (lhs layout)
        full((D, D)),          # r weight, pre-transposed (K, N)
        full((D, D)),          # proj weight, pre-transposed
        full((D, H)),          # fc1 weight, pre-transposed
        full((H, D)),          # fc2 weight, pre-transposed
    ]
    inputs = [x] + ([skip] if has_skip else []) + param_inputs

    flops = 2 * B * L * (L * D + 2 * D * D + 2 * D * H)
    bytes_accessed = (sum(int(a.size) * a.dtype.itemsize for a in inputs)
                      + int(B * L * D) * x.dtype.itemsize)
    cost = pl.CostEstimate(flops=flops, transcendentals=B * L * H,
                           bytes_accessed=bytes_accessed)

    # Claim only what this kernel needs (+ headroom for Mosaic internal
    # scratch), never a blanket 64 MiB (== v7x physical VMEM).
    vmem_limit = max(32 << 20, int(est(block_b) * 1.25) + (8 << 20))

    return pl.pallas_call(
        functools.partial(lmlp_kernel, has_skip=has_skip),
        out_shape=jax.ShapeDtypeStruct((B, L, D), x.dtype),
        grid_spec=pltpu.PrefetchScalarGridSpec(
            num_scalar_prefetch=0,
            grid=(B // block_b,),
            in_specs=in_specs,
            out_specs=pl.BlockSpec((block_b, L, D), lambda i: (i, 0, 0)),
        ),
        compiler_params=pltpu.CompilerParams(
            dimension_semantics=("parallel",),
            vmem_limit_bytes=vmem_limit,
        ),
        cost_estimate=cost,
    )(*inputs)


def lmlp_reference(x, params, skip=None):
    """Plain-JAX mirror of the PyTorch forward using the kernel's numerics
    (bf16 matmul operands, f32 accumulation, f32 LayerNorm stats)."""
    if skip is not None:
        x = x + skip
    xperm = jnp.swapaxes(x, 1, 2)                            # (B, D, L)
    xn1 = _ln_last(x, params["n1_g"][0], params["n1_b"][0])
    xpn = _ln_last(xperm, params["n2_g"][:, 0], params["n2_b"][:, 0])
    l = _mm_nt(xpn, params["l_w"]) + params["l_b"][:, 0]     # (B, D, L)
    l = jnp.swapaxes(l, 1, 2)                                # (B, L, D)
    r = _mm_nt(xn1, params["r_w"]) + params["r_b"][0]
    x2 = xn1 + _mm_nt(l + r, params["proj_w"]) + params["proj_b"][0]
    xn = _ln_last(x2, params["n1_g"][0], params["n1_b"][0])
    h = _gelu_exact(_mm_nt(xn, params["fc1_w"]) + params["fc1_b"][0])
    mlp = _mm_nt(h, params["fc2_w"]) + params["fc2_b"][0]
    return x2 + mlp


def make_params(key, L, D, mlp_ratio=4.0):
    H = int(D * mlp_ratio)
    ks = jax.random.split(key, 14)
    s = lambda k, shape, fan_in: (jax.random.normal(k, shape, jnp.float32)
                                  / math.sqrt(fan_in))
    return {
        # LayerNorm affine params (perturbed from PyTorch's 1/0 init so the
        # affine terms are actually exercised by the check).
        "n1_g": 1.0 + 0.1 * jax.random.normal(ks[10], (1, D), jnp.float32),
        "n1_b": 0.1 * jax.random.normal(ks[11], (1, D), jnp.float32),
        "n2_g": 1.0 + 0.1 * jax.random.normal(ks[12], (L, 1), jnp.float32),
        "n2_b": 0.1 * jax.random.normal(ks[13], (L, 1), jnp.float32),
        # Linear(L, L)
        "l_w": s(ks[0], (L, L), L), "l_b": s(ks[1], (L, 1), L),
        # Linear(D, D)
        "r_w": s(ks[2], (D, D), D), "r_b": s(ks[3], (1, D), D),
        # proj Linear(D, D)
        "proj_w": s(ks[4], (D, D), D), "proj_b": s(ks[5], (1, D), D),
        # Mlp: fc1 (D -> H), fc2 (H -> D)
        "fc1_w": s(ks[6], (H, D), D), "fc1_b": s(ks[7], (1, H), D),
        "fc2_w": s(ks[8], (D, H), H), "fc2_b": s(ks[9], (1, D), H),
    }


if __name__ == "__main__":
    # Lane-dense small demo: D and H=4D are multiples of 128, L a multiple of 8.
    B, L, D = 4, 16, 128
    key = jax.random.PRNGKey(0)
    kx, kskip, kp = jax.random.split(key, 3)
    x = jax.random.normal(kx, (B, L, D), jnp.float32)
    skip = jax.random.normal(kskip, (B, L, D), jnp.float32)
    params = make_params(kp, L, D, mlp_ratio=4.0)

    try:
        out = jax.block_until_ready(lmlp_forward(x, params, skip=skip))
    except Exception:
        # Fallback if this JAX/Mosaic build rejects single-buffered BlockSpecs.
        out = jax.block_until_ready(
            lmlp_forward(x, params, skip=skip, single_buffer_weights=False))

    ref = lmlp_reference(x, params, skip=skip)
    assert out.shape == (B, L, D)
    assert jnp.allclose(out, ref, atol=1e-2, rtol=1e-2), float(
        jnp.max(jnp.abs(out - ref)))
    print("KERNEL_OK")
</pallas_src>

<mosaic_0001>
module attributes {stable_mosaic.version = 11 : i64} {
  func.func @lmlp_kernel(%arg0: i32, %arg1: memref<4x16x128xf32, #tpu.memory_space<vmem>>, %arg2: memref<4x16x128xf32, #tpu.memory_space<vmem>>, %arg3: memref<5x128xf32, #tpu.memory_space<vmem>>, %arg4: memref<1x512xf32, #tpu.memory_space<vmem>>, %arg5: memref<16x3xf32, #tpu.memory_space<vmem>>, %arg6: memref<16x16xbf16, #tpu.memory_space<vmem>>, %arg7: memref<128x128xbf16, #tpu.memory_space<vmem>>, %arg8: memref<128x128xbf16, #tpu.memory_space<vmem>>, %arg9: memref<128x512xbf16, #tpu.memory_space<vmem>>, %arg10: memref<512x128xbf16, #tpu.memory_space<vmem>>, %arg11: memref<4x16x128xf32, #tpu.memory_space<vmem>>) attributes {dimension_semantics = [#tpu.dimension_semantics<parallel>], iteration_bounds = array<i64: 1>, scalar_prefetch = 0 : i64, scratch_operands = 0 : i64, tpu.core_type = #tpu.core_type<tc>, window_params = [{transform_indices = @transform_0, window_bounds = array<i64: 4, 16, 128>}, {transform_indices = @transform_1, window_bounds = array<i64: 4, 16, 128>}, {pipeline_mode = #tpu.pipeline_mode<synchronous>, transform_indices = @transform_2, window_bounds = array<i64: 5, 128>}, {pipeline_mode = #tpu.pipeline_mode<synchronous>, transform_indices = @transform_3, window_bounds = array<i64: 1, 512>}, {pipeline_mode = #tpu.pipeline_mode<synchronous>, transform_indices = @transform_4, window_bounds = array<i64: 16, 3>}, {pipeline_mode = #tpu.pipeline_mode<synchronous>, transform_indices = @transform_5, window_bounds = array<i64: 16, 16>}, {pipeline_mode = #tpu.pipeline_mode<synchronous>, transform_indices = @transform_6, window_bounds = array<i64: 128, 128>}, {pipeline_mode = #tpu.pipeline_mode<synchronous>, transform_indices = @transform_7, window_bounds = array<i64: 128, 128>}, {pipeline_mode = #tpu.pipeline_mode<synchronous>, transform_indices = @transform_8, window_bounds = array<i64: 128, 512>}, {pipeline_mode = #tpu.pipeline_mode<synchronous>, transform_indices = @transform_9, window_bounds = array<i64: 512, 128>}, {transform_indices = @transform_10, window_bounds = array<i64: 4, 16, 128>}]} {
    %c0 = arith.constant 0 : index
    %c0_0 = arith.constant 0 : index
    %c0_1 = arith.constant 0 : index
    %0 = vector.load %arg1[%c0, %c0_0, %c0_1] : memref<4x16x128xf32, #tpu.memory_space<vmem>>, vector<4x16x128xf32>
    %c0_2 = arith.constant 0 : index
    %c0_3 = arith.constant 0 : index
    %c0_4 = arith.constant 0 : index
    %1 = vector.load %arg2[%c0_2, %c0_3, %c0_4] : memref<4x16x128xf32, #tpu.memory_space<vmem>>, vector<4x16x128xf32>
    %2 = arith.addf %0, %1 : vector<4x16x128xf32>
    %c0_5 = arith.constant 0 : index
    %c0_6 = arith.constant 0 : index
    %3 = vector.load %arg3[%c0_5, %c0_6] : memref<5x128xf32, #tpu.memory_space<vmem>>, vector<5x128xf32>
    %4 = vector.extract_strided_slice %3 {offsets = [0, 0], sizes = [1, 128], strides = [1, 1]} : vector<5x128xf32> to vector<1x128xf32>
    %5 = vector.shape_cast %4 : vector<1x128xf32> to vector<128xf32>
    %6 = vector.extract_strided_slice %3 {offsets = [1, 0], sizes = [1, 128], strides = [1, 1]} : vector<5x128xf32> to vector<1x128xf32>
    %7 = vector.shape_cast %6 : vector<1x128xf32> to vector<128xf32>
    %8 = vector.extract_strided_slice %3 {offsets = [2, 0], sizes = [1, 128], strides = [1, 1]} : vector<5x128xf32> to vector<1x128xf32>
    %9 = vector.shape_cast %8 : vector<1x128xf32> to vector<128xf32>
    %10 = vector.extract_strided_slice %3 {offsets = [3, 0], sizes = [1, 128], strides = [1, 1]} : vector<5x128xf32> to vector<1x128xf32>
    %11 = vector.shape_cast %10 : vector<1x128xf32> to vector<128xf32>
    %12 = vector.extract_strided_slice %3 {offsets = [4, 0], sizes = [1, 128], strides = [1, 1]} : vector<5x128xf32> to vector<1x128xf32>
    %13 = vector.shape_cast %12 : vector<1x128xf32> to vector<128xf32>
    %c0_7 = arith.constant 0 : index
    %c0_8 = arith.constant 0 : index
    %14 = vector.load %arg4[%c0_7, %c0_8] : memref<1x512xf32, #tpu.memory_space<vmem>>, vector<1x512xf32>
    %15 = vector.shape_cast %14 : vector<1x512xf32> to vector<512xf32>
    %c0_9 = arith.constant 0 : index
    %c0_10 = arith.constant 0 : index
    %16 = vector.load %arg5[%c0_9, %c0_10] : memref<16x3xf32, #tpu.memory_space<vmem>>, vector<16x3xf32>
    %17 = vector.extract_strided_slice %16 {offsets = [0, 0], sizes = [16, 1], strides = [1, 1]} : vector<16x3xf32> to vector<16x1xf32>
    %18 = vector.shape_cast %17 : vector<16x1xf32> to vector<1x16x1xf32>
    %19 = vector.extract_strided_slice %16 {offsets = [0, 1], sizes = [16, 1], strides = [1, 1]} : vector<16x3xf32> to vector<16x1xf32>
    %20 = vector.shape_cast %19 : vector<16x1xf32> to vector<1x16x1xf32>
    %21 = vector.extract_strided_slice %16 {offsets = [0, 2], sizes = [16, 1], strides = [1, 1]} : vector<16x3xf32> to vector<16x1xf32>
    %22 = vector.shape_cast %21 : vector<16x1xf32> to vector<1x16x1xf32>
    %23 = vector.shape_cast %2 : vector<4x16x128xf32> to vector<64x128xf32>
    %cst = arith.constant dense<0.000000e+00> : vector<64xf32>
    %24 = vector.multi_reduction <add>, %23, %cst [1] : vector<64x128xf32> to vector<64xf32>
    %25 = vector.shape_cast %24 : vector<64xf32> to vector<64x1xf32>
    %cst_11 = arith.constant 1.280000e+02 : f32
    %26 = vector.broadcast %cst_11 : f32 to vector<64x1xf32>
    %27 = arith.divf %25, %26 : vector<64x1xf32>
    %28 = vector.broadcast %27 : vector<64x1xf32> to vector<64x128xf32>
    %29 = arith.subf %23, %28 : vector<64x128xf32>
    %30 = arith.mulf %29, %29 : vector<64x128xf32>
    %cst_12 = arith.constant dense<0.000000e+00> : vector<64xf32>
    %31 = vector.multi_reduction <add>, %30, %cst_12 [1] : vector<64x128xf32> to vector<64xf32>
    %32 = vector.shape_cast %31 : vector<64xf32> to vector<64x1xf32>
    %cst_13 = arith.constant 1.280000e+02 : f32
    %33 = vector.broadcast %cst_13 : f32 to vector<64x1xf32>
    %34 = arith.divf %32, %33 : vector<64x1xf32>
    %35 = vector.broadcast %27 : vector<64x1xf32> to vector<64x128xf32>
    %36 = arith.subf %23, %35 : vector<64x128xf32>
    %cst_14 = arith.constant 9.99999974E-6 : f32
    %37 = vector.broadcast %cst_14 : f32 to vector<64x1xf32>
    %38 = arith.addf %34, %37 : vector<64x1xf32>
    %39 = math.rsqrt %38 : vector<64x1xf32>
    %40 = vector.broadcast %39 : vector<64x1xf32> to vector<64x128xf32>
    %41 = arith.mulf %36, %40 : vector<64x128xf32>
    %42 = vector.shape_cast %5 : vector<128xf32> to vector<1x128xf32>
    %43 = vector.broadcast %42 : vector<1x128xf32> to vector<64x128xf32>
    %44 = arith.mulf %41, %43 : vector<64x128xf32>
    %45 = vector.shape_cast %7 : vector<128xf32> to vector<1x128xf32>
    %46 = vector.broadcast %45 : vector<1x128xf32> to vector<64x128xf32>
    %47 = arith.addf %44, %46 : vector<64x128xf32>
    %c0_15 = arith.constant 0 : index
    %c0_16 = arith.constant 0 : index
    %48 = vector.load %arg7[%c0_15, %c0_16] : memref<128x128xbf16, #tpu.memory_space<vmem>>, vector<128x128xbf16>
    %49 = arith.truncf %47 : vector<64x128xf32> to vector<64x128xbf16>
    %cst_17 = arith.constant dense<0.000000e+00> : vector<64x128xf32>
    %50 = tpu.matmul %49, %48, %cst_17 {dimension_numbers = #tpu.dot_dimension_numbers<[1], [0], [0], [1], [0, 0, 1, 1], [], []>} : vector<64x128xbf16>, vector<128x128xbf16>, vector<64x128xf32> -> vector<64x128xf32>
    %51 = vector.shape_cast %9 : vector<128xf32> to vector<1x128xf32>
    %52 = vector.broadcast %51 : vector<1x128xf32> to vector<64x128xf32>
    %53 = arith.addf %50, %52 : vector<64x128xf32>
    %cst_18 = arith.constant dense<0.000000e+00> : vector<4x128xf32>
    %54 = vector.multi_reduction <add>, %2, %cst_18 [1] : vector<4x16x128xf32> to vector<4x128xf32>
    %55 = vector.shape_cast %54 : vector<4x128xf32> to vector<4x1x128xf32>
    %cst_19 = arith.constant 1.600000e+01 : f32
    %56 = vector.broadcast %cst_19 : f32 to vector<4x1x128xf32>
    %57 = arith.divf %55, %56 : vector<4x1x128xf32>
    %58 = vector.broadcast %57 : vector<4x1x128xf32> to vector<4x16x128xf32>
    %59 = arith.subf %2, %58 : vector<4x16x128xf32>
    %60 = arith.mulf %59, %59 : vector<4x16x128xf32>
    %cst_20 = arith.constant dense<0.000000e+00> : vector<4x128xf32>
    %61 = vector.multi_reduction <add>, %60, %cst_20 [1] : vector<4x16x128xf32> to vector<4x128xf32>
    %62 = vector.shape_cast %61 : vector<4x128xf32> to vector<4x1x128xf32>
    %cst_21 = arith.constant 1.600000e+01 : f32
    %63 = vector.broadcast %cst_21 : f32 to vector<4x1x128xf32>
    %64 = arith.divf %62, %63 : vector<4x1x128xf32>
    %65 = vector.broadcast %57 : vector<4x1x128xf32> to vector<4x16x128xf32>
    %66 = arith.subf %2, %65 : vector<4x16x128xf32>
    %cst_22 = arith.constant 9.99999974E-6 : f32
    %67 = vector.broadcast %cst_22 : f32 to vector<4x1x128xf32>
    %68 = arith.addf %64, %67 : vector<4x1x128xf32>
    %69 = math.rsqrt %68 : vector<4x1x128xf32>
    %70 = vector.broadcast %69 : vector<4x1x128xf32> to vector<4x16x128xf32>
    %71 = arith.mulf %66, %70 : vector<4x16x128xf32>
    %72 = vector.broadcast %18 : vector<1x16x1xf32> to vector<4x16x128xf32>
    %73 = arith.mulf %71, %72 : vector<4x16x128xf32>
    %74 = vector.broadcast %20 : vector<1x16x1xf32> to vector<4x16x128xf32>
    %75 = arith.addf %73, %74 : vector<4x16x128xf32>
    %c0_23 = arith.constant 0 : index
    %c0_24 = arith.constant 0 : index
    %76 = vector.load %arg6[%c0_23, %c0_24] : memref<16x16xbf16, #tpu.memory_space<vmem>>, vector<16x16xbf16>
    %77 = vector.shape_cast %76 : vector<16x16xbf16> to vector<1x16x16xbf16>
    %78 = vector.shape_cast %77 : vector<1x16x16xbf16> to vector<1x16x16xbf16>
    %79 = vector.broadcast %78 : vector<1x16x16xbf16> to vector<4x16x16xbf16>
    %80 = arith.truncf %75 : vector<4x16x128xf32> to vector<4x16x128xbf16>
    %cst_25 = arith.constant dense<0.000000e+00> : vector<4x16x128xf32>
    %81 = tpu.matmul %79, %80, %cst_25 {dimension_numbers = #tpu.dot_dimension_numbers<[2], [1], [1], [2], [0, 0, 0, 1, 1, 2], [0], [0]>} : vector<4x16x16xbf16>, vector<4x16x128xbf16>, vector<4x16x128xf32> -> vector<4x16x128xf32>
    %82 = vector.broadcast %22 : vector<1x16x1xf32> to vector<4x16x128xf32>
    %83 = arith.addf %81, %82 : vector<4x16x128xf32>
    %84 = vector.shape_cast %83 : vector<4x16x128xf32> to vector<64x128xf32>
    %85 = arith.addf %84, %53 : vector<64x128xf32>
    %c0_26 = arith.constant 0 : index
    %c0_27 = arith.constant 0 : index
    %86 = vector.load %arg8[%c0_26, %c0_27] : memref<128x128xbf16, #tpu.memory_space<vmem>>, vector<128x128xbf16>
    %87 = arith.truncf %85 : vector<64x128xf32> to vector<64x128xbf16>
    %cst_28 = arith.constant dense<0.000000e+00> : vector<64x128xf32>
    %88 = tpu.matmul %87, %86, %cst_28 {dimension_numbers = #tpu.dot_dimension_numbers<[1], [0], [0], [1], [0, 0, 1, 1], [], []>} : vector<64x128xbf16>, vector<128x128xbf16>, vector<64x128xf32> -> vector<64x128xf32>
    %89 = vector.shape_cast %11 : vector<128xf32> to vector<1x128xf32>
    %90 = vector.broadcast %89 : vector<1x128xf32> to vector<64x128xf32>
    %91 = arith.addf %88, %90 : vector<64x128xf32>
    %cst_29 = arith.constant dense<0.000000e+00> : vector<64xf32>
    %92 = vector.multi_reduction <add>, %23, %cst_29 [1] : vector<64x128xf32> to vector<64xf32>
    %93 = vector.shape_cast %92 : vector<64xf32> to vector<64x1xf32>
    %cst_30 = arith.constant 1.280000e+02 : f32
    %94 = vector.broadcast %cst_30 : f32 to vector<64x1xf32>
    %95 = arith.divf %93, %94 : vector<64x1xf32>
    %96 = vector.broadcast %95 : vector<64x1xf32> to vector<64x128xf32>
    %97 = arith.subf %23, %96 : vector<64x128xf32>
    %98 = arith.mulf %97, %97 : vector<64x128xf32>
    %cst_31 = arith.constant dense<0.000000e+00> : vector<64xf32>
    %99 = vector.multi_reduction <add>, %98, %cst_31 [1] : vector<64x128xf32> to vector<64xf32>
    %100 = vector.shape_cast %99 : vector<64xf32> to vector<64x1xf32>
    %cst_32 = arith.constant 1.280000e+02 : f32
    %101 = vector.broadcast %cst_32 : f32 to vector<64x1xf32>
    %102 = arith.divf %100, %101 : vector<64x1xf32>
    %103 = vector.broadcast %95 : vector<64x1xf32> to vector<64x128xf32>
    %104 = arith.subf %23, %103 : vector<64x128xf32>
    %cst_33 = arith.constant 9.99999974E-6 : f32
    %105 = vector.broadcast %cst_33 : f32 to vector<64x1xf32>
    %106 = arith.addf %102, %105 : vector<64x1xf32>
    %107 = math.rsqrt %106 : vector<64x1xf32>
    %108 = vector.broadcast %107 : vector<64x1xf32> to vector<64x128xf32>
    %109 = arith.mulf %104, %108 : vector<64x128xf32>
    %110 = vector.shape_cast %5 : vector<128xf32> to vector<1x128xf32>
    %111 = vector.broadcast %110 : vector<1x128xf32> to vector<64x128xf32>
    %112 = arith.mulf %109, %111 : vector<64x128xf32>
    %113 = vector.shape_cast %7 : vector<128xf32> to vector<1x128xf32>
    %114 = vector.broadcast %113 : vector<1x128xf32> to vector<64x128xf32>
    %115 = arith.addf %112, %114 : vector<64x128xf32>
    %116 = arith.addf %115, %91 : vector<64x128xf32>
    %cst_34 = arith.constant dense<0.000000e+00> : vector<64xf32>
    %117 = vector.multi_reduction <add>, %116, %cst_34 [1] : vector<64x128xf32> to vector<64xf32>
    %118 = vector.shape_cast %117 : vector<64xf32> to vector<64x1xf32>
    %cst_35 = arith.constant 1.280000e+02 : f32
    %119 = vector.broadcast %cst_35 : f32 to vector<64x1xf32>
    %120 = arith.divf %118, %119 : vector<64x1xf32>
    %121 = vector.broadcast %120 : vector<64x1xf32> to vector<64x128xf32>
    %122 = arith.subf %116, %121 : vector<64x128xf32>
    %123 = arith.mulf %122, %122 : vector<64x128xf32>
    %cst_36 = arith.constant dense<0.000000e+00> : vector<64xf32>
    %124 = vector.multi_reduction <add>, %123, %cst_36 [1] : vector<64x128xf32> to vector<64xf32>
    %125 = vector.shape_cast %124 : vector<64xf32> to vector<64x1xf32>
    %cst_37 = arith.constant 1.280000e+02 : f32
    %126 = vector.broadcast %cst_37 : f32 to vector<64x1xf32>
    %127 = arith.divf %125, %126 : vector<64x1xf32>
    %128 = vector.broadcast %120 : vector<64x1xf32> to vector<64x128xf32>
    %129 = arith.subf %116, %128 : vector<64x128xf32>
    %cst_38 = arith.constant 9.99999974E-6 : f32
    %130 = vector.broadcast %cst_38 : f32 to vector<64x1xf32>
    %131 = arith.addf %127, %130 : vector<64x1xf32>
    %132 = math.rsqrt %131 : vector<64x1xf32>
    %133 = vector.broadcast %132 : vector<64x1xf32> to vector<64x128xf32>
    %134 = arith.mulf %129, %133 : vector<64x128xf32>
    %135 = vector.shape_cast %5 : vector<128xf32> to vector<1x128xf32>
    %136 = vector.broadcast %135 : vector<1x128xf32> to vector<64x128xf32>
    %137 = arith.mulf %134, %136 : vector<64x128xf32>
    %138 = vector.shape_cast %7 : vector<128xf32> to vector<1x128xf32>
    %139 = vector.broadcast %138 : vector<1x128xf32> to vector<64x128xf32>
    %140 = arith.addf %137, %139 : vector<64x128xf32>
    %c0_39 = arith.constant 0 : index
    %c0_40 = arith.constant 0 : index
    %141 = vector.load %arg9[%c0_39, %c0_40] : memref<128x512xbf16, #tpu.memory_space<vmem>>, vector<128x512xbf16>
    %142 = arith.truncf %140 : vector<64x128xf32> to vector<64x128xbf16>
    %cst_41 = arith.constant dense<0.000000e+00> : vector<64x512xf32>
    %143 = tpu.matmul %142, %141, %cst_41 {dimension_numbers = #tpu.dot_dimension_numbers<[1], [0], [0], [1], [0, 0, 1, 1], [], []>} : vector<64x128xbf16>, vector<128x512xbf16>, vector<64x512xf32> -> vector<64x512xf32>
    %144 = vector.shape_cast %15 : vector<512xf32> to vector<1x512xf32>
    %145 = vector.broadcast %144 : vector<1x512xf32> to vector<64x512xf32>
    %146 = arith.addf %143, %145 : vector<64x512xf32>
    %cst_42 = arith.constant 5.000000e-01 : f32
    %147 = vector.broadcast %cst_42 : f32 to vector<64x512xf32>
    %148 = arith.mulf %147, %146 : vector<64x512xf32>
    %cst_43 = arith.constant 0.707106769 : f32
    %149 = vector.broadcast %cst_43 : f32 to vector<64x512xf32>
    %150 = arith.mulf %146, %149 : vector<64x512xf32>
    %151 = math.erf %150 : vector<64x512xf32>
    %cst_44 = arith.constant 1.000000e+00 : f32
    %152 = vector.broadcast %cst_44 : f32 to vector<64x512xf32>
    %153 = arith.addf %152, %151 : vector<64x512xf32>
    %154 = arith.mulf %148, %153 : vector<64x512xf32>
    %c0_45 = arith.constant 0 : index
    %c0_46 = arith.constant 0 : index
    %155 = vector.load %arg10[%c0_45, %c0_46] : memref<512x128xbf16, #tpu.memory_space<vmem>>, vector<512x128xbf16>
    %156 = arith.truncf %154 : vector<64x512xf32> to vector<64x512xbf16>
    %cst_47 = arith.constant dense<0.000000e+00> : vector<64x128xf32>
    %157 = tpu.matmul %156, %155, %cst_47 {dimension_numbers = #tpu.dot_dimension_numbers<[1], [0], [0], [1], [0, 0, 1, 1], [], []>} : vector<64x512xbf16>, vector<512x128xbf16>, vector<64x128xf32> -> vector<64x128xf32>
    %158 = vector.shape_cast %13 : vector<128xf32> to vector<1x128xf32>
    %159 = vector.broadcast %158 : vector<1x128xf32> to vector<64x128xf32>
    %160 = arith.addf %157, %159 : vector<64x128xf32>
    %161 = arith.addf %116, %160 : vector<64x128xf32>
    %162 = vector.shape_cast %161 : vector<64x128xf32> to vector<4x16x128xf32>
    %c0_48 = arith.constant 0 : index
    %c0_49 = arith.constant 0 : index
    %c0_50 = arith.constant 0 : index
    %163 = vector.load %arg11[%c0_48, %c0_49, %c0_50] : memref<4x16x128xf32, #tpu.memory_space<vmem>>, vector<4x16x128xf32>
    tpu.vector_store %arg11[%c0_48, %c0_49, %c0_50], %162 {strides = array<i32>} : memref<4x16x128xf32, #tpu.memory_space<vmem>>, vector<4x16x128xf32>,
    return
  }
  func.func @transform_0(%arg0: i32) -> (i32, i32, i32) {
    %c0_i32 = arith.constant 0 : i32
    %c0_i32_0 = arith.constant 0 : i32
    %c0_i32_1 = arith.constant 0 : i32
    return %arg0, %c0_i32, %c0_i32_0 : i32, i32, i32
  }
  func.func @transform_1(%arg0: i32) -> (i32, i32, i32) {
    %c0_i32 = arith.constant 0 : i32
    %c0_i32_0 = arith.constant 0 : i32
    %c0_i32_1 = arith.constant 0 : i32
    return %arg0, %c0_i32, %c0_i32_0 : i32, i32, i32
  }
  func.func @transform_2(%arg0: i32) -> (i32, i32) {
    %c0_i32 = arith.constant 0 : i32
    %c0_i32_0 = arith.constant 0 : i32
    %c0_i32_1 = arith.constant 0 : i32
    return %c0_i32, %c0_i32_0 : i32, i32
  }
  func.func @transform_3(%arg0: i32) -> (i32, i32) {
    %c0_i32 = arith.constant 0 : i32
    %c0_i32_0 = arith.constant 0 : i32
    %c0_i32_1 = arith.constant 0 : i32
    return %c0_i32, %c0_i32_0 : i32, i32
  }
  func.func @transform_4(%arg0: i32) -> (i32, i32) {
    %c0_i32 = arith.constant 0 : i32
    %c0_i32_0 = arith.constant 0 : i32
    %c0_i32_1 = arith.constant 0 : i32
    return %c0_i32, %c0_i32_0 : i32, i32
  }
  func.func @transform_5(%arg0: i32) -> (i32, i32) {
    %c0_i32 = arith.constant 0 : i32
    %c0_i32_0 = arith.constant 0 : i32
    %c0_i32_1 = arith.constant 0 : i32
    return %c0_i32, %c0_i32_0 : i32, i32
  }
  func.func @transform_6(%arg0: i32) -> (i32, i32) {
    %c0_i32 = arith.constant 0 : i32
    %c0_i32_0 = arith.constant 0 : i32
    %c0_i32_1 = arith.constant 0 : i32
    return %c0_i32, %c0_i32_0 : i32, i32
  }
  func.func @transform_7(%arg0: i32) -> (i32, i32) {
    %c0_i32 = arith.constant 0 : i32
    %c0_i32_0 = arith.constant 0 : i32
    %c0_i32_1 = arith.constant 0 : i32
    return %c0_i32, %c0_i32_0 : i32, i32
  }
  func.func @transform_8(%arg0: i32) -> (i32, i32) {
    %c0_i32 = arith.constant 0 : i32
    %c0_i32_0 = arith.constant 0 : i32
    %c0_i32_1 = arith.constant 0 : i32
    return %c0_i32, %c0_i32_0 : i32, i32
  }
  func.func @transform_9(%arg0: i32) -> (i32, i32) {
    %c0_i32 = arith.constant 0 : i32
    %c0_i32_0 = arith.constant 0 : i32
    %c0_i32_1 = arith.constant 0 : i32
    return %c0_i32, %c0_i32_0 : i32, i32
  }
  func.func @transform_10(%arg0: i32) -> (i32, i32, i32) {
    %c0_i32 = arith.constant 0 : i32
    %c0_i32_0 = arith.constant 0 : i32
    %c0_i32_1 = arith.constant 0 : i32
    return %arg0, %c0_i32, %c0_i32_0 : i32, i32, i32
  }
}

module attributes {stable_mosaic.version = 11 : i64} {
  func.func @lmlp_kernel(%arg0: i32, %arg1: memref<4x16x128xf32, #tpu.memory_space<vmem>>, %arg2: memref<4x16x128xf32, #tpu.memory_space<vmem>>, %arg3: memref<5x128xf32, #tpu.memory_space<vmem>>, %arg4: memref<1x512xf32, #tpu.memory_space<vmem>>, %arg5: memref<16x3xf32, #tpu.memory_space<vmem>>, %arg6: memref<16x16xbf16, #tpu.memory_space<vmem>>, %arg7: memref<128x128xbf16, #tpu.memory_space<vmem>>, %arg8: memref<128x128xbf16, #tpu.memory_space<vmem>>, %arg9: memref<128x512xbf16, #tpu.memory_space<vmem>>, %arg10: memref<512x128xbf16, #tpu.memory_space<vmem>>, %arg11: memref<4x16x128xf32, #tpu.memory_space<vmem>>) attributes {dimension_semantics = [#tpu.dimension_semantics<parallel>], iteration_bounds = array<i64: 1>, scalar_prefetch = 0 : i64, scratch_operands = 0 : i64, tpu.core_type = #tpu.core_type<tc>, window_params = [{transform_indices = @transform_0, window_bounds = array<i64: 4, 16, 128>}, {transform_indices = @transform_1, window_bounds = array<i64: 4, 16, 128>}, {pipeline_mode = #tpu.pipeline_mode<synchronous>, transform_indices = @transform_2, window_bounds = array<i64: 5, 128>}, {pipeline_mode = #tpu.pipeline_mode<synchronous>, transform_indices = @transform_3, window_bounds = array<i64: 1, 512>}, {pipeline_mode = #tpu.pipeline_mode<synchronous>, transform_indices = @transform_4, window_bounds = array<i64: 16, 3>}, {pipeline_mode = #tpu.pipeline_mode<synchronous>, transform_indices = @transform_5, window_bounds = array<i64: 16, 16>}, {pipeline_mode = #tpu.pipeline_mode<synchronous>, transform_indices = @transform_6, window_bounds = array<i64: 128, 128>}, {pipeline_mode = #tpu.pipeline_mode<synchronous>, transform_indices = @transform_7, window_bounds = array<i64: 128, 128>}, {pipeline_mode = #tpu.pipeline_mode<synchronous>, transform_indices = @transform_8, window_bounds = array<i64: 128, 512>}, {pipeline_mode = #tpu.pipeline_mode<synchronous>, transform_indices = @transform_9, window_bounds = array<i64: 512, 128>}, {transform_indices = @transform_10, window_bounds = array<i64: 4, 16, 128>}]} {
    %c0 = arith.constant 0 : index
    %c0_0 = arith.constant 0 : index
    %c0_1 = arith.constant 0 : index
    %0 = vector.load %arg1[%c0, %c0_0, %c0_1] : memref<4x16x128xf32, #tpu.memory_space<vmem>>, vector<4x16x128xf32>
    %c0_2 = arith.constant 0 : index
    %c0_3 = arith.constant 0 : index
    %c0_4 = arith.constant 0 : index
    %1 = vector.load %arg2[%c0_2, %c0_3, %c0_4] : memref<4x16x128xf32, #tpu.memory_space<vmem>>, vector<4x16x128xf32>
    %2 = arith.addf %0, %1 : vector<4x16x128xf32>
    %c0_5 = arith.constant 0 : index
    %c0_6 = arith.constant 0 : index
    %3 = vector.load %arg3[%c0_5, %c0_6] : memref<5x128xf32, #tpu.memory_space<vmem>>, vector<5x128xf32>
    %4 = vector.extract_strided_slice %3 {offsets = [0, 0], sizes = [1, 128], strides = [1, 1]} : vector<5x128xf32> to vector<1x128xf32>
    %5 = vector.shape_cast %4 : vector<1x128xf32> to vector<128xf32>
    %6 = vector.extract_strided_slice %3 {offsets = [1, 0], sizes = [1, 128], strides = [1, 1]} : vector<5x128xf32> to vector<1x128xf32>
    %7 = vector.shape_cast %6 : vector<1x128xf32> to vector<128xf32>
    %8 = vector.extract_strided_slice %3 {offsets = [2, 0], sizes = [1, 128], strides = [1, 1]} : vector<5x128xf32> to vector<1x128xf32>
    %9 = vector.shape_cast %8 : vector<1x128xf32> to vector<128xf32>
    %10 = vector.extract_strided_slice %3 {offsets = [3, 0], sizes = [1, 128], strides = [1, 1]} : vector<5x128xf32> to vector<1x128xf32>
    %11 = vector.shape_cast %10 : vector<1x128xf32> to vector<128xf32>
    %12 = vector.extract_strided_slice %3 {offsets = [4, 0], sizes = [1, 128], strides = [1, 1]} : vector<5x128xf32> to vector<1x128xf32>
    %13 = vector.shape_cast %12 : vector<1x128xf32> to vector<128xf32>
    %c0_7 = arith.constant 0 : index
    %c0_8 = arith.constant 0 : index
    %14 = vector.load %arg4[%c0_7, %c0_8] : memref<1x512xf32, #tpu.memory_space<vmem>>, vector<1x512xf32>
    %15 = vector.shape_cast %14 : vector<1x512xf32> to vector<512xf32>
    %c0_9 = arith.constant 0 : index
    %c0_10 = arith.constant 0 : index
    %16 = vector.load %arg5[%c0_9, %c0_10] : memref<16x3xf32, #tpu.memory_space<vmem>>, vector<16x3xf32>
    %17 = vector.extract_strided_slice %16 {offsets = [0, 0], sizes = [16, 1], strides = [1, 1]} : vector<16x3xf32> to vector<16x1xf32>
    %18 = vector.shape_cast %17 : vector<16x1xf32> to vector<1x16x1xf32>
    %19 = vector.extract_strided_slice %16 {offsets = [0, 1], sizes = [16, 1], strides = [1, 1]} : vector<16x3xf32> to vector<16x1xf32>
    %20 = vector.shape_cast %19 : vector<16x1xf32> to vector<1x16x1xf32>
    %21 = vector.extract_strided_slice %16 {offsets = [0, 2], sizes = [16, 1], strides = [1, 1]} : vector<16x3xf32> to vector<16x1xf32>
    %22 = vector.shape_cast %21 : vector<16x1xf32> to vector<1x16x1xf32>
    %23 = vector.shape_cast %2 : vector<4x16x128xf32> to vector<64x128xf32>
    %cst = arith.constant dense<0.000000e+00> : vector<64xf32>
    %24 = vector.multi_reduction <add>, %23, %cst [1] : vector<64x128xf32> to vector<64xf32>
    %25 = vector.shape_cast %24 : vector<64xf32> to vector<64x1xf32>
    %cst_11 = arith.constant 1.280000e+02 : f32
    %26 = vector.broadcast %cst_11 : f32 to vector<64x1xf32>
    %27 = arith.divf %25, %26 : vector<64x1xf32>
    %28 = vector.broadcast %27 : vector<64x1xf32> to vector<64x128xf32>
    %29 = arith.subf %23, %28 : vector<64x128xf32>
    %30 = arith.mulf %29, %29 : vector<64x128xf32>
    %cst_12 = arith.constant dense<0.000000e+00> : vector<64xf32>
    %31 = vector.multi_reduction <add>, %30, %cst_12 [1] : vector<64x128xf32> to vector<64xf32>
    %32 = vector.shape_cast %31 : vector<64xf32> to vector<64x1xf32>
    %cst_13 = arith.constant 1.280000e+02 : f32
    %33 = vector.broadcast %cst_13 : f32 to vector<64x1xf32>
    %34 = arith.divf %32, %33 : vector<64x1xf32>
    %35 = vector.broadcast %27 : vector<64x1xf32> to vector<64x128xf32>
    %36 = arith.subf %23, %35 : vector<64x128xf32>
    %cst_14 = arith.constant 9.99999974E-6 : f32
    %37 = vector.broadcast %cst_14 : f32 to vector<64x1xf32>
    %38 = arith.addf %34, %37 : vector<64x1xf32>
    %39 = math.rsqrt %38 : vector<64x1xf32>
    %40 = vector.broadcast %39 : vector<64x1xf32> to vector<64x128xf32>
    %41 = arith.mulf %36, %40 : vector<64x128xf32>
    %42 = vector.shape_cast %5 : vector<128xf32> to vector<1x128xf32>
    %43 = vector.broadcast %42 : vector<1x128xf32> to vector<64x128xf32>
    %44 = arith.mulf %41, %43 : vector<64x128xf32>
    %45 = vector.shape_cast %7 : vector<128xf32> to vector<1x128xf32>
    %46 = vector.broadcast %45 : vector<1x128xf32> to vector<64x128xf32>
    %47 = arith.addf %44, %46 : vector<64x128xf32>
    %c0_15 = arith.constant 0 : index
    %c0_16 = arith.constant 0 : index
    %48 = vector.load %arg7[%c0_15, %c0_16] : memref<128x128xbf16, #tpu.memory_space<vmem>>, vector<128x128xbf16>
    %49 = arith.truncf %47 : vector<64x128xf32> to vector<64x128xbf16>
    %cst_17 = arith.constant dense<0.000000e+00> : vector<64x128xf32>
    %50 = tpu.matmul %49, %48, %cst_17 {dimension_numbers = #tpu.dot_dimension_numbers<[1], [0], [0], [1], [0, 0, 1, 1], [], []>} : vector<64x128xbf16>, vector<128x128xbf16>, vector<64x128xf32> -> vector<64x128xf32>
    %51 = vector.shape_cast %9 : vector<128xf32> to vector<1x128xf32>
    %52 = vector.broadcast %51 : vector<1x128xf32> to vector<64x128xf32>
    %53 = arith.addf %50, %52 : vector<64x128xf32>
    %cst_18 = arith.constant dense<0.000000e+00> : vector<4x128xf32>
    %54 = vector.multi_reduction <add>, %2, %cst_18 [1] : vector<4x16x128xf32> to vector<4x128xf32>
    %55 = vector.shape_cast %54 : vector<4x128xf32> to vector<4x1x128xf32>
    %cst_19 = arith.constant 1.600000e+01 : f32
    %56 = vector.broadcast %cst_19 : f32 to vector<4x1x128xf32>
    %57 = arith.divf %55, %56 : vector<4x1x128xf32>
    %58 = vector.broadcast %57 : vector<4x1x128xf32> to vector<4x16x128xf32>
    %59 = arith.subf %2, %58 : vector<4x16x128xf32>
    %60 = arith.mulf %59, %59 : vector<4x16x128xf32>
    %cst_20 = arith.constant dense<0.000000e+00> : vector<4x128xf32>
    %61 = vector.multi_reduction <add>, %60, %cst_20 [1] : vector<4x16x128xf32> to vector<4x128xf32>
    %62 = vector.shape_cast %61 : vector<4x128xf32> to vector<4x1x128xf32>
    %cst_21 = arith.constant 1.600000e+01 : f32
    %63 = vector.broadcast %cst_21 : f32 to vector<4x1x128xf32>
    %64 = arith.divf %62, %63 : vector<4x1x128xf32>
    %65 = vector.broadcast %57 : vector<4x1x128xf32> to vector<4x16x128xf32>
    %66 = arith.subf %2, %65 : vector<4x16x128xf32>
    %cst_22 = arith.constant 9.99999974E-6 : f32
    %67 = vector.broadcast %cst_22 : f32 to vector<4x1x128xf32>
    %68 = arith.addf %64, %67 : vector<4x1x128xf32>
    %69 = math.rsqrt %68 : vector<4x1x128xf32>
    %70 = vector.broadcast %69 : vector<4x1x128xf32> to vector<4x16x128xf32>
    %71 = arith.mulf %66, %70 : vector<4x16x128xf32>
    %72 = vector.broadcast %18 : vector<1x16x1xf32> to vector<4x16x128xf32>
    %73 = arith.mulf %71, %72 : vector<4x16x128xf32>
    %74 = vector.broadcast %20 : vector<1x16x1xf32> to vector<4x16x128xf32>
    %75 = arith.addf %73, %74 : vector<4x16x128xf32>
    %c0_23 = arith.constant 0 : index
    %c0_24 = arith.constant 0 : index
    %76 = vector.load %arg6[%c0_23, %c0_24] : memref<16x16xbf16, #tpu.memory_space<vmem>>, vector<16x16xbf16>
    %77 = vector.shape_cast %76 : vector<16x16xbf16> to vector<1x16x16xbf16>
    %78 = vector.shape_cast %77 : vector<1x16x16xbf16> to vector<1x16x16xbf16>
    %79 = vector.broadcast %78 : vector<1x16x16xbf16> to vector<4x16x16xbf16>
    %80 = arith.truncf %75 : vector<4x16x128xf32> to vector<4x16x128xbf16>
    %cst_25 = arith.constant dense<0.000000e+00> : vector<4x16x128xf32>
    %81 = tpu.matmul %79, %80, %cst_25 {dimension_numbers = #tpu.dot_dimension_numbers<[2], [1], [1], [2], [0, 0, 0, 1, 1, 2], [0], [0]>} : vector<4x16x16xbf16>, vector<4x16x128xbf16>, vector<4x16x128xf32> -> vector<4x16x128xf32>
    %82 = vector.broadcast %22 : vector<1x16x1xf32> to vector<4x16x128xf32>
    %83 = arith.addf %81, %82 : vector<4x16x128xf32>
    %84 = vector.shape_cast %83 : vector<4x16x128xf32> to vector<64x128xf32>
    %85 = arith.addf %84, %53 : vector<64x128xf32>
    %c0_26 = arith.constant 0 : index
    %c0_27 = arith.constant 0 : index
    %86 = vector.load %arg8[%c0_26, %c0_27] : memref<128x128xbf16, #tpu.memory_space<vmem>>, vector<128x128xbf16>
    %87 = arith.truncf %85 : vector<64x128xf32> to vector<64x128xbf16>
    %cst_28 = arith.constant dense<0.000000e+00> : vector<64x128xf32>
    %88 = tpu.matmul %87, %86, %cst_28 {dimension_numbers = #tpu.dot_dimension_numbers<[1], [0], [0], [1], [0, 0, 1, 1], [], []>} : vector<64x128xbf16>, vector<128x128xbf16>, vector<64x128xf32> -> vector<64x128xf32>
    %89 = vector.shape_cast %11 : vector<128xf32> to vector<1x128xf32>
    %90 = vector.broadcast %89 : vector<1x128xf32> to vector<64x128xf32>
    %91 = arith.addf %88, %90 : vector<64x128xf32>
    %cst_29 = arith.constant dense<0.000000e+00> : vector<64xf32>
    %92 = vector.multi_reduction <add>, %23, %cst_29 [1] : vector<64x128xf32> to vector<64xf32>
    %93 = vector.shape_cast %92 : vector<64xf32> to vector<64x1xf32>
    %cst_30 = arith.constant 1.280000e+02 : f32
    %94 = vector.broadcast %cst_30 : f32 to vector<64x1xf32>
    %95 = arith.divf %93, %94 : vector<64x1xf32>
    %96 = vector.broadcast %95 : vector<64x1xf32> to vector<64x128xf32>
    %97 = arith.subf %23, %96 : vector<64x128xf32>
    %98 = arith.mulf %97, %97 : vector<64x128xf32>
    %cst_31 = arith.constant dense<0.000000e+00> : vector<64xf32>
    %99 = vector.multi_reduction <add>, %98, %cst_31 [1] : vector<64x128xf32> to vector<64xf32>
    %100 = vector.shape_cast %99 : vector<64xf32> to vector<64x1xf32>
    %cst_32 = arith.constant 1.280000e+02 : f32
    %101 = vector.broadcast %cst_32 : f32 to vector<64x1xf32>
    %102 = arith.divf %100, %101 : vector<64x1xf32>
    %103 = vector.broadcast %95 : vector<64x1xf32> to vector<64x128xf32>
    %104 = arith.subf %23, %103 : vector<64x128xf32>
    %cst_33 = arith.constant 9.99999974E-6 : f32
    %105 = vector.broadcast %cst_33 : f32 to vector<64x1xf32>
    %106 = arith.addf %102, %105 : vector<64x1xf32>
    %107 = math.rsqrt %106 : vector<64x1xf32>
    %108 = vector.broadcast %107 : vector<64x1xf32> to vector<64x128xf32>
    %109 = arith.mulf %104, %108 : vector<64x128xf32>
    %110 = vector.shape_cast %5 : vector<128xf32> to vector<1x128xf32>
    %111 = vector.broadcast %110 : vector<1x128xf32> to vector<64x128xf32>
    %112 = arith.mulf %109, %111 : vector<64x128xf32>
    %113 = vector.shape_cast %7 : vector<128xf32> to vector<1x128xf32>
    %114 = vector.broadcast %113 : vector<1x128xf32> to vector<64x128xf32>
    %115 = arith.addf %112, %114 : vector<64x128xf32>
    %116 = arith.addf %115, %91 : vector<64x128xf32>
    %cst_34 = arith.constant dense<0.000000e+00> : vector<64xf32>
    %117 = vector.multi_reduction <add>, %116, %cst_34 [1] : vector<64x128xf32> to vector<64xf32>
    %118 = vector.shape_cast %117 : vector<64xf32> to vector<64x1xf32>
    %cst_35 = arith.constant 1.280000e+02 : f32
    %119 = vector.broadcast %cst_35 : f32 to vector<64x1xf32>
    %120 = arith.divf %118, %119 : vector<64x1xf32>
    %121 = vector.broadcast %120 : vector<64x1xf32> to vector<64x128xf32>
    %122 = arith.subf %116, %121 : vector<64x128xf32>
    %123 = arith.mulf %122, %122 : vector<64x128xf32>
    %cst_36 = arith.constant dense<0.000000e+00> : vector<64xf32>
    %124 = vector.multi_reduction <add>, %123, %cst_36 [1] : vector<64x128xf32> to vector<64xf32>
    %125 = vector.shape_cast %124 : vector<64xf32> to vector<64x1xf32>
    %cst_37 = arith.constant 1.280000e+02 : f32
    %126 = vector.broadcast %cst_37 : f32 to vector<64x1xf32>
    %127 = arith.divf %125, %126 : vector<64x1xf32>
    %128 = vector.broadcast %120 : vector<64x1xf32> to vector<64x128xf32>
    %129 = arith.subf %116, %128 : vector<64x128xf32>
    %cst_38 = arith.constant 9.99999974E-6 : f32
    %130 = vector.broadcast %cst_38 : f32 to vector<64x1xf32>
    %131 = arith.addf %127, %130 : vector<64x1xf32>
    %132 = math.rsqrt %131 : vector<64x1xf32>
    %133 = vector.broadcast %132 : vector<64x1xf32> to vector<64x128xf32>
    %134 = arith.mulf %129, %133 : vector<64x128xf32>
    %135 = vector.shape_cast %5 : vector<128xf32> to vector<1x128xf32>
    %136 = vector.broadcast %135 : vector<1x128xf32> to vector<64x128xf32>
    %137 = arith.mulf %134, %136 : vector<64x128xf32>
    %138 = vector.shape_cast %7 : vector<128xf32> to vector<1x128xf32>
    %139 = vector.broadcast %138 : vector<1x128xf32> to vector<64x128xf32>
    %140 = arith.addf %137, %139 : vector<64x128xf32>
    %c0_39 = arith.constant 0 : index
    %c0_40 = arith.constant 0 : index
    %141 = vector.load %arg9[%c0_39, %c0_40] : memref<128x512xbf16, #tpu.memory_space<vmem>>, vector<128x512xbf16>
    %142 = arith.truncf %140 : vector<64x128xf32> to vector<64x128xbf16>
    %cst_41 = arith.constant dense<0.000000e+00> : vector<64x512xf32>
    %143 = tpu.matmul %142, %141, %cst_41 {dimension_numbers = #tpu.dot_dimension_numbers<[1], [0], [0], [1], [0, 0, 1, 1], [], []>} : vector<64x128xbf16>, vector<128x512xbf16>, vector<64x512xf32> -> vector<64x512xf32>
    %144 = vector.shape_cast %15 : vector<512xf32> to vector<1x512xf32>
    %145 = vector.broadcast %144 : vector<1x512xf32> to vector<64x512xf32>
    %146 = arith.addf %143, %145 : vector<64x512xf32>
    %cst_42 = arith.constant 5.000000e-01 : f32
    %147 = vector.broadcast %cst_42 : f32 to vector<64x512xf32>
    %148 = arith.mulf %147, %146 : vector<64x512xf32>
    %cst_43 = arith.constant 0.707106769 : f32
    %149 = vector.broadcast %cst_43 : f32 to vector<64x512xf32>
    %150 = arith.mulf %146, %149 : vector<64x512xf32>
    %151 = math.erf %150 : vector<64x512xf32>
    %cst_44 = arith.constant 1.000000e+00 : f32
    %152 = vector.broadcast %cst_44 : f32 to vector<64x512xf32>
    %153 = arith.addf %152, %151 : vector<64x512xf32>
    %154 = arith.mulf %148, %153 : vector<64x512xf32>
    %c0_45 = arith.constant 0 : index
    %c0_46 = arith.constant 0 : index
    %155 = vector.load %arg10[%c0_45, %c0_46] : memref<512x128xbf16, #tpu.memory_space<vmem>>, vector<512x128xbf16>
    %156 = arith.truncf %154 : vector<64x512xf32> to vector<64x512xbf16>
    %cst_47 = arith.constant dense<0.000000e+00> : vector<64x128xf32>
    %157 = tpu.matmul %156, %155, %cst_47 {dimension_numbers = #tpu.dot_dimension_numbers<[1], [0], [0], [1], [0, 0, 1, 1], [], []>} : vector<64x512xbf16>, vector<512x128xbf16>, vector<64x128xf32> -> vector<64x128xf32>
    %158 = vector.shape_cast %13 : vector<128xf32> to vector<1x128xf32>
    %159 = vector.broadcast %158 : vector<1x128xf32> to vector<64x128xf32>
    %160 = arith.addf %157, %159 : vector<64x128xf32>
    %161 = arith.addf %116, %160 : vector<64x128xf32>
    %162 = vector.shape_cast %161 : vector<64x128xf32> to vector<4x16x128xf32>
    %c0_48 = arith.constant 0 : index
    %c0_49 = arith.constant 0 : index
    %c0_50 = arith.constant 0 : index
    %163 = vector.load %arg11[%c0_48, %c0_49, %c0_50] : memref<4x16x128xf32, #tpu.memory_space<vmem>>, vector<4x16x128xf32>
    tpu.vector_store %arg11[%c0_48, %c0_49, %c0_50], %162 {strides = array<i32>} : memref<4x16x128xf32, #tpu.memory_space<vmem>>, vector<4x16x128xf32>,
    return
  }
  func.func @transform_0(%arg0: i32) -> (i32, i32, i32) {
    %c0_i32 = arith.constant 0 : i32
    %c0_i32_0 = arith.constant 0 : i32
    %c0_i32_1 = arith.constant 0 : i32
    return %arg0, %c0_i32, %c0_i32_0 : i32, i32, i32
  }
  func.func @transform_1(%arg0: i32) -> (i32, i32, i32) {
    %c0_i32 = arith.constant 0 : i32
    %c0_i32_0 = arith.constant 0 : i32
    %c0_i32_1 = arith.constant 0 : i32
    return %arg0, %c0_i32, %c0_i32_0 : i32, i32, i32
  }
  func.func @transform_2(%arg0: i32) -> (i32, i32) {
    %c0_i32 = arith.constant 0 : i32
    %c0_i32_0 = arith.constant 0 : i32
    %c0_i32_1 = arith.constant 0 : i32
    return %c0_i32, %c0_i32_0 : i32, i32
  }
  func.func @transform_3(%arg0: i32) -> (i32, i32) {
    %c0_i32 = arith.constant 0 : i32
    %c0_i32_0 = arith.constant 0 : i32
    %c0_i32_1 = arith.constant 0 : i32
    return %c0_i32, %c0_i32_0 : i32, i32
  }
  func.func @transform_4(%arg0: i32) -> (i32, i32) {
    %c0_i32 = arith.constant 0 : i32
    %c0_i32_0 = arith.constant 0 : i32
    %c0_i32_1 = arith.constant 0 : i32
    return %c0_i32, %c0_i32_0 : i32, i32
  }
  func.func @transform_5(%arg0: i32) -> (i32, i32) {
    %c0_i32 = arith.constant 0 : i32
    %c0_i32_0 = arith.constant 0 : i32
    %c0_i32_1 = arith.constant 0 : i32
    return %c0_i32, %c0_i32_0 : i32, i32
  }
  func.func @transform_6(%arg0: i32) -> (i32, i32) {
    %c0_i32 = arith.constant 0 : i32
    %c0_i32_0 = arith.constant 0 : i32
    %c0_i32_1 = arith.constant 0 : i32
    return %c0_i32, %c0_i32_0 : i32, i32
  }
  func.func @transform_7(%arg0: i32) -> (i32, i32) {
    %c0_i32 = arith.constant 0 : i32
    %c0_i32_0 = arith.constant 0 : i32
    %c0_i32_1 = arith.constant 0 : i32
    return %c0_i32, %c0_i32_0 : i32, i32
  }
  func.func @transform_8(%arg0: i32) -> (i32, i32) {
    %c0_i32 = arith.constant 0 : i32
    %c0_i32_0 = arith.constant 0 : i32
    %c0_i32_1 = arith.constant 0 : i32
    return %c0_i32, %c0_i32_0 : i32, i32
  }
  func.func @transform_9(%arg0: i32) -> (i32, i32) {
    %c0_i32 = arith.constant 0 : i32
    %c0_i32_0 = arith.constant 0 : i32
    %c0_i32_1 = arith.constant 0 : i32
    return %c0_i32, %c0_i32_0 : i32, i32
  }
  func.func @transform_10(%arg0: i32) -> (i32, i32, i32) {
    %c0_i32 = arith.constant 0 : i32
    %c0_i32_0 = arith.constant 0 : i32
    %c0_i32_1 = arith.constant 0 : i32
    return %arg0, %c0_i32, %c0_i32_0 : i32, i32, i32
  }
}

</mosaic_0001>

<llo_original>
// kernel: tpu_custom_call.1
$region0: #{tpu_custom_call.1}
  #allocation0 [shape = 'u32[]', space=smem, size = 0x4, offset = 0x4, fixed_abs, tag = 'smem constant byte address 0x4 - core index']
  #allocation1 [shape = 'u32[144,128]{1,0:T(1,128)}', space=vmem, size = 0x12000, scoped, tag = 'internal scratch']
  %s0 = inlined_call_operand.hbm [shape: f32[4,16,128], index: 0, kind: input, shape index: {}]
  %s1 = inlined_call_operand.hbm [shape: f32[4,16,128], index: 1, kind: input, shape index: {}]
  %s2 = inlined_call_operand.vmem [shape: f32[5,128], index: 2, kind: input, shape index: {}]
  %s3 = inlined_call_operand.vmem [shape: f32[1,512], index: 3, kind: input, shape index: {}]
  %s4 = inlined_call_operand.vmem [shape: f32[16,3], index: 4, kind: input, shape index: {}]
  %s5 = inlined_call_operand.vmem [shape: bf16[16,16], index: 5, kind: input, shape index: {}]
  %s6 = inlined_call_operand.hbm [shape: bf16[128,128], index: 6, kind: input, shape index: {}]
  %s7 = inlined_call_operand.hbm [shape: bf16[128,128], index: 7, kind: input, shape index: {}]
  %s8 = inlined_call_operand.hbm [shape: bf16[128,512], index: 8, kind: input, shape index: {}]
  %s9 = inlined_call_operand.hbm [shape: bf16[512,128], index: 9, kind: input, shape index: {}]
  %s10 = inlined_call_operand.hbm [shape: f32[4,16,128], index: 10, kind: output, shape index: {}]
  %s11 = sld [smem:[#allocation0]]
  $region74: #{tpu_custom_call.1} parent=0
    _
  %s13 = ssub.s32 1, %s11
  %s14 = scalar_select 0, %s13, %s11
  $region1: #{tpu_custom_call.1} parent=0
    #allocation2 [shape = 'u8[32768]{0}', space=vmem, size = 0x8000, scoped, tag = 'input window, operand 0, single buffered']
    #allocation3 [shape = 's32[1]{0}', space=sflag, size = 0x4, scoped, tag = 'scoped memory for tpu_custom_call.1']
    #allocation4 [shape = 's32[1]{0}', space=sflag, size = 0x4, scoped, tag = 'scoped memory for tpu_custom_call.1']
    #allocation5 [shape = 'u8[32768]{0}', space=vmem, size = 0x8000, scoped, tag = 'input window, operand 1, single buffered']
    #allocation6 [shape = 's32[1]{0}', space=sflag, size = 0x4, scoped, tag = 'scoped memory for tpu_custom_call.1']
    #allocation7 [shape = 'u8[32768]{0}', space=vmem, size = 0x8000, scoped, tag = 'input window, operand 6, single buffered']
    #allocation8 [shape = 'u8[32768]{0}', space=vmem, size = 0x8000, scoped, tag = 'input window, operand 7, single buffered']
    #allocation9 [shape = 's32[1]{0}', space=sflag, size = 0x4, scoped, tag = 'scoped memory for tpu_custom_call.1']
    #allocation10 [shape = 'u8[131072]{0}', space=vmem, size = 0x20000, scoped, tag = 'input window, operand 8, single buffered']
    #allocation11 [shape = 'u8[131072]{0}', space=vmem, size = 0x20000, scoped, tag = 'input window, operand 9, single buffered']
    #allocation12 [shape = 's32[1]{0}', space=sflag, size = 0x4, scoped, tag = 'scoped memory for tpu_custom_call.1']
    #allocation13 [shape = 'u8[32768]{0}', space=vmem, size = 0x8000, scoped, tag = 'output window, operand 0, single buffered']
    %15 = vsyncpa [#allocation3], 0
    %16 = vsyncpa [#allocation6], 0
    %17 = vsyncpa [#allocation9], 0
    %18 = vsyncpa [#allocation12], 0
    %19 = vsyncpa [#allocation4], 0
    // Predicated region
    $region2: #{tpu_custom_call.1} parent=1 // pred_check
      _
    $region3: #{tpu_custom_call.1} parent=1 // pred_check_branch
      %21 = sbr.rel (0) target = $region5
    $region4: #{tpu_custom_call.1} parent=1 // pred_region
      %s23 = ssub.s32 1024, 1024
      %24 = vsyncadd [#allocation3], %s23
      %s25 = sshll.u32 [#allocation2], 4
      %s26 = int_to_ptr.vmem [resolvable:$true] %s25
      %31 = dma.hbm_to_vmem [thread:$0]  %s0, 1024, %s26, [#allocation3], 128, 128, 8
    $region5: #{tpu_custom_call.1} parent=1 // pred_fallthru
      _
    // Predicated region
    $region6: #{tpu_custom_call.1} parent=1 // pred_check
      _
    $region7: #{tpu_custom_call.1} parent=1 // pred_check_branch
      %33 = sbr.rel (0) target = $region9
    $region8: #{tpu_custom_call.1} parent=1 // pred_region
      %s35 = ssub.s32 1024, 1024
      %36 = vsyncadd [#allocation6], %s35
      %s37 = sshll.u32 [#allocation5], 4
      %s38 = int_to_ptr.vmem [resolvable:$true] %s37
      %43 = dma.hbm_to_vmem [thread:$0]  %s1, 1024, %s38, [#allocation6], 128, 128, 8
    $region9: #{tpu_custom_call.1} parent=1 // pred_fallthru
      _
    // Predicated region
    $region10: #{tpu_custom_call.1} parent=1 // pred_check
      _
    $region11: #{tpu_custom_call.1} parent=1 // pred_check_branch
      %45 = sbr.rel (0) target = $region13
    $region12: #{tpu_custom_call.1} parent=1 // pred_region
      _
    $region13: #{tpu_custom_call.1} parent=1 // pred_fallthru
      _
    // Predicated region
    $region14: #{tpu_custom_call.1} parent=1 // pred_check
      _
    $region15: #{tpu_custom_call.1} parent=1 // pred_check_branch
      %47 = sbr.rel (0) target = $region17
    $region16: #{tpu_custom_call.1} parent=1 // pred_region
      _
    $region17: #{tpu_custom_call.1} parent=1 // pred_fallthru
      _
    // Predicated region
    $region18: #{tpu_custom_call.1} parent=1 // pred_check
      _
    $region19: #{tpu_custom_call.1} parent=1 // pred_check_branch
      %49 = sbr.rel (0) target = $region21
    $region20: #{tpu_custom_call.1} parent=1 // pred_region
      _
    $region21: #{tpu_custom_call.1} parent=1 // pred_fallthru
      _
    // Predicated region
    $region22: #{tpu_custom_call.1} parent=1 // pred_check
      _
    $region23: #{tpu_custom_call.1} parent=1 // pred_check_branch
      %51 = sbr.rel (0) target = $region25
    $region24: #{tpu_custom_call.1} parent=1 // pred_region
      _
    $region25: #{tpu_custom_call.1} parent=1 // pred_fallthru
      _
    // Predicated region
    $region26: #{tpu_custom_call.1} parent=1 // pred_check
      _
    $region27: #{tpu_custom_call.1} parent=1 // pred_check_branch
      %53 = sbr.rel (0) target = $region29
    $region28: #{tpu_custom_call.1} parent=1 // pred_region
      %s55 = ssub.s32 1024, 1024
      %56 = vsyncadd [#allocation6], %s55
      %s57 = sshll.u32 [#allocation7], 4
      %s58 = int_to_ptr.vmem [resolvable:$true] %s57
      %63 = dma.hbm_to_vmem [thread:$0]  %s6, 1024, %s58, [#allocation6], 64, 64, 4
    $region29: #{tpu_custom_call.1} parent=1 // pred_fallthru
      _
    // Predicated region
    $region30: #{tpu_custom_call.1} parent=1 // pred_check
      _
    $region31: #{tpu_custom_call.1} parent=1 // pred_check_branch
      %65 = sbr.rel (0) target = $region33
    $region32: #{tpu_custom_call.1} parent=1 // pred_region
      %s67 = ssub.s32 1024, 1024
      %68 = vsyncadd [#allocation9], %s67
      %s69 = sshll.u32 [#allocation8], 4
      %s70 = int_to_ptr.vmem [resolvable:$true] %s69
      %75 = dma.hbm_to_vmem [thread:$0]  %s7, 1024, %s70, [#allocation9], 64, 64, 4
    $region33: #{tpu_custom_call.1} parent=1 // pred_fallthru
      _
    // Predicated region
    $region34: #{tpu_custom_call.1} parent=1 // pred_check
      _
    $region35: #{tpu_custom_call.1} parent=1 // pred_check_branch
      %77 = sbr.rel (0) target = $region37
    $region36: #{tpu_custom_call.1} parent=1 // pred_region
      %s79 = ssub.s32 4096, 4096
      %80 = vsyncadd [#allocation9], %s79
      %s81 = sshll.u32 [#allocation10], 4
      %s82 = int_to_ptr.vmem [resolvable:$true] %s81
      %87 = dma.hbm_to_vmem [thread:$0]  %s8, 4096, %s82, [#allocation9], 256, 256, 16
    $region37: #{tpu_custom_call.1} parent=1 // pred_fallthru
      _
    // Predicated region
    $region38: #{tpu_custom_call.1} parent=1 // pred_check
      _
    $region39: #{tpu_custom_call.1} parent=1 // pred_check_branch
      %89 = sbr.rel (0) target = $region41
    $region40: #{tpu_custom_call.1} parent=1 // pred_region
      %s91 = ssub.s32 4096, 4096
      %92 = vsyncadd [#allocation12], %s91
      %s93 = sshll.u32 [#allocation11], 4
      %s94 = int_to_ptr.vmem [resolvable:$true] %s93
      %99 = dma.hbm_to_vmem [thread:$0]  %s9, 4096, %s94, [#allocation12], 64, 64, 4
    $region41: #{tpu_custom_call.1} parent=1 // pred_fallthru
      _
    // Predicated region
    $region42: #{tpu_custom_call.1} parent=1 // pred_check
      _
    $region43: #{tpu_custom_call.1} parent=1 // pred_check_branch
      %101 = sbr.rel (0) target = $region45
    $region44: #{tpu_custom_call.1} parent=1 // pred_region
      %102 = dma.done [#allocation3], 1024
    $region45: #{tpu_custom_call.1} parent=1 // pred_fallthru
      _
    // Predicated region
    $region46: #{tpu_custom_call.1} parent=1 // pred_check
      _
    $region47: #{tpu_custom_call.1} parent=1 // pred_check_branch
      %104 = sbr.rel (0) target = $region49
    $region48: #{tpu_custom_call.1} parent=1 // pred_region
      %105 = dma.done [#allocation6], 1024
    $region49: #{tpu_custom_call.1} parent=1 // pred_fallthru
      _
    // Predicated region
    $region50: #{tpu_custom_call.1} parent=1 // pred_check
      _
    $region51: #{tpu_custom_call.1} parent=1 // pred_check_branch
      %107 = sbr.rel (0) target = $region53
    $region52: #{tpu_custom_call.1} parent=1 // pred_region
      %108 = dma.done [#allocation6], 1024
    $region53: #{tpu_custom_call.1} parent=1 // pred_fallthru
      _
    // Predicated region
    $region54: #{tpu_custom_call.1} parent=1 // pred_check
      _
    $region55: #{tpu_custom_call.1} parent=1 // pred_check_branch
      %110 = sbr.rel (0) target = $region57
    $region56: #{tpu_custom_call.1} parent=1 // pred_region
      %111 = dma.done [#allocation9], 1024
    $region57: #{tpu_custom_call.1} parent=1 // pred_fallthru
      _
    // Predicated region
    $region58: #{tpu_custom_call.1} parent=1 // pred_check
      _
    $region59: #{tpu_custom_call.1} parent=1 // pred_check_branch
      %113 = sbr.rel (0) target = $region61
    $region60: #{tpu_custom_call.1} parent=1 // pred_region
      %114 = dma.done [#allocation9], 4096
    $region61: #{tpu_custom_call.1} parent=1 // pred_fallthru
      _
    // Predicated region
    $region62: #{tpu_custom_call.1} parent=1 // pred_check
      _
    $region63: #{tpu_custom_call.1} parent=1 // pred_check_branch
      %116 = sbr.rel (0) target = $region65
    $region64: #{tpu_custom_call.1} parent=1 // pred_region
      %117 = dma.done [#allocation12], 4096
    $region65: #{tpu_custom_call.1} parent=1 // pred_fallthru
      _
    %v119 = vld [vmem:[#allocation2] sm:$0xff]
    %v120 = vld [vmem:[#allocation2 + $0x8] sm:$0xff]
    %v121 = vld [vmem:[#allocation2 + $0x10] sm:$0xff]
    %v122 = vld [vmem:[#allocation2 + $0x18] sm:$0xff]
    %v123 = vld [vmem:[#allocation2 + $0x20] sm:$0xff]
    %v124 = vld [vmem:[#allocation2 + $0x28] sm:$0xff]
    %v125 = vld [vmem:[#allocation2 + $0x30] sm:$0xff]
    %v126 = vld [vmem:[#allocation2 + $0x38] sm:$0xff]
    %v127 = vld [vmem:[#allocation5] sm:$0xff]
    %v128 = vld [vmem:[#allocation5 + $0x8] sm:$0xff]
    %v129 = vld [vmem:[#allocation5 + $0x10] sm:$0xff]
    %v130 = vld [vmem:[#allocation5 + $0x18] sm:$0xff]
    %v131 = vld [vmem:[#allocation5 + $0x20] sm:$0xff]
    %v132 = vld [vmem:[#allocation5 + $0x28] sm:$0xff]
    %v133 = vld [vmem:[#allocation5 + $0x30] sm:$0xff]
    %v134 = vld [vmem:[#allocation5 + $0x38] sm:$0xff]
    %v135 = vadd.f32 %v119, %v127
    %v136 = vadd.f32 %v120, %v128
    %v137 = vadd.f32 %v121, %v129
    %v138 = vadd.f32 %v122, %v130
    %v139 = vadd.f32 %v123, %v131
    %v140 = vadd.f32 %v124, %v132
    %v141 = vadd.f32 %v125, %v133
    %v142 = vadd.f32 %v126, %v134
    %v143 = vld [vmem:[%s2] sm:$0x1f]
    %v144 = vld [vmem:[%s3] sm:$0xf]
    %v145 = vld [vmem:[%s4] sm:$0xff]
    %v146 = vld [vmem:[%s4 + $0x8] sm:$0xff]
    %147 = vadd.xlane.f32.xlu0 %v135
    %v148 = vpop.xlane.xlu0 %147
    %149 = vadd.xlane.f32.xlu0 %v136
    %v150 = vpop.xlane.xlu0 %149
    %151 = vadd.xlane.f32.xlu0 %v137
    %v152 = vpop.xlane.xlu0 %151
    %153 = vadd.xlane.f32.xlu0 %v138
    %v154 = vpop.xlane.xlu0 %153
    %155 = vadd.xlane.f32.xlu0 %v139
    %v156 = vpop.xlane.xlu0 %155
    %157 = vadd.xlane.f32.xlu0 %v140
    %v158 = vpop.xlane.xlu0 %157
    %159 = vadd.xlane.f32.xlu0 %v141
    %v160 = vpop.xlane.xlu0 %159
    %161 = vadd.xlane.f32.xlu0 %v142
    %v162 = vpop.xlane.xlu0 %161
    %v163 = vrcp.pop 128.0
    %v164 = vmul.f32 %v148, %v163
    %v165 = vmul.f32 %v150, %v163
    %v166 = vmul.f32 %v152, %v163
    %v167 = vmul.f32 %v154, %v163
    %v168 = vmul.f32 %v156, %v163
    %v169 = vmul.f32 %v158, %v163
    %v170 = vmul.f32 %v160, %v163
    %v171 = vmul.f32 %v162, %v163
    %v172 = vsub.f32 %v135, %v164
    %v173 = vsub.f32 %v136, %v165
    %v174 = vsub.f32 %v137, %v166
    %v175 = vsub.f32 %v138, %v167
    %v176 = vsub.f32 %v139, %v168
    %v177 = vsub.f32 %v140, %v169
    %v178 = vsub.f32 %v141, %v170
    %v179 = vsub.f32 %v142, %v171
    %v180 = vmul.f32 %v172, %v172
    %v181 = vmul.f32 %v173, %v173
    %v182 = vmul.f32 %v174, %v174
    %v183 = vmul.f32 %v175, %v175
    %v184 = vmul.f32 %v176, %v176
    %v185 = vmul.f32 %v177, %v177
    %v186 = vmul.f32 %v178, %v178
    %v187 = vmul.f32 %v179, %v179
    %188 = vadd.xlane.f32.xlu0 %v180
    %v189 = vpop.xlane.xlu0 %188
    %190 = vadd.xlane.f32.xlu0 %v181
    %v191 = vpop.xlane.xlu0 %190
    %192 = vadd.xlane.f32.xlu0 %v182
    %v193 = vpop.xlane.xlu0 %192
    %194 = vadd.xlane.f32.xlu0 %v183
    %v195 = vpop.xlane.xlu0 %194
    %196 = vadd.xlane.f32.xlu0 %v184
    %v197 = vpop.xlane.xlu0 %196
    %198 = vadd.xlane.f32.xlu0 %v185
    %v199 = vpop.xlane.xlu0 %198
    %200 = vadd.xlane.f32.xlu0 %v186
    %v201 = vpop.xlane.xlu0 %200
    %202 = vadd.xlane.f32.xlu0 %v187
    %v203 = vpop.xlane.xlu0 %202
    %v204 = vmul.f32 %v189, %v163
    %v205 = vmul.f32 %v191, %v163
    %v206 = vmul.f32 %v193, %v163
    %v207 = vmul.f32 %v195, %v163
    %v208 = vmul.f32 %v197, %v163
    %v209 = vmul.f32 %v199, %v163
    %v210 = vmul.f32 %v201, %v163
    %v211 = vmul.f32 %v203, %v163
    %v212 = vadd.f32 %v204, 1e-05
    %v213 = vadd.f32 %v205, 1e-05
    %v214 = vadd.f32 %v206, 1e-05
    %v215 = vadd.f32 %v207, 1e-05
    %v216 = vadd.f32 %v208, 1e-05
    %v217 = vadd.f32 %v209, 1e-05
    %v218 = vadd.f32 %v210, 1e-05
    %v219 = vadd.f32 %v211, 1e-05
    %v220 = vrsqrt.pop %v212
    %v221 = vrsqrt.pop %v213
    %v222 = vrsqrt.pop %v214
    %v223 = vrsqrt.pop %v215
    %v224 = vrsqrt.pop %v216
    %v225 = vrsqrt.pop %v217
    %v226 = vrsqrt.pop %v218
    %v227 = vrsqrt.pop %v219
    %v228 = vmul.f32 %v172, %v220
    %v229 = vmul.f32 %v173, %v221
    %v230 = vmul.f32 %v174, %v222
    %v231 = vmul.f32 %v175, %v223
    %v232 = vmul.f32 %v176, %v224
    %v233 = vmul.f32 %v177, %v225
    %v234 = vmul.f32 %v178, %v226
    %v235 = vmul.f32 %v179, %v227
    %v236 = vlaneseq
    %v237 = vshrl.u32 %v236, 7
    %v238 = vsub.s32 0, %v237
    %v239 = vrot.slane %v143, %v238
    %v240 = vmul.f32 %v228, %v239
    %v241 = vmul.f32 %v229, %v239
    %v242 = vmul.f32 %v230, %v239
    %v243 = vmul.f32 %v231, %v239
    %v244 = vmul.f32 %v232, %v239
    %v245 = vmul.f32 %v233, %v239
    %v246 = vmul.f32 %v234, %v239
    %v247 = vmul.f32 %v235, %v239
    %v248 = vlaneseq
    %v249 = vshrl.u32 %v248, 7
    %v250 = vsub.s32 1, %v249
    %v251 = vrot.slane %v143, %v250
    %v252 = vadd.f32 %v240, %v251
    %v253 = vadd.f32 %v241, %v251
    %v254 = vadd.f32 %v242, %v251
    %v255 = vadd.f32 %v243, %v251
    %v256 = vadd.f32 %v244, %v251
    %v257 = vadd.f32 %v245, %v251
    %v258 = vadd.f32 %v246, %v251
    %v259 = vadd.f32 %v247, %v251
    %v260 = vld [vmem:[#allocation7] sm:$0xf]
    %v261 = vld [vmem:[#allocation7 + $0x4] sm:$0xf]
    %v262 = vld [vmem:[#allocation7 + $0x8] sm:$0xf]
    %v263 = vld [vmem:[#allocation7 + $0xc] sm:$0xf]
    %v264 = vld [vmem:[#allocation7 + $0x10] sm:$0xf]
    %v265 = vld [vmem:[#allocation7 + $0x14] sm:$0xf]
    %v266 = vld [vmem:[#allocation7 + $0x18] sm:$0xf]
    %v267 = vld [vmem:[#allocation7 + $0x1c] sm:$0xf]
    %v268 = vld [vmem:[#allocation7 + $0x20] sm:$0xf]
    %v269 = vld [vmem:[#allocation7 + $0x24] sm:$0xf]
    %v270 = vld [vmem:[#allocation7 + $0x28] sm:$0xf]
    %v271 = vld [vmem:[#allocation7 + $0x2c] sm:$0xf]
    %v272 = vld [vmem:[#allocation7 + $0x30] sm:$0xf]
    %v273 = vld [vmem:[#allocation7 + $0x34] sm:$0xf]
    %v274 = vld [vmem:[#allocation7 + $0x38] sm:$0xf]
    %v275 = vld [vmem:[#allocation7 + $0x3c] sm:$0xf]
    %v276 = vpack.c.bf16 %v253, %v252
    %v277 = vpack.c.bf16 %v255, %v254
    %v278 = vpack.c.bf16 %v257, %v256
    %v279 = vpack.c.bf16 %v259, %v258
    %v280 = vlaneseq
    %v281 = vshrl.u32 %v280, 7
    %v282 = vsub.s32 2, %v281
    %v283 = vrot.slane %v143, %v282
    %v300 = vunpack.c.l.b16 %v260
    %v301 = vunpack.c.l.b16 %v261
    %v302 = vunpack.c.l.b16 %v262
    %v303 = vunpack.c.l.b16 %v263
    %v304 = vunpack.c.l.b16 %v264
    %v305 = vunpack.c.l.b16 %v265
    %v306 = vunpack.c.l.b16 %v266
    %v307 = vunpack.c.l.b16 %v267
    %v308 = vunpack.c.l.b16 %v268
    %v309 = vunpack.c.l.b16 %v269
    %v310 = vunpack.c.l.b16 %v270
    %v311 = vunpack.c.l.b16 %v271
    %v312 = vunpack.c.l.b16 %v272
    %v313 = vunpack.c.l.b16 %v273
    %v314 = vunpack.c.l.b16 %v274
    %v315 = vunpack.c.l.b16 %v275
    %v316 = vpack.c.b16 %v301, %v300
    %v317 = vpack.c.b16 %v303, %v302
    %v318 = vpack.c.b16 %v305, %v304
    %v319 = vpack.c.b16 %v307, %v306
    %v320 = vpack.c.b16 %v309, %v308
    %v321 = vpack.c.b16 %v311, %v310
    %v322 = vpack.c.b16 %v313, %v312
    %v323 = vpack.c.b16 %v315, %v314
    %332 = vmatprep.subr.bf16.mxu0 0
    %333 = vmatpush1.bf16.msra.mxu0 %v323
    %334 = vmatprep.subr.bf16.mxu0 0
    %335 = vmatpush1.bf16.msra.mxu0 %v322
    %336 = vmatprep.subr.bf16.mxu0 0
    %337 = vmatpush1.bf16.msra.mxu0 %v321
    %338 = vmatprep.subr.bf16.mxu0 0
    %339 = vmatpush1.bf16.msra.mxu0 %v320
    %340 = vmatprep.subr.bf16.mxu0 0
    %341 = vmatpush1.bf16.msra.mxu0 %v319
    %342 = vmatprep.subr.bf16.mxu0 0
    %343 = vmatpush1.bf16.msra.mxu0 %v318
    %344 = vmatprep.subr.bf16.mxu0 0
    %345 = vmatpush1.bf16.msra.mxu0 %v317
    %346 = vmatprep.subr.bf16.mxu0 0
    %347 = vmatpush1.bf16.msra.mxu0 %v316
    %348 = vmatprep.subr.bf16.mxu0 0
    %349 = vmatpush2.bf16.msra.mxu0 0
    %350 = vmatprep.subr.bf16.mxu0 0
    %351 = vmatpush2.bf16.msra.mxu0 0
    %352 = vmatprep.subr.bf16.mxu0 0
    %353 = vmatpush2.bf16.msra.mxu0 0
    %354 = vmatprep.subr.bf16.mxu0 0
    %355 = vmatpush2.bf16.msra.mxu0 0
    %356 = vmatprep.subr.bf16.mxu0 0
    %357 = vmatpush2.bf16.msra.mxu0 0
    %358 = vmatprep.subr.bf16.mxu0 0
    %359 = vmatpush2.bf16.msra.mxu0 0
    %360 = vmatprep.subr.bf16.mxu0 0
    %361 = vmatpush2.bf16.msra.mxu0 0
    %362 = vmatprep.subr.bf16.mxu0 0
    %363 = vmatpush2.bf16.msra.mxu0 0
    %364 = vmatprep.mubr.bf16.mxu0 0
    %365 = vmatmul.mubr.bf16.gmra.mxu0 %v276
    %v366 = vpop.f32.mrf.mxu0
    %v367 = vadd.f32 %v283, %v366
    %v368 = vpop.f32.mrf.mxu0
    %v369 = vpop.f32.mrf.mxu0
    %v370 = vadd.f32 %v283, %v369
    %v371 = vpop.f32.mrf.mxu0
    %372 = vmatprep.mubr.bf16.mxu0 0
    %373 = vmatmul.mubr.bf16.gmra.mxu0 %v277
    %v374 = vpop.f32.mrf.mxu0
    %v375 = vadd.f32 %v283, %v374
    %v376 = vpop.f32.mrf.mxu0
    %v377 = vpop.f32.mrf.mxu0
    %v378 = vadd.f32 %v283, %v377
    %v379 = vpop.f32.mrf.mxu0
    %380 = vmatprep.mubr.bf16.mxu0 0
    %381 = vmatmul.mubr.bf16.gmra.mxu0 %v278
    %v382 = vpop.f32.mrf.mxu0
    %v383 = vadd.f32 %v283, %v382
    %v384 = vpop.f32.mrf.mxu0
    %v385 = vpop.f32.mrf.mxu0
    %v386 = vadd.f32 %v283, %v385
    %v387 = vpop.f32.mrf.mxu0
    %388 = vmatprep.mubr.bf16.mxu0 0
    %389 = vmatmul.mubr.bf16.gmra.mxu0 %v279
    %v390 = vpop.f32.mrf.mxu0
    %v391 = vadd.f32 %v283, %v390
    %v392 = vpop.f32.mrf.mxu0
    %v393 = vpop.f32.mrf.mxu0
    %v394 = vadd.f32 %v283, %v393
    %v395 = vpop.f32.mrf.mxu0
    %396 = vdwg.mxu0
    %v397 = vadd.f32 %v135, %v136
    %v398 = vrot.slane %v397, 4
    %v399 = vadd.f32 %v397, %v398
    %v400 = vrot.slane %v399, 2
    %v401 = vadd.f32 %v399, %v400
    %v402 = vrot.slane %v401, 1
    %v403 = vadd.f32 %v401, %v402
    %v404 = vadd.f32 %v137, %v138
    %v405 = vrot.slane %v404, 4
    %v406 = vadd.f32 %v404, %v405
    %v407 = vrot.slane %v406, 2
    %v408 = vadd.f32 %v406, %v407
    %v409 = vrot.slane %v408, 1
    %v410 = vadd.f32 %v408, %v409
    %v411 = vadd.f32 %v139, %v140
    %v412 = vrot.slane %v411, 4
    %v413 = vadd.f32 %v411, %v412
    %v414 = vrot.slane %v413, 2
    %v415 = vadd.f32 %v413, %v414
    %v416 = vrot.slane %v415, 1
    %v417 = vadd.f32 %v415, %v416
    %v418 = vadd.f32 %v141, %v142
    %v419 = vrot.slane %v418, 4
    %v420 = vadd.f32 %v418, %v419
    %v421 = vrot.slane %v420, 2
    %v422 = vadd.f32 %v420, %v421
    %v423 = vrot.slane %v422, 1
    %v424 = vadd.f32 %v422, %v423
    %v425 = vrcp.pop 16.0
    %v426 = vmul.f32 %v403, %v425
    %v427 = vmul.f32 %v410, %v425
    %v428 = vmul.f32 %v417, %v425
    %v429 = vmul.f32 %v424, %v425
    %v430 = vsub.f32 %v135, %v426
    %v431 = vsub.f32 %v136, %v426
    %v432 = vsub.f32 %v137, %v427
    %v433 = vsub.f32 %v138, %v427
    %v434 = vsub.f32 %v139, %v428
    %v435 = vsub.f32 %v140, %v428
    %v436 = vsub.f32 %v141, %v429
    %v437 = vsub.f32 %v142, %v429
    %v438 = vmul.f32 %v430, %v430
    %v439 = vmul.f32 %v431, %v431
    %v440 = vmul.f32 %v432, %v432
    %v441 = vmul.f32 %v433, %v433
    %v442 = vmul.f32 %v434, %v434
    %v443 = vmul.f32 %v435, %v435
    %v444 = vmul.f32 %v436, %v436
    %v445 = vmul.f32 %v437, %v437
    %v446 = vadd.f32 %v438, %v439
    %v447 = vrot.slane %v446, 4
    %v448 = vadd.f32 %v446, %v447
    %v449 = vrot.slane %v448, 2
    %v450 = vadd.f32 %v448, %v449
    %v451 = vrot.slane %v450, 1
    %v452 = vadd.f32 %v450, %v451
    %v453 = vadd.f32 %v440, %v441
    %v454 = vrot.slane %v453, 4
    %v455 = vadd.f32 %v453, %v454
    %v456 = vrot.slane %v455, 2
    %v457 = vadd.f32 %v455, %v456
    %v458 = vrot.slane %v457, 1
    %v459 = vadd.f32 %v457, %v458
    %v460 = vadd.f32 %v442, %v443
    %v461 = vrot.slane %v460, 4
    %v462 = vadd.f32 %v460, %v461
    %v463 = vrot.slane %v462, 2
    %v464 = vadd.f32 %v462, %v463
    %v465 = vrot.slane %v464, 1
    %v466 = vadd.f32 %v464, %v465
    %v467 = vadd.f32 %v444, %v445
    %v468 = vrot.slane %v467, 4
    %v469 = vadd.f32 %v467, %v468
    %v470 = vrot.slane %v469, 2
    %v471 = vadd.f32 %v469, %v470
    %v472 = vrot.slane %v471, 1
    %v473 = vadd.f32 %v471, %v472
    %v474 = vmul.f32 %v452, %v425
    %v475 = vmul.f32 %v459, %v425
    %v476 = vmul.f32 %v466, %v425
    %v477 = vmul.f32 %v473, %v425
    %v478 = vadd.f32 %v474, 1e-05
    %v479 = vadd.f32 %v475, 1e-05
    %v480 = vadd.f32 %v476, 1e-05
    %v481 = vadd.f32 %v477, 1e-05
    %v482 = vrsqrt.pop %v478
    %v483 = vrsqrt.pop %v479
    %v484 = vrsqrt.pop %v480
    %v485 = vrsqrt.pop %v481
    %v486 = vmul.f32 %v430, %v482
    %v487 = vmul.f32 %v431, %v482
    %v488 = vmul.f32 %v432, %v483
    %v489 = vmul.f32 %v433, %v483
    %v490 = vmul.f32 %v434, %v484
    %v491 = vmul.f32 %v435, %v484
    %v492 = vmul.f32 %v436, %v485
    %v493 = vmul.f32 %v437, %v485
    %495 = vset.pattern.permute.xlu0 0
    %496 = vperm.xlu0 %495, %v145
    %v497 = vpop.permute.xlu0 %496
    %500 = vset.pattern.permute.xlu0 0
    %501 = vperm.xlu0 %500, %v146
    %v502 = vpop.permute.xlu0 %501
    %v504 = vmul.f32 %v486, %v497
    %v505 = vmul.f32 %v487, %v502
    %v506 = vmul.f32 %v488, %v497
    %v507 = vmul.f32 %v489, %v502
    %v508 = vmul.f32 %v490, %v497
    %v509 = vmul.f32 %v491, %v502
    %v510 = vmul.f32 %v492, %v497
    %v511 = vmul.f32 %v493, %v502
    %512 = vset.pattern.permute.xlu0 1
    %513 = vperm.xlu0 %512, %v145
    %v514 = vpop.permute.xlu0 %513
    %516 = vset.pattern.permute.xlu0 1
    %517 = vperm.xlu0 %516, %v146
    %v518 = vpop.permute.xlu0 %517
    %v520 = vadd.f32 %v504, %v514
    %v521 = vadd.f32 %v505, %v518
    %v522 = vadd.f32 %v506, %v514
    %v523 = vadd.f32 %v507, %v518
    %v524 = vadd.f32 %v508, %v514
    %v525 = vadd.f32 %v509, %v518
    %v526 = vadd.f32 %v510, %v514
    %v527 = vadd.f32 %v511, %v518
    %v528 = vld [vmem:[%s5] sm:$0xf]
    %v529 = vld [vmem:[%s5 + $0x4] sm:$0xf]
    %v530 = vpack.c.bf16 %v521, %v520
    %v531 = vpack.c.bf16 %v523, %v522
    %v532 = vpack.c.bf16 %v525, %v524
    %v533 = vpack.c.bf16 %v527, %v526
    %534 = vset.pattern.permute.xlu0 2
    %535 = vperm.xlu0 %534, %v145
    %v536 = vpop.permute.xlu0 %535
    %538 = vset.pattern.permute.xlu0 2
    %539 = vperm.xlu0 %538, %v146
    %v540 = vpop.permute.xlu0 %539
    %v544 = vunpack.c.l.b16 %v528
    %v545 = vunpack.c.l.b16 %v529
    %v546 = vpack.c.b16 %v545, %v544
    %vm547 = vcmask 130048
    %v549 = vsel %vm547, %v546, 0
    %551 = vmatprep.subr.bf16.mxu0 0
    %552 = vmatpush1.bf16.msra.mxu0 0
    %553 = vmatprep.subr.bf16.mxu0 0
    %554 = vmatpush1.bf16.msra.mxu0 0
    %555 = vmatprep.subr.bf16.mxu0 0
    %556 = vmatpush1.bf16.msra.mxu0 0
    %557 = vmatprep.subr.bf16.mxu0 0
    %558 = vmatpush1.bf16.msra.mxu0 0
    %559 = vmatprep.subr.bf16.mxu0 0
    %560 = vmatpush1.bf16.msra.mxu0 0
    %561 = vmatprep.subr.bf16.mxu0 0
    %562 = vmatpush1.bf16.msra.mxu0 0
    %563 = vmatprep.subr.bf16.mxu0 0
    %564 = vmatpush1.bf16.msra.mxu0 0
    %565 = vmatprep.subr.bf16.mxu0 0
    %566 = vmatpush1.bf16.msra.mxu0 %v530
    %567 = vmatprep.subr.bf16.mxu0 0
    %568 = vmatpush2.bf16.msra.mxu0 0
    %569 = vmatprep.subr.bf16.mxu0 0
    %570 = vmatpush2.bf16.msra.mxu0 0
    %571 = vmatprep.subr.bf16.mxu0 0
    %572 = vmatpush2.bf16.msra.mxu0 0
    %573 = vmatprep.subr.bf16.mxu0 0
    %574 = vmatpush2.bf16.msra.mxu0 0
    %575 = vmatprep.subr.bf16.mxu0 0
    %576 = vmatpush2.bf16.msra.mxu0 0
    %577 = vmatprep.subr.bf16.mxu0 0
    %578 = vmatpush2.bf16.msra.mxu0 0
    %579 = vmatprep.subr.bf16.mxu0 0
    %580 = vmatpush2.bf16.msra.mxu0 0
    %581 = vmatprep.subr.bf16.mxu0 0
    %582 = vmatpush2.bf16.msra.mxu0 0
    %583 = vmatprep.mubr.bf16.mxu0 0
    %584 = vmatmul.mubr.bf16.gmra.mxu0 %v549
    %v585 = vpop.f32.mrf.mxu0
    %v586 = vadd.f32 %v536, %v585
    %v587 = vpop.f32.mrf.mxu0
    %v588 = vpop.f32.mrf.mxu0
    %v589 = vadd.f32 %v540, %v588
    %v590 = vpop.f32.mrf.mxu0
    %591 = vdwg.mxu0
    %592 = vmatprep.subr.bf16.mxu0 0
    %593 = vmatpush1.bf16.msra.mxu0 0
    %594 = vmatprep.subr.bf16.mxu0 0
    %595 = vmatpush1.bf16.msra.mxu0 0
    %596 = vmatprep.subr.bf16.mxu0 0
    %597 = vmatpush1.bf16.msra.mxu0 0
    %598 = vmatprep.subr.bf16.mxu0 0
    %599 = vmatpush1.bf16.msra.mxu0 0
    %600 = vmatprep.subr.bf16.mxu0 0
    %601 = vmatpush1.bf16.msra.mxu0 0
    %602 = vmatprep.subr.bf16.mxu0 0
    %603 = vmatpush1.bf16.msra.mxu0 0
    %604 = vmatprep.subr.bf16.mxu0 0
    %605 = vmatpush1.bf16.msra.mxu0 0
    %606 = vmatprep.subr.bf16.mxu0 0
    %607 = vmatpush1.bf16.msra.mxu0 %v531
    %608 = vmatprep.subr.bf16.mxu0 0
    %609 = vmatpush2.bf16.msra.mxu0 0
    %610 = vmatprep.subr.bf16.mxu0 0
    %611 = vmatpush2.bf16.msra.mxu0 0
    %612 = vmatprep.subr.bf16.mxu0 0
    %613 = vmatpush2.bf16.msra.mxu0 0
    %614 = vmatprep.subr.bf16.mxu0 0
    %615 = vmatpush2.bf16.msra.mxu0 0
    %616 = vmatprep.subr.bf16.mxu0 0
    %617 = vmatpush2.bf16.msra.mxu0 0
    %618 = vmatprep.subr.bf16.mxu0 0
    %619 = vmatpush2.bf16.msra.mxu0 0
    %620 = vmatprep.subr.bf16.mxu0 0
    %621 = vmatpush2.bf16.msra.mxu0 0
    %622 = vmatprep.subr.bf16.mxu0 0
    %623 = vmatpush2.bf16.msra.mxu0 0
    %624 = vmatprep.mubr.bf16.mxu0 0
    %625 = vmatmul.mubr.bf16.gmra.mxu0 %v549
    %v626 = vpop.f32.mrf.mxu0
    %v627 = vadd.f32 %v536, %v626
    %v628 = vpop.f32.mrf.mxu0
    %v629 = vpop.f32.mrf.mxu0
    %v630 = vadd.f32 %v540, %v629
    %v631 = vpop.f32.mrf.mxu0
    %632 = vdwg.mxu0
    %633 = vmatprep.subr.bf16.mxu0 0
    %634 = vmatpush1.bf16.msra.mxu0 0
    %635 = vmatprep.subr.bf16.mxu0 0
    %636 = vmatpush1.bf16.msra.mxu0 0
    %637 = vmatprep.subr.bf16.mxu0 0
    %638 = vmatpush1.bf16.msra.mxu0 0
    %639 = vmatprep.subr.bf16.mxu0 0
    %640 = vmatpush1.bf16.msra.mxu0 0
    %641 = vmatprep.subr.bf16.mxu0 0
    %642 = vmatpush1.bf16.msra.mxu0 0
    %643 = vmatprep.subr.bf16.mxu0 0
    %644 = vmatpush1.bf16.msra.mxu0 0
    %645 = vmatprep.subr.bf16.mxu0 0
    %646 = vmatpush1.bf16.msra.mxu0 0
    %647 = vmatprep.subr.bf16.mxu0 0
    %648 = vmatpush1.bf16.msra.mxu0 %v532
    %649 = vmatprep.subr.bf16.mxu0 0
    %650 = vmatpush2.bf16.msra.mxu0 0
    %651 = vmatprep.subr.bf16.mxu0 0
    %652 = vmatpush2.bf16.msra.mxu0 0
    %653 = vmatprep.subr.bf16.mxu0 0
    %654 = vmatpush2.bf16.msra.mxu0 0
    %655 = vmatprep.subr.bf16.mxu0 0
    %656 = vmatpush2.bf16.msra.mxu0 0
    %657 = vmatprep.subr.bf16.mxu0 0
    %658 = vmatpush2.bf16.msra.mxu0 0
    %659 = vmatprep.subr.bf16.mxu0 0
    %660 = vmatpush2.bf16.msra.mxu0 0
    %661 = vmatprep.subr.bf16.mxu0 0
    %662 = vmatpush2.bf16.msra.mxu0 0
    %663 = vmatprep.subr.bf16.mxu0 0
    %664 = vmatpush2.bf16.msra.mxu0 0
    %665 = vmatprep.mubr.bf16.mxu0 0
    %666 = vmatmul.mubr.bf16.gmra.mxu0 %v549
    %v667 = vpop.f32.mrf.mxu0
    %v668 = vadd.f32 %v536, %v667
    %v669 = vpop.f32.mrf.mxu0
    %v670 = vpop.f32.mrf.mxu0
    %v671 = vadd.f32 %v540, %v670
    %v672 = vpop.f32.mrf.mxu0
    %673 = vdwg.mxu0
    %674 = vmatprep.subr.bf16.mxu0 0
    %675 = vmatpush1.bf16.msra.mxu0 0
    %676 = vmatprep.subr.bf16.mxu0 0
    %677 = vmatpush1.bf16.msra.mxu0 0
    %678 = vmatprep.subr.bf16.mxu0 0
    %679 = vmatpush1.bf16.msra.mxu0 0
    %680 = vmatprep.subr.bf16.mxu0 0
    %681 = vmatpush1.bf16.msra.mxu0 0
    %682 = vmatprep.subr.bf16.mxu0 0
    %683 = vmatpush1.bf16.msra.mxu0 0
    %684 = vmatprep.subr.bf16.mxu0 0
    %685 = vmatpush1.bf16.msra.mxu0 0
    %686 = vmatprep.subr.bf16.mxu0 0
    %687 = vmatpush1.bf16.msra.mxu0 0
    %688 = vmatprep.subr.bf16.mxu0 0
    %689 = vmatpush1.bf16.msra.mxu0 %v533
    %690 = vmatprep.subr.bf16.mxu0 0
    %691 = vmatpush2.bf16.msra.mxu0 0
    %692 = vmatprep.subr.bf16.mxu0 0
    %693 = vmatpush2.bf16.msra.mxu0 0
    %694 = vmatprep.subr.bf16.mxu0 0
    %695 = vmatpush2.bf16.msra.mxu0 0
    %696 = vmatprep.subr.bf16.mxu0 0
    %697 = vmatpush2.bf16.msra.mxu0 0
    %698 = vmatprep.subr.bf16.mxu0 0
    %699 = vmatpush2.bf16.msra.mxu0 0
    %700 = vmatprep.subr.bf16.mxu0 0
    %701 = vmatpush2.bf16.msra.mxu0 0
    %702 = vmatprep.subr.bf16.mxu0 0
    %703 = vmatpush2.bf16.msra.mxu0 0
    %704 = vmatprep.subr.bf16.mxu0 0
    %705 = vmatpush2.bf16.msra.mxu0 0
    %706 = vmatprep.mubr.bf16.mxu0 0
    %707 = vmatmul.mubr.bf16.gmra.mxu0 %v549
    %v708 = vpop.f32.mrf.mxu0
    %v709 = vadd.f32 %v536, %v708
    %v710 = vpop.f32.mrf.mxu0
    %v711 = vpop.f32.mrf.mxu0
    %v712 = vadd.f32 %v540, %v711
    %v713 = vpop.f32.mrf.mxu0
    %714 = vdwg.mxu0
    %v715 = vadd.f32 %v586, %v367
    %v716 = vadd.f32 %v589, %v370
    %v717 = vadd.f32 %v627, %v375
    %v718 = vadd.f32 %v630, %v378
    %v719 = vadd.f32 %v668, %v383
    %v720 = vadd.f32 %v671, %v386
    %v721 = vadd.f32 %v709, %v391
    %v722 = vadd.f32 %v712, %v394
    %v723 = vld [vmem:[#allocation8] sm:$0xf]
    %v724 = vld [vmem:[#allocation8 + $0x4] sm:$0xf]
    %v725 = vld [vmem:[#allocation8 + $0x8] sm:$0xf]
    %v726 = vld [vmem:[#allocation8 + $0xc] sm:$0xf]
    %v727 = vld [vmem:[#allocation8 + $0x10] sm:$0xf]
    %v728 = vld [vmem:[#allocation8 + $0x14] sm:$0xf]
    %v729 = vld [vmem:[#allocation8 + $0x18] sm:$0xf]
    %v730 = vld [vmem:[#allocation8 + $0x1c] sm:$0xf]
    %v731 = vld [vmem:[#allocation8 + $0x20] sm:$0xf]
    %v732 = vld [vmem:[#allocation8 + $0x24] sm:$0xf]
    %v733 = vld [vmem:[#allocation8 + $0x28] sm:$0xf]
    %v734 = vld [vmem:[#allocation8 + $0x2c] sm:$0xf]
    %v735 = vld [vmem:[#allocation8 + $0x30] sm:$0xf]
    %v736 = vld [vmem:[#allocation8 + $0x34] sm:$0xf]
    %v737 = vld [vmem:[#allocation8 + $0x38] sm:$0xf]
    %v738 = vld [vmem:[#allocation8 + $0x3c] sm:$0xf]
    %v739 = vpack.c.bf16 %v716, %v715
    %v740 = vpack.c.bf16 %v718, %v717
    %v741 = vpack.c.bf16 %v720, %v719
    %v742 = vpack.c.bf16 %v722, %v721
    %v743 = vlaneseq
    %v744 = vshrl.u32 %v743, 7
    %v745 = vsub.s32 3, %v744
    %v746 = vrot.slane %v143, %v745
    %v763 = vunpack.c.l.b16 %v723
    %v764 = vunpack.c.l.b16 %v724
    %v765 = vunpack.c.l.b16 %v725
    %v766 = vunpack.c.l.b16 %v726
    %v767 = vunpack.c.l.b16 %v727
    %v768 = vunpack.c.l.b16 %v728
    %v769 = vunpack.c.l.b16 %v729
    %v770 = vunpack.c.l.b16 %v730
    %v771 = vunpack.c.l.b16 %v731
    %v772 = vunpack.c.l.b16 %v732
    %v773 = vunpack.c.l.b16 %v733
    %v774 = vunpack.c.l.b16 %v734
    %v775 = vunpack.c.l.b16 %v735
    %v776 = vunpack.c.l.b16 %v736
    %v777 = vunpack.c.l.b16 %v737
    %v778 = vunpack.c.l.b16 %v738
    %v779 = vpack.c.b16 %v764, %v763
    %v780 = vpack.c.b16 %v766, %v765
    %v781 = vpack.c.b16 %v768, %v767
    %v782 = vpack.c.b16 %v770, %v769
    %v783 = vpack.c.b16 %v772, %v771
    %v784 = vpack.c.b16 %v774, %v773
    %v785 = vpack.c.b16 %v776, %v775
    %v786 = vpack.c.b16 %v778, %v777
    %795 = vmatprep.subr.bf16.mxu0 0
    %796 = vmatpush1.bf16.msra.mxu0 %v786
    %797 = vmatprep.subr.bf16.mxu0 0
    %798 = vmatpush1.bf16.msra.mxu0 %v785
    %799 = vmatprep.subr.bf16.mxu0 0
    %800 = vmatpush1.bf16.msra.mxu0 %v784
    %801 = vmatprep.subr.bf16.mxu0 0
    %802 = vmatpush1.bf16.msra.mxu0 %v783
    %803 = vmatprep.subr.bf16.mxu0 0
    %804 = vmatpush1.bf16.msra.mxu0 %v782
    %805 = vmatprep.subr.bf16.mxu0 0
    %806 = vmatpush1.bf16.msra.mxu0 %v781
    %807 = vmatprep.subr.bf16.mxu0 0
    %808 = vmatpush1.bf16.msra.mxu0 %v780
    %809 = vmatprep.subr.bf16.mxu0 0
    %810 = vmatpush1.bf16.msra.mxu0 %v779
    %811 = vmatprep.subr.bf16.mxu0 0
    %812 = vmatpush2.bf16.msra.mxu0 0
    %813 = vmatprep.subr.bf16.mxu0 0
    %814 = vmatpush2.bf16.msra.mxu0 0
    %815 = vmatprep.subr.bf16.mxu0 0
    %816 = vmatpush2.bf16.msra.mxu0 0
    %817 = vmatprep.subr.bf16.mxu0 0
    %818 = vmatpush2.bf16.msra.mxu0 0
    %819 = vmatprep.subr.bf16.mxu0 0
    %820 = vmatpush2.bf16.msra.mxu0 0
    %821 = vmatprep.subr.bf16.mxu0 0
    %822 = vmatpush2.bf16.msra.mxu0 0
    %823 = vmatprep.subr.bf16.mxu0 0
    %824 = vmatpush2.bf16.msra.mxu0 0
    %825 = vmatprep.subr.bf16.mxu0 0
    %826 = vmatpush2.bf16.msra.mxu0 0
    %827 = vmatprep.mubr.bf16.mxu0 0
    %828 = vmatmul.mubr.bf16.gmra.mxu0 %v739
    %v829 = vpop.f32.mrf.mxu0
    %v830 = vadd.f32 %v746, %v829
    %v831 = vpop.f32.mrf.mxu0
    %v832 = vpop.f32.mrf.mxu0
    %v833 = vadd.f32 %v746, %v832
    %v834 = vpop.f32.mrf.mxu0
    %835 = vmatprep.mubr.bf16.mxu0 0
    %836 = vmatmul.mubr.bf16.gmra.mxu0 %v740
    %v837 = vpop.f32.mrf.mxu0
    %v838 = vadd.f32 %v746, %v837
    %v839 = vpop.f32.mrf.mxu0
    %v840 = vpop.f32.mrf.mxu0
    %v841 = vadd.f32 %v746, %v840
    %v842 = vpop.f32.mrf.mxu0
    %843 = vmatprep.mubr.bf16.mxu0 0
    %844 = vmatmul.mubr.bf16.gmra.mxu0 %v741
    %v845 = vpop.f32.mrf.mxu0
    %v846 = vadd.f32 %v746, %v845
    %v847 = vpop.f32.mrf.mxu0
    %v848 = vpop.f32.mrf.mxu0
    %v849 = vadd.f32 %v746, %v848
    %v850 = vpop.f32.mrf.mxu0
    %851 = vmatprep.mubr.bf16.mxu0 0
    %852 = vmatmul.mubr.bf16.gmra.mxu0 %v742
    %v853 = vpop.f32.mrf.mxu0
    %v854 = vadd.f32 %v746, %v853
    %v855 = vpop.f32.mrf.mxu0
    %v856 = vpop.f32.mrf.mxu0
    %v857 = vadd.f32 %v746, %v856
    %v858 = vpop.f32.mrf.mxu0
    %859 = vdwg.mxu0
    %v860 = vadd.f32 %v252, %v830
    %v861 = vadd.f32 %v253, %v833
    %v862 = vadd.f32 %v254, %v838
    %v863 = vadd.f32 %v255, %v841
    %v864 = vadd.f32 %v256, %v846
    %v865 = vadd.f32 %v257, %v849
    %v866 = vadd.f32 %v258, %v854
    %v867 = vadd.f32 %v259, %v857
    %868 = vadd.xlane.f32.xlu0 %v860
    %v869 = vpop.xlane.xlu0 %868
    %870 = vadd.xlane.f32.xlu0 %v861
    %v871 = vpop.xlane.xlu0 %870
    %872 = vadd.xlane.f32.xlu0 %v862
    %v873 = vpop.xlane.xlu0 %872
    %874 = vadd.xlane.f32.xlu0 %v863
    %v875 = vpop.xlane.xlu0 %874
    %876 = vadd.xlane.f32.xlu0 %v864
    %v877 = vpop.xlane.xlu0 %876
    %878 = vadd.xlane.f32.xlu0 %v865
    %v879 = vpop.xlane.xlu0 %878
    %880 = vadd.xlane.f32.xlu0 %v866
    %v881 = vpop.xlane.xlu0 %880
    %882 = vadd.xlane.f32.xlu0 %v867
    %v883 = vpop.xlane.xlu0 %882
    %v884 = vmul.f32 %v869, %v163
    %v885 = vmul.f32 %v871, %v163
    %v886 = vmul.f32 %v873, %v163
    %v887 = vmul.f32 %v875, %v163
    %v888 = vmul.f32 %v877, %v163
    %v889 = vmul.f32 %v879, %v163
    %v890 = vmul.f32 %v881, %v163
    %v891 = vmul.f32 %v883, %v163
    %v892 = vsub.f32 %v860, %v884
    %v893 = vsub.f32 %v861, %v885
    %v894 = vsub.f32 %v862, %v886
    %v895 = vsub.f32 %v863, %v887
    %v896 = vsub.f32 %v864, %v888
    %v897 = vsub.f32 %v865, %v889
    %v898 = vsub.f32 %v866, %v890
    %v899 = vsub.f32 %v867, %v891
    %v900 = vmul.f32 %v892, %v892
    %v901 = vmul.f32 %v893, %v893
    %v902 = vmul.f32 %v894, %v894
    %v903 = vmul.f32 %v895, %v895
    %v904 = vmul.f32 %v896, %v896
    %v905 = vmul.f32 %v897, %v897
    %v906 = vmul.f32 %v898, %v898
    %v907 = vmul.f32 %v899, %v899
    %908 = vadd.xlane.f32.xlu0 %v900
    %v909 = vpop.xlane.xlu0 %908
    %910 = vadd.xlane.f32.xlu0 %v901
    %v911 = vpop.xlane.xlu0 %910
    %912 = vadd.xlane.f32.xlu0 %v902
    %v913 = vpop.xlane.xlu0 %912
    %914 = vadd.xlane.f32.xlu0 %v903
    %v915 = vpop.xlane.xlu0 %914
    %916 = vadd.xlane.f32.xlu0 %v904
    %v917 = vpop.xlane.xlu0 %916
    %918 = vadd.xlane.f32.xlu0 %v905
    %v919 = vpop.xlane.xlu0 %918
    %920 = vadd.xlane.f32.xlu0 %v906
    %v921 = vpop.xlane.xlu0 %920
    %922 = vadd.xlane.f32.xlu0 %v907
    %v923 = vpop.xlane.xlu0 %922
    %v924 = vmul.f32 %v909, %v163
    %v925 = vmul.f32 %v911, %v163
    %v926 = vmul.f32 %v913, %v163
    %v927 = vmul.f32 %v915, %v163
    %v928 = vmul.f32 %v917, %v163
    %v929 = vmul.f32 %v919, %v163
    %v930 = vmul.f32 %v921, %v163
    %v931 = vmul.f32 %v923, %v163
    %v932 = vadd.f32 %v924, 1e-05
    %v933 = vadd.f32 %v925, 1e-05
    %v934 = vadd.f32 %v926, 1e-05
    %v935 = vadd.f32 %v927, 1e-05
    %v936 = vadd.f32 %v928, 1e-05
    %v937 = vadd.f32 %v929, 1e-05
    %v938 = vadd.f32 %v930, 1e-05
    %v939 = vadd.f32 %v931, 1e-05
    %v940 = vrsqrt.pop %v932
    %v941 = vrsqrt.pop %v933
    %v942 = vrsqrt.pop %v934
    %v943 = vrsqrt.pop %v935
    %v944 = vrsqrt.pop %v936
    %v945 = vrsqrt.pop %v937
    %v946 = vrsqrt.pop %v938
    %v947 = vrsqrt.pop %v939
    %v948 = vmul.f32 %v892, %v940
    %v949 = vmul.f32 %v893, %v941
    %v950 = vmul.f32 %v894, %v942
    %v951 = vmul.f32 %v895, %v943
    %v952 = vmul.f32 %v896, %v944
    %v953 = vmul.f32 %v897, %v945
    %v954 = vmul.f32 %v898, %v946
    %v955 = vmul.f32 %v899, %v947
    %v956 = vmul.f32 %v948, %v239
    %v957 = vmul.f32 %v949, %v239
    %v958 = vmul.f32 %v950, %v239
    %v959 = vmul.f32 %v951, %v239
    %v960 = vmul.f32 %v952, %v239
    %v961 = vmul.f32 %v953, %v239
    %v962 = vmul.f32 %v954, %v239
    %v963 = vmul.f32 %v955, %v239
    %v964 = vadd.f32 %v956, %v251
    %v965 = vadd.f32 %v957, %v251
    %v966 = vadd.f32 %v958, %v251
    %v967 = vadd.f32 %v959, %v251
    %v968 = vadd.f32 %v960, %v251
    %v969 = vadd.f32 %v961, %v251
    %v970 = vadd.f32 %v962, %v251
    %v971 = vadd.f32 %v963, %v251
    %v972 = vld [vmem:[#allocation10] sm:$0xff]
    %v973 = vld [vmem:[#allocation10 + $0x8] sm:$0xff]
    %v974 = vld [vmem:[#allocation10 + $0x10] sm:$0xff]
    %v975 = vld [vmem:[#allocation10 + $0x18] sm:$0xff]
    %v976 = vld [vmem:[#allocation10 + $0x20] sm:$0xff]
    %v977 = vld [vmem:[#allocation10 + $0x28] sm:$0xff]
    %v978 = vld [vmem:[#allocation10 + $0x30] sm:$0xff]
    %v979 = vld [vmem:[#allocation10 + $0x38] sm:$0xff]
    %v980 = vld [vmem:[#allocation10 + $0x40] sm:$0xff]
    %v981 = vld [vmem:[#allocation10 + $0x48] sm:$0xff]
    %v982 = vld [vmem:[#allocation10 + $0x50] sm:$0xff]
    %v983 = vld [vmem:[#allocation10 + $0x58] sm:$0xff]
    %v984 = vld [vmem:[#allocation10 + $0x60] sm:$0xff]
    %v985 = vld [vmem:[#allocation10 + $0x68] sm:$0xff]
    %v986 = vld [vmem:[#allocation10 + $0x70] sm:$0xff]
    %v987 = vld [vmem:[#allocation10 + $0x78] sm:$0xff]
    %v988 = vld [vmem:[#allocation10 + $0x80] sm:$0xff]
    %v989 = vld [vmem:[#allocation10 + $0x88] sm:$0xff]
    %v990 = vld [vmem:[#allocation10 + $0x90] sm:$0xff]
    %v991 = vld [vmem:[#allocation10 + $0x98] sm:$0xff]
    %v992 = vld [vmem:[#allocation10 + $0xa0] sm:$0xff]
    %v993 = vld [vmem:[#allocation10 + $0xa8] sm:$0xff]
    %v994 = vld [vmem:[#allocation10 + $0xb0] sm:$0xff]
    %v995 = vld [vmem:[#allocation10 + $0xb8] sm:$0xff]
    %v996 = vld [vmem:[#allocation10 + $0xc0] sm:$0xff]
    %v997 = vld [vmem:[#allocation10 + $0xc8] sm:$0xff]
    %v998 = vld [vmem:[#allocation10 + $0xd0] sm:$0xff]
    %v999 = vld [vmem:[#allocation10 + $0xd8] sm:$0xff]
    %v1000 = vld [vmem:[#allocation10 + $0xe0] sm:$0xff]
    %v1001 = vld [vmem:[#allocation10 + $0xe8] sm:$0xff]
    %v1002 = vld [vmem:[#allocation10 + $0xf0] sm:$0xff]
    %v1003 = vld [vmem:[#allocation10 + $0xf8] sm:$0xff]
    %v1004 = vpack.c.bf16 %v965, %v964
    %v1005 = vpack.c.bf16 %v967, %v966
    %v1006 = vpack.c.bf16 %v969, %v968
    %v1007 = vpack.c.bf16 %v971, %v970
    %v1009 = vlaneseq
    %v1010 = vshrl.u32 %v1009, 7
    %v1011 = vsub.s32 0, %v1010
    %v1012 = vrot.slane %v144, %v1011
    %v1013 = vlaneseq
    %v1014 = vshrl.u32 %v1013, 7
    %v1015 = vsub.s32 1, %v1014
    %v1016 = vrot.slane %v144, %v1015
    %v1017 = vlaneseq
    %v1018 = vshrl.u32 %v1017, 7
    %v1019 = vsub.s32 2, %v1018
    %v1020 = vrot.slane %v144, %v1019
    %v1021 = vlaneseq
    %v1022 = vshrl.u32 %v1021, 7
    %v1023 = vsub.s32 3, %v1022
    %v1024 = vrot.slane %v144, %v1023
    %v1061 = vunpack.c.l.b16 %v972
    %v1062 = vunpack.c.h.b16 %v972
    %v1063 = vunpack.c.l.b16 %v973
    %v1064 = vunpack.c.h.b16 %v973
    %v1065 = vunpack.c.l.b16 %v974
    %v1066 = vunpack.c.h.b16 %v974
    %v1067 = vunpack.c.l.b16 %v975
    %v1068 = vunpack.c.h.b16 %v975
    %v1069 = vunpack.c.l.b16 %v976
    %v1070 = vunpack.c.h.b16 %v976
    %v1071 = vunpack.c.l.b16 %v977
    %v1072 = vunpack.c.h.b16 %v977
    %v1073 = vunpack.c.l.b16 %v978
    %v1074 = vunpack.c.h.b16 %v978
    %v1075 = vunpack.c.l.b16 %v979
    %v1076 = vunpack.c.h.b16 %v979
    %v1077 = vunpack.c.l.b16 %v980
    %v1078 = vunpack.c.h.b16 %v980
    %v1079 = vunpack.c.l.b16 %v981
    %v1080 = vunpack.c.h.b16 %v981
    %v1081 = vunpack.c.l.b16 %v982
    %v1082 = vunpack.c.h.b16 %v982
    %v1083 = vunpack.c.l.b16 %v983
    %v1084 = vunpack.c.h.b16 %v983
    %v1085 = vunpack.c.l.b16 %v984
    %v1086 = vunpack.c.h.b16 %v984
    %v1087 = vunpack.c.l.b16 %v985
    %v1088 = vunpack.c.h.b16 %v985
    %v1089 = vunpack.c.l.b16 %v986
    %v1090 = vunpack.c.h.b16 %v986
    %v1091 = vunpack.c.l.b16 %v987
    %v1092 = vunpack.c.h.b16 %v987
    %v1093 = vunpack.c.l.b16 %v988
    %v1094 = vunpack.c.h.b16 %v988
    %v1095 = vunpack.c.l.b16 %v989
    %v1096 = vunpack.c.h.b16 %v989
    %v1097 = vunpack.c.l.b16 %v990
    %v1098 = vunpack.c.h.b16 %v990
    %v1099 = vunpack.c.l.b16 %v991
    %v1100 = vunpack.c.h.b16 %v991
    %v1101 = vunpack.c.l.b16 %v992
    %v1102 = vunpack.c.h.b16 %v992
    %v1103 = vunpack.c.l.b16 %v993
    %v1104 = vunpack.c.h.b16 %v993
    %v1105 = vunpack.c.l.b16 %v994
    %v1106 = vunpack.c.h.b16 %v994
    %v1107 = vunpack.c.l.b16 %v995
    %v1108 = vunpack.c.h.b16 %v995
    %v1109 = vunpack.c.l.b16 %v996
    %v1110 = vunpack.c.h.b16 %v996
    %v1111 = vunpack.c.l.b16 %v997
    %v1112 = vunpack.c.h.b16 %v997
    %v1113 = vunpack.c.l.b16 %v998
    %v1114 = vunpack.c.h.b16 %v998
    %v1115 = vunpack.c.l.b16 %v999
    %v1116 = vunpack.c.h.b16 %v999
    %v1117 = vunpack.c.l.b16 %v1000
    %v1118 = vunpack.c.h.b16 %v1000
    %v1119 = vunpack.c.l.b16 %v1001
    %v1120 = vunpack.c.h.b16 %v1001
    %v1121 = vunpack.c.l.b16 %v1002
    %v1122 = vunpack.c.h.b16 %v1002
    %v1123 = vunpack.c.l.b16 %v1003
    %v1124 = vunpack.c.h.b16 %v1003
    %v1125 = vpack.c.b16 %v1065, %v1061
    %v1126 = vpack.c.b16 %v1066, %v1062
    %v1127 = vpack.c.b16 %v1067, %v1063
    %v1128 = vpack.c.b16 %v1068, %v1064
    %v1129 = vpack.c.b16 %v1073, %v1069
    %v1130 = vpack.c.b16 %v1074, %v1070
    %v1131 = vpack.c.b16 %v1075, %v1071
    %v1132 = vpack.c.b16 %v1076, %v1072
    %v1133 = vpack.c.b16 %v1081, %v1077
    %v1134 = vpack.c.b16 %v1082, %v1078
    %v1135 = vpack.c.b16 %v1083, %v1079
    %v1136 = vpack.c.b16 %v1084, %v1080
    %v1137 = vpack.c.b16 %v1089, %v1085
    %v1138 = vpack.c.b16 %v1090, %v1086
    %v1139 = vpack.c.b16 %v1091, %v1087
    %v1140 = vpack.c.b16 %v1092, %v1088
    %v1141 = vpack.c.b16 %v1097, %v1093
    %v1142 = vpack.c.b16 %v1098, %v1094
    %v1143 = vpack.c.b16 %v1099, %v1095
    %v1144 = vpack.c.b16 %v1100, %v1096
    %v1145 = vpack.c.b16 %v1105, %v1101
    %v1146 = vpack.c.b16 %v1106, %v1102
    %v1147 = vpack.c.b16 %v1107, %v1103
    %v1148 = vpack.c.b16 %v1108, %v1104
    %v1149 = vpack.c.b16 %v1113, %v1109
    %v1150 = vpack.c.b16 %v1114, %v1110
    %v1151 = vpack.c.b16 %v1115, %v1111
    %v1152 = vpack.c.b16 %v1116, %v1112
    %v1153 = vpack.c.b16 %v1121, %v1117
    %v1154 = vpack.c.b16 %v1122, %v1118
    %v1155 = vpack.c.b16 %v1123, %v1119
    %v1156 = vpack.c.b16 %v1124, %v1120
    %1189 = vmatprep.subr.bf16.mxu0 %v1154
    %1190 = vmatpush1.bf16.msra.mxu0 %v1153
    %1191 = vmatprep.subr.bf16.mxu0 %v1150
    %1192 = vmatpush1.bf16.msra.mxu0 %v1149
    %1193 = vmatprep.subr.bf16.mxu0 %v1146
    %1194 = vmatpush1.bf16.msra.mxu0 %v1145
    %1195 = vmatprep.subr.bf16.mxu0 %v1142
    %1196 = vmatpush1.bf16.msra.mxu0 %v1141
    %1197 = vmatprep.subr.bf16.mxu0 %v1138
    %1198 = vmatpush1.bf16.msra.mxu0 %v1137
    %1199 = vmatprep.subr.bf16.mxu0 %v1134
    %1200 = vmatpush1.bf16.msra.mxu0 %v1133
    %1201 = vmatprep.subr.bf16.mxu0 %v1130
    %1202 = vmatpush1.bf16.msra.mxu0 %v1129
    %1203 = vmatprep.subr.bf16.mxu0 %v1126
    %1204 = vmatpush1.bf16.msra.mxu0 %v1125
    %1205 = vmatprep.subr.bf16.mxu0 0
    %1206 = vmatpush2.bf16.msra.mxu0 0
    %1207 = vmatprep.subr.bf16.mxu0 0
    %1208 = vmatpush2.bf16.msra.mxu0 0
    %1209 = vmatprep.subr.bf16.mxu0 0
    %1210 = vmatpush2.bf16.msra.mxu0 0
    %1211 = vmatprep.subr.bf16.mxu0 0
    %1212 = vmatpush2.bf16.msra.mxu0 0
    %1213 = vmatprep.subr.bf16.mxu0 0
    %1214 = vmatpush2.bf16.msra.mxu0 0
    %1215 = vmatprep.subr.bf16.mxu0 0
    %1216 = vmatpush2.bf16.msra.mxu0 0
    %1217 = vmatprep.subr.bf16.mxu0 0
    %1218 = vmatpush2.bf16.msra.mxu0 0
    %1219 = vmatprep.subr.bf16.mxu0 0
    %1220 = vmatpush2.bf16.msra.mxu0 0
    %1221 = vmatprep.mubr.bf16.mxu0 0
    %1222 = vmatmul.mubr.bf16.gmra.mxu0 %v1004
    %v1223 = vpop.f32.mrf.mxu0
    %v1224 = vadd.f32 %v1012, %v1223
    %v1225 = vpop.f32.mrf.mxu0
    %v1226 = vadd.f32 %v1016, %v1225
    %v1227 = vpop.f32.mrf.mxu0
    %v1228 = vadd.f32 %v1012, %v1227
    %v1229 = vpop.f32.mrf.mxu0
    %v1230 = vadd.f32 %v1016, %v1229
    %1231 = vmatprep.mubr.bf16.mxu0 0
    %1232 = vmatmul.mubr.bf16.gmra.mxu0 %v1005
    %v1233 = vpop.f32.mrf.mxu0
    %v1234 = vadd.f32 %v1012, %v1233
    %v1235 = vpop.f32.mrf.mxu0
    %v1236 = vadd.f32 %v1016, %v1235
    %v1237 = vpop.f32.mrf.mxu0
    %v1238 = vadd.f32 %v1012, %v1237
    %v1239 = vpop.f32.mrf.mxu0
    %v1240 = vadd.f32 %v1016, %v1239
    %1241 = vmatprep.mubr.bf16.mxu0 0
    %1242 = vmatmul.mubr.bf16.gmra.mxu0 %v1006
    %v1243 = vpop.f32.mrf.mxu0
    %v1244 = vadd.f32 %v1012, %v1243
    %v1245 = vpop.f32.mrf.mxu0
    %v1246 = vadd.f32 %v1016, %v1245
    %v1247 = vpop.f32.mrf.mxu0
    %v1248 = vadd.f32 %v1012, %v1247
    %v1249 = vpop.f32.mrf.mxu0
    %v1250 = vadd.f32 %v1016, %v1249
    %1251 = vmatprep.mubr.bf16.mxu0 0
    %1252 = vmatmul.mubr.bf16.gmra.mxu0 %v1007
    %v1253 = vpop.f32.mrf.mxu0
    %v1254 = vadd.f32 %v1012, %v1253
    %v1255 = vpop.f32.mrf.mxu0
    %v1256 = vadd.f32 %v1016, %v1255
    %v1257 = vpop.f32.mrf.mxu0
    %v1258 = vadd.f32 %v1012, %v1257
    %v1259 = vpop.f32.mrf.mxu0
    %v1260 = vadd.f32 %v1016, %v1259
    %1261 = vdwg.mxu0
    %1262 = vmatprep.subr.bf16.mxu0 %v1156
    %1263 = vmatpush1.bf16.msra.mxu0 %v1155
    %1264 = vmatprep.subr.bf16.mxu0 %v1152
    %1265 = vmatpush1.bf16.msra.mxu0 %v1151
    %1266 = vmatprep.subr.bf16.mxu0 %v1148
    %1267 = vmatpush1.bf16.msra.mxu0 %v1147
    %1268 = vmatprep.subr.bf16.mxu0 %v1144
    %1269 = vmatpush1.bf16.msra.mxu0 %v1143
    %1270 = vmatprep.subr.bf16.mxu0 %v1140
    %1271 = vmatpush1.bf16.msra.mxu0 %v1139
    %1272 = vmatprep.subr.bf16.mxu0 %v1136
    %1273 = vmatpush1.bf16.msra.mxu0 %v1135
    %1274 = vmatprep.subr.bf16.mxu0 %v1132
    %1275 = vmatpush1.bf16.msra.mxu0 %v1131
    %1276 = vmatprep.subr.bf16.mxu0 %v1128
    %1277 = vmatpush1.bf16.msra.mxu0 %v1127
    %1278 = vmatprep.subr.bf16.mxu0 0
    %1279 = vmatpush2.bf16.msra.mxu0 0
    %1280 = vmatprep.subr.bf16.mxu0 0
    %1281 = vmatpush2.bf16.msra.mxu0 0
    %1282 = vmatprep.subr.bf16.mxu0 0
    %1283 = vmatpush2.bf16.msra.mxu0 0
    %1284 = vmatprep.subr.bf16.mxu0 0
    %1285 = vmatpush2.bf16.msra.mxu0 0
    %1286 = vmatprep.subr.bf16.mxu0 0
    %1287 = vmatpush2.bf16.msra.mxu0 0
    %1288 = vmatprep.subr.bf16.mxu0 0
    %1289 = vmatpush2.bf16.msra.mxu0 0
    %1290 = vmatprep.subr.bf16.mxu0 0
    %1291 = vmatpush2.bf16.msra.mxu0 0
    %1292 = vmatprep.subr.bf16.mxu0 0
    %1293 = vmatpush2.bf16.msra.mxu0 0
    %1294 = vmatprep.mubr.bf16.mxu0 0
    %1295 = vmatmul.mubr.bf16.gmra.mxu0 %v1004
    %v1296 = vpop.f32.mrf.mxu0
    %v1297 = vadd.f32 %v1020, %v1296
    %v1298 = vpop.f32.mrf.mxu0
    %v1299 = vadd.f32 %v1024, %v1298
    %v1300 = vpop.f32.mrf.mxu0
    %v1301 = vadd.f32 %v1020, %v1300
    %v1302 = vpop.f32.mrf.mxu0
    %v1303 = vadd.f32 %v1024, %v1302
    %1304 = vmatprep.mubr.bf16.mxu0 0
    %1305 = vmatmul.mubr.bf16.gmra.mxu0 %v1005
    %v1306 = vpop.f32.mrf.mxu0
    %v1307 = vadd.f32 %v1020, %v1306
    %v1308 = vpop.f32.mrf.mxu0
    %v1309 = vadd.f32 %v1024, %v1308
    %v1310 = vpop.f32.mrf.mxu0
    %v1311 = vadd.f32 %v1020, %v1310
    %v1312 = vpop.f32.mrf.mxu0
    %v1313 = vadd.f32 %v1024, %v1312
    %1314 = vmatprep.mubr.bf16.mxu0 0
    %1315 = vmatmul.mubr.bf16.gmra.mxu0 %v1006
    %v1316 = vpop.f32.mrf.mxu0
    %v1317 = vadd.f32 %v1020, %v1316
    %v1318 = vpop.f32.mrf.mxu0
    %v1319 = vadd.f32 %v1024, %v1318
    %v1320 = vpop.f32.mrf.mxu0
    %v1321 = vadd.f32 %v1020, %v1320
    %v1322 = vpop.f32.mrf.mxu0
    %v1323 = vadd.f32 %v1024, %v1322
    %1324 = vmatprep.mubr.bf16.mxu0 0
    %1325 = vmatmul.mubr.bf16.gmra.mxu0 %v1007
    %v1326 = vpop.f32.mrf.mxu0
    %v1327 = vadd.f32 %v1020, %v1326
    %v1328 = vpop.f32.mrf.mxu0
    %v1329 = vadd.f32 %v1024, %v1328
    %v1330 = vpop.f32.mrf.mxu0
    %v1331 = vadd.f32 %v1020, %v1330
    %v1332 = vpop.f32.mrf.mxu0
    %v1333 = vadd.f32 %v1024, %v1332
    %1334 = vdwg.mxu0
    %v1335 = vmul.f32 %v1224, 0.5
    %v1336 = vmul.f32 %v1226, 0.5
    %v1337 = vmul.f32 %v1297, 0.5
    %v1338 = vmul.f32 %v1299, 0.5
    %v1339 = vmul.f32 %v1228, 0.5
    %v1340 = vmul.f32 %v1230, 0.5
    %v1341 = vmul.f32 %v1301, 0.5
    %v1342 = vmul.f32 %v1303, 0.5
    %v1343 = vmul.f32 %v1234, 0.5
    %v1344 = vmul.f32 %v1236, 0.5
    %v1345 = vmul.f32 %v1307, 0.5
    %v1346 = vmul.f32 %v1309, 0.5
    %v1347 = vmul.f32 %v1238, 0.5
    %v1348 = vmul.f32 %v1240, 0.5
    %v1349 = vmul.f32 %v1311, 0.5
    %v1350 = vmul.f32 %v1313, 0.5
    %v1351 = vmul.f32 %v1244, 0.5
    %v1352 = vmul.f32 %v1246, 0.5
    %v1353 = vmul.f32 %v1317, 0.5
    %v1354 = vmul.f32 %v1319, 0.5
    %v1355 = vmul.f32 %v1248, 0.5
    %v1356 = vmul.f32 %v1250, 0.5
    %v1357 = vmul.f32 %v1321, 0.5
    %v1358 = vmul.f32 %v1323, 0.5
    %v1359 = vmul.f32 %v1254, 0.5
    %v1360 = vmul.f32 %v1256, 0.5
    %v1361 = vmul.f32 %v1327, 0.5
    %v1362 = vmul.f32 %v1329, 0.5
    %v1363 = vmul.f32 %v1258, 0.5
    %v1364 = vmul.f32 %v1260, 0.5
    %v1365 = vmul.f32 %v1331, 0.5
    %v1366 = vmul.f32 %v1333, 0.5
    %v1367 = vmul.f32 %v1224, 0.70710677
    %v1368 = vmul.f32 %v1226, 0.70710677
    %v1369 = vmul.f32 %v1297, 0.70710677
    %v1370 = vmul.f32 %v1299, 0.70710677
    %v1371 = vmul.f32 %v1228, 0.70710677
    %v1372 = vmul.f32 %v1230, 0.70710677
    %v1373 = vmul.f32 %v1301, 0.70710677
    %v1374 = vmul.f32 %v1303, 0.70710677
    %v1375 = vmul.f32 %v1234, 0.70710677
    %v1376 = vmul.f32 %v1236, 0.70710677
    %v1377 = vmul.f32 %v1307, 0.70710677
    %v1378 = vmul.f32 %v1309, 0.70710677
    %v1379 = vmul.f32 %v1238, 0.70710677
    %v1380 = vmul.f32 %v1240, 0.70710677
    %v1381 = vmul.f32 %v1311, 0.70710677
    %v1382 = vmul.f32 %v1313, 0.70710677
    %v1383 = vmul.f32 %v1244, 0.70710677
    %v1384 = vmul.f32 %v1246, 0.70710677
    %v1385 = vmul.f32 %v1317, 0.70710677
    %v1386 = vmul.f32 %v1319, 0.70710677
    %v1387 = vmul.f32 %v1248, 0.70710677
    %v1388 = vmul.f32 %v1250, 0.70710677
    %v1389 = vmul.f32 %v1321, 0.70710677
    %v1390 = vmul.f32 %v1323, 0.70710677
    %v1391 = vmul.f32 %v1254, 0.70710677
    %v1392 = vmul.f32 %v1256, 0.70710677
    %v1393 = vmul.f32 %v1327, 0.70710677
    %v1394 = vmul.f32 %v1329, 0.70710677
    %v1395 = vmul.f32 %v1258, 0.70710677
    %v1396 = vmul.f32 %v1260, 0.70710677
    %v1397 = vmul.f32 %v1331, 0.70710677
    %v1398 = vmul.f32 %v1333, 0.70710677
    %v1399 = verf.f32.pop %v1367
    %v1400 = verf.f32.pop %v1368
    %v1401 = verf.f32.pop %v1369
    %v1402 = verf.f32.pop %v1370
    %v1403 = verf.f32.pop %v1371
    %v1404 = verf.f32.pop %v1372
    %v1405 = verf.f32.pop %v1373
    %v1406 = verf.f32.pop %v1374
    %v1407 = verf.f32.pop %v1375
    %v1408 = verf.f32.pop %v1376
    %v1409 = verf.f32.pop %v1377
    %v1410 = verf.f32.pop %v1378
    %v1411 = verf.f32.pop %v1379
    %v1412 = verf.f32.pop %v1380
    %v1413 = verf.f32.pop %v1381
    %v1414 = verf.f32.pop %v1382
    %v1415 = verf.f32.pop %v1383
    %v1416 = verf.f32.pop %v1384
    %v1417 = verf.f32.pop %v1385
    %v1418 = verf.f32.pop %v1386
    %v1419 = verf.f32.pop %v1387
    %v1420 = verf.f32.pop %v1388
    %v1421 = verf.f32.pop %v1389
    %v1422 = verf.f32.pop %v1390
    %v1423 = verf.f32.pop %v1391
    %v1424 = verf.f32.pop %v1392
    %v1425 = verf.f32.pop %v1393
    %v1426 = verf.f32.pop %v1394
    %v1427 = verf.f32.pop %v1395
    %v1428 = verf.f32.pop %v1396
    %v1429 = verf.f32.pop %v1397
    %v1430 = verf.f32.pop %v1398
    %v1431 = vadd.f32 %v1399, 1.0
    %v1432 = vadd.f32 %v1400, 1.0
    %v1433 = vadd.f32 %v1401, 1.0
    %v1434 = vadd.f32 %v1402, 1.0
    %v1435 = vadd.f32 %v1403, 1.0
    %v1436 = vadd.f32 %v1404, 1.0
    %v1437 = vadd.f32 %v1405, 1.0
    %v1438 = vadd.f32 %v1406, 1.0
    %v1439 = vadd.f32 %v1407, 1.0
    %v1440 = vadd.f32 %v1408, 1.0
    %v1441 = vadd.f32 %v1409, 1.0
    %v1442 = vadd.f32 %v1410, 1.0
    %v1443 = vadd.f32 %v1411, 1.0
    %v1444 = vadd.f32 %v1412, 1.0
    %v1445 = vadd.f32 %v1413, 1.0
    %v1446 = vadd.f32 %v1414, 1.0
    %v1447 = vadd.f32 %v1415, 1.0
    %v1448 = vadd.f32 %v1416, 1.0
    %v1449 = vadd.f32 %v1417, 1.0
    %v1450 = vadd.f32 %v1418, 1.0
    %v1451 = vadd.f32 %v1419, 1.0
    %v1452 = vadd.f32 %v1420, 1.0
    %v1453 = vadd.f32 %v1421, 1.0
    %v1454 = vadd.f32 %v1422, 1.0
    %v1455 = vadd.f32 %v1423, 1.0
    %v1456 = vadd.f32 %v1424, 1.0
    %v1457 = vadd.f32 %v1425, 1.0
    %v1458 = vadd.f32 %v1426, 1.0
    %v1459 = vadd.f32 %v1427, 1.0
    %v1460 = vadd.f32 %v1428, 1.0
    %v1461 = vadd.f32 %v1429, 1.0
    %v1462 = vadd.f32 %v1430, 1.0
    %v1463 = vmul.f32 %v1335, %v1431
    %v1464 = vmul.f32 %v1336, %v1432
    %v1465 = vmul.f32 %v1337, %v1433
    %v1466 = vmul.f32 %v1338, %v1434
    %v1467 = vmul.f32 %v1339, %v1435
    %v1468 = vmul.f32 %v1340, %v1436
    %v1469 = vmul.f32 %v1341, %v1437
    %v1470 = vmul.f32 %v1342, %v1438
    %v1471 = vmul.f32 %v1343, %v1439
    %v1472 = vmul.f32 %v1344, %v1440
    %v1473 = vmul.f32 %v1345, %v1441
    %v1474 = vmul.f32 %v1346, %v1442
    %v1475 = vmul.f32 %v1347, %v1443
    %v1476 = vmul.f32 %v1348, %v1444
    %v1477 = vmul.f32 %v1349, %v1445
    %v1478 = vmul.f32 %v1350, %v1446
    %v1479 = vmul.f32 %v1351, %v1447
    %v1480 = vmul.f32 %v1352, %v1448
    %v1481 = vmul.f32 %v1353, %v1449
    %v1482 = vmul.f32 %v1354, %v1450
    %v1483 = vmul.f32 %v1355, %v1451
    %v1484 = vmul.f32 %v1356, %v1452
    %v1485 = vmul.f32 %v1357, %v1453
    %v1486 = vmul.f32 %v1358, %v1454
    %v1487 = vmul.f32 %v1359, %v1455
    %v1488 = vmul.f32 %v1360, %v1456
    %v1489 = vmul.f32 %v1361, %v1457
    %v1490 = vmul.f32 %v1362, %v1458
    %v1491 = vmul.f32 %v1363, %v1459
    %v1492 = vmul.f32 %v1364, %v1460
    %v1493 = vmul.f32 %v1365, %v1461
    %v1494 = vmul.f32 %v1366, %v1462
    %v1495 = vld [vmem:[#allocation11] sm:$0xf]
    %v1496 = vld [vmem:[#allocation11 + $0x4] sm:$0xf]
    %v1497 = vld [vmem:[#allocation11 + $0x8] sm:$0xf]
    %v1498 = vld [vmem:[#allocation11 + $0xc] sm:$0xf]
    %v1499 = vld [vmem:[#allocation11 + $0x10] sm:$0xf]
    %v1500 = vld [vmem:[#allocation11 + $0x14] sm:$0xf]
    %v1501 = vld [vmem:[#allocation11 + $0x18] sm:$0xf]
    %v1502 = vld [vmem:[#allocation11 + $0x1c] sm:$0xf]
    %v1503 = vld [vmem:[#allocation11 + $0x20] sm:$0xf]
    %v1504 = vld [vmem:[#allocation11 + $0x24] sm:$0xf]
    %v1505 = vld [vmem:[#allocation11 + $0x28] sm:$0xf]
    %v1506 = vld [vmem:[#allocation11 + $0x2c] sm:$0xf]
    %v1507 = vld [vmem:[#allocation11 + $0x30] sm:$0xf]
    %v1508 = vld [vmem:[#allocation11 + $0x34] sm:$0xf]
    %v1509 = vld [vmem:[#allocation11 + $0x38] sm:$0xf]
    %v1510 = vld [vmem:[#allocation11 + $0x3c] sm:$0xf]
    %v1511 = vld [vmem:[#allocation11 + $0x40] sm:$0xf]
    %v1512 = vld [vmem:[#allocation11 + $0x44] sm:$0xf]
    %v1513 = vld [vmem:[#allocation11 + $0x48] sm:$0xf]
    %v1514 = vld [vmem:[#allocation11 + $0x4c] sm:$0xf]
    %v1515 = vld [vmem:[#allocation11 + $0x50] sm:$0xf]
    %v1516 = vld [vmem:[#allocation11 + $0x54] sm:$0xf]
    %v1517 = vld [vmem:[#allocation11 + $0x58] sm:$0xf]
    %v1518 = vld [vmem:[#allocation11 + $0x5c] sm:$0xf]
    %v1519 = vld [vmem:[#allocation11 + $0x60] sm:$0xf]
    %v1520 = vld [vmem:[#allocation11 + $0x64] sm:$0xf]
    %v1521 = vld [vmem:[#allocation11 + $0x68] sm:$0xf]
    %v1522 = vld [vmem:[#allocation11 + $0x6c] sm:$0xf]
    %v1523 = vld [vmem:[#allocation11 + $0x70] sm:$0xf]
    %v1524 = vld [vmem:[#allocation11 + $0x74] sm:$0xf]
    %v1525 = vld [vmem:[#allocation11 + $0x78] sm:$0xf]
    %v1526 = vld [vmem:[#allocation11 + $0x7c] sm:$0xf]
    %v1527 = vld [vmem:[#allocation11 + $0x80] sm:$0xf]
    %v1528 = vld [vmem:[#allocation11 + $0x84] sm:$0xf]
    %v1529 = vld [vmem:[#allocation11 + $0x88] sm:$0xf]
    %v1530 = vld [vmem:[#allocation11 + $0x8c] sm:$0xf]
    %v1531 = vld [vmem:[#allocation11 + $0x90] sm:$0xf]
    %v1532 = vld [vmem:[#allocation11 + $0x94] sm:$0xf]
    %v1533 = vld [vmem:[#allocation11 + $0x98] sm:$0xf]
    %v1534 = vld [vmem:[#allocation11 + $0x9c] sm:$0xf]
    %v1535 = vld [vmem:[#allocation11 + $0xa0] sm:$0xf]
    %v1536 = vld [vmem:[#allocation11 + $0xa4] sm:$0xf]
    %v1537 = vld [vmem:[#allocation11 + $0xa8] sm:$0xf]
    %v1538 = vld [vmem:[#allocation11 + $0xac] sm:$0xf]
    %v1539 = vld [vmem:[#allocation11 + $0xb0] sm:$0xf]
    %v1540 = vld [vmem:[#allocation11 + $0xb4] sm:$0xf]
    %v1541 = vld [vmem:[#allocation11 + $0xb8] sm:$0xf]
    %v1542 = vld [vmem:[#allocation11 + $0xbc] sm:$0xf]
    %v1543 = vld [vmem:[#allocation11 + $0xc0] sm:$0xf]
    %v1544 = vld [vmem:[#allocation11 + $0xc4] sm:$0xf]
    %v1545 = vld [vmem:[#allocation11 + $0xc8] sm:$0xf]
    %v1546 = vld [vmem:[#allocation11 + $0xcc] sm:$0xf]
    %v1547 = vld [vmem:[#allocation11 + $0xd0] sm:$0xf]
    %v1548 = vld [vmem:[#allocation11 + $0xd4] sm:$0xf]
    %v1549 = vld [vmem:[#allocation11 + $0xd8] sm:$0xf]
    %v1550 = vld [vmem:[#allocation11 + $0xdc] sm:$0xf]
    %v1551 = vld [vmem:[#allocation11 + $0xe0] sm:$0xf]
    %v1552 = vld [vmem:[#allocation11 + $0xe4] sm:$0xf]
    %v1553 = vld [vmem:[#allocation11 + $0xe8] sm:$0xf]
    %v1554 = vld [vmem:[#allocation11 + $0xec] sm:$0xf]
    %v1555 = vld [vmem:[#allocation11 + $0xf0] sm:$0xf]
    %v1556 = vld [vmem:[#allocation11 + $0xf4] sm:$0xf]
    %v1557 = vld [vmem:[#allocation11 + $0xf8] sm:$0xf]
    %v1558 = vld [vmem:[#allocation11 + $0xfc] sm:$0xf]
    %v1559 = vpack.c.bf16 %v1467, %v1463
    %v1560 = vpack.c.bf16 %v1468, %v1464
    %v1561 = vpack.c.bf16 %v1469, %v1465
    %v1562 = vpack.c.bf16 %v1470, %v1466
    %v1563 = vpack.c.bf16 %v1475, %v1471
    %v1564 = vpack.c.bf16 %v1476, %v1472
    %v1565 = vpack.c.bf16 %v1477, %v1473
    %v1566 = vpack.c.bf16 %v1478, %v1474
    %v1567 = vpack.c.bf16 %v1483, %v1479
    %v1568 = vpack.c.bf16 %v1484, %v1480
    %v1569 = vpack.c.bf16 %v1485, %v1481
    %v1570 = vpack.c.bf16 %v1486, %v1482
    %v1571 = vpack.c.bf16 %v1491, %v1487
    %v1572 = vpack.c.bf16 %v1492, %v1488
    %v1573 = vpack.c.bf16 %v1493, %v1489
    %v1574 = vpack.c.bf16 %v1494, %v1490
    %v1575 = vlaneseq
    %v1576 = vshrl.u32 %v1575, 7
    %v1577 = vsub.s32 4, %v1576
    %v1578 = vrot.slane %v143, %v1577
    %v1643 = vunpack.c.l.b16 %v1495
    %v1644 = vunpack.c.l.b16 %v1496
    %v1645 = vunpack.c.l.b16 %v1497
    %v1646 = vunpack.c.l.b16 %v1498
    %v1647 = vunpack.c.l.b16 %v1499
    %v1648 = vunpack.c.l.b16 %v1500
    %v1649 = vunpack.c.l.b16 %v1501
    %v1650 = vunpack.c.l.b16 %v1502
    %v1651 = vunpack.c.l.b16 %v1503
    %v1652 = vunpack.c.l.b16 %v1504
    %v1653 = vunpack.c.l.b16 %v1505
    %v1654 = vunpack.c.l.b16 %v1506
    %v1655 = vunpack.c.l.b16 %v1507
    %v1656 = vunpack.c.l.b16 %v1508
    %v1657 = vunpack.c.l.b16 %v1509
    %v1658 = vunpack.c.l.b16 %v1510
    %v1659 = vunpack.c.l.b16 %v1511
    %v1660 = vunpack.c.l.b16 %v1512
    %v1661 = vunpack.c.l.b16 %v1513
    %v1662 = vunpack.c.l.b16 %v1514
    %v1663 = vunpack.c.l.b16 %v1515
    %v1664 = vunpack.c.l.b16 %v1516
    %v1665 = vunpack.c.l.b16 %v1517
    %v1666 = vunpack.c.l.b16 %v1518
    %v1667 = vunpack.c.l.b16 %v1519
    %v1668 = vunpack.c.l.b16 %v1520
    %v1669 = vunpack.c.l.b16 %v1521
    %v1670 = vunpack.c.l.b16 %v1522
    %v1671 = vunpack.c.l.b16 %v1523
    %v1672 = vunpack.c.l.b16 %v1524
    %v1673 = vunpack.c.l.b16 %v1525
    %v1674 = vunpack.c.l.b16 %v1526
    %v1675 = vunpack.c.l.b16 %v1527
    %v1676 = vunpack.c.l.b16 %v1528
    %v1677 = vunpack.c.l.b16 %v1529
    %v1678 = vunpack.c.l.b16 %v1530
    %v1679 = vunpack.c.l.b16 %v1531
    %v1680 = vunpack.c.l.b16 %v1532
    %v1681 = vunpack.c.l.b16 %v1533
    %v1682 = vunpack.c.l.b16 %v1534
    %v1683 = vunpack.c.l.b16 %v1535
    %v1684 = vunpack.c.l.b16 %v1536
    %v1685 = vunpack.c.l.b16 %v1537
    %v1686 = vunpack.c.l.b16 %v1538
    %v1687 = vunpack.c.l.b16 %v1539
    %v1688 = vunpack.c.l.b16 %v1540
    %v1689 = vunpack.c.l.b16 %v1541
    %v1690 = vunpack.c.l.b16 %v1542
    %v1691 = vunpack.c.l.b16 %v1543
    %v1692 = vunpack.c.l.b16 %v1544
    %v1693 = vunpack.c.l.b16 %v1545
    %v1694 = vunpack.c.l.b16 %v1546
    %v1695 = vunpack.c.l.b16 %v1547
    %v1696 = vunpack.c.l.b16 %v1548
    %v1697 = vunpack.c.l.b16 %v1549
    %v1698 = vunpack.c.l.b16 %v1550
    %v1699 = vunpack.c.l.b16 %v1551
    %v1700 = vunpack.c.l.b16 %v1552
    %v1701 = vunpack.c.l.b16 %v1553
    %v1702 = vunpack.c.l.b16 %v1554
    %v1703 = vunpack.c.l.b16 %v1555
    %v1704 = vunpack.c.l.b16 %v1556
    %v1705 = vunpack.c.l.b16 %v1557
    %v1706 = vunpack.c.l.b16 %v1558
    %v1707 = vpack.c.b16 %v1644, %v1643
    %v1708 = vpack.c.b16 %v1646, %v1645
    %v1709 = vpack.c.b16 %v1648, %v1647
    %v1710 = vpack.c.b16 %v1650, %v1649
    %v1711 = vpack.c.b16 %v1652, %v1651
    %v1712 = vpack.c.b16 %v1654, %v1653
    %v1713 = vpack.c.b16 %v1656, %v1655
    %v1714 = vpack.c.b16 %v1658, %v1657
    %v1715 = vpack.c.b16 %v1660, %v1659
    %v1716 = vpack.c.b16 %v1662, %v1661
    %v1717 = vpack.c.b16 %v1664, %v1663
    %v1718 = vpack.c.b16 %v1666, %v1665
    %v1719 = vpack.c.b16 %v1668, %v1667
    %v1720 = vpack.c.b16 %v1670, %v1669
    %v1721 = vpack.c.b16 %v1672, %v1671
    %v1722 = vpack.c.b16 %v1674, %v1673
    %v1723 = vpack.c.b16 %v1676, %v1675
    %v1724 = vpack.c.b16 %v1678, %v1677
    %v1725 = vpack.c.b16 %v1680, %v1679
    %v1726 = vpack.c.b16 %v1682, %v1681
    %v1727 = vpack.c.b16 %v1684, %v1683
    %v1728 = vpack.c.b16 %v1686, %v1685
    %v1729 = vpack.c.b16 %v1688, %v1687
    %v1730 = vpack.c.b16 %v1690, %v1689
    %v1731 = vpack.c.b16 %v1692, %v1691
    %v1732 = vpack.c.b16 %v1694, %v1693
    %v1733 = vpack.c.b16 %v1696, %v1695
    %v1734 = vpack.c.b16 %v1698, %v1697
    %v1735 = vpack.c.b16 %v1700, %v1699
    %v1736 = vpack.c.b16 %v1702, %v1701
    %v1737 = vpack.c.b16 %v1704, %v1703
    %v1738 = vpack.c.b16 %v1706, %v1705
    %1771 = vmatprep.subr.bf16.mxu0 0
    %1772 = vmatpush1.bf16.msra.mxu0 %v1714
    %1773 = vmatprep.subr.bf16.mxu0 0
    %1774 = vmatpush1.bf16.msra.mxu0 %v1713
    %1775 = vmatprep.subr.bf16.mxu0 0
    %1776 = vmatpush1.bf16.msra.mxu0 %v1712
    %1777 = vmatprep.subr.bf16.mxu0 0
    %1778 = vmatpush1.bf16.msra.mxu0 %v1711
    %1779 = vmatprep.subr.bf16.mxu0 0
    %1780 = vmatpush1.bf16.msra.mxu0 %v1710
    %1781 = vmatprep.subr.bf16.mxu0 0
    %1782 = vmatpush1.bf16.msra.mxu0 %v1709
    %1783 = vmatprep.subr.bf16.mxu0 0
    %1784 = vmatpush1.bf16.msra.mxu0 %v1708
    %1785 = vmatprep.subr.bf16.mxu0 0
    %1786 = vmatpush1.bf16.msra.mxu0 %v1707
    %1787 = vmatprep.subr.bf16.mxu0 0
    %1788 = vmatpush2.bf16.msra.mxu0 %v1722
    %1789 = vmatprep.subr.bf16.mxu0 0
    %1790 = vmatpush2.bf16.msra.mxu0 %v1721
    %1791 = vmatprep.subr.bf16.mxu0 0
    %1792 = vmatpush2.bf16.msra.mxu0 %v1720
    %1793 = vmatprep.subr.bf16.mxu0 0
    %1794 = vmatpush2.bf16.msra.mxu0 %v1719
    %1795 = vmatprep.subr.bf16.mxu0 0
    %1796 = vmatpush2.bf16.msra.mxu0 %v1718
    %1797 = vmatprep.subr.bf16.mxu0 0
    %1798 = vmatpush2.bf16.msra.mxu0 %v1717
    %1799 = vmatprep.subr.bf16.mxu0 0
    %1800 = vmatpush2.bf16.msra.mxu0 %v1716
    %1801 = vmatprep.subr.bf16.mxu0 0
    %1802 = vmatpush2.bf16.msra.mxu0 %v1715
    %1803 = vmatprep.mubr.bf16.mxu0 %v1560
    %1804 = vmatmul.mubr.bf16.gmra.mxu0 %v1559
    %v1805 = vpop.f32.mrf.mxu0
    %v1806 = vadd.f32 %v1578, %v1805
    %v1807 = vpop.f32.mrf.mxu0
    %v1808 = vpop.f32.mrf.mxu0
    %v1809 = vadd.f32 %v1578, %v1808
    %v1810 = vpop.f32.mrf.mxu0
    %1811 = vmatprep.mubr.bf16.mxu0 %v1564
    %1812 = vmatmul.mubr.bf16.gmra.mxu0 %v1563
    %v1813 = vpop.f32.mrf.mxu0
    %v1814 = vadd.f32 %v1578, %v1813
    %v1815 = vpop.f32.mrf.mxu0
    %v1816 = vpop.f32.mrf.mxu0
    %v1817 = vadd.f32 %v1578, %v1816
    %v1818 = vpop.f32.mrf.mxu0
    %1819 = vmatprep.mubr.bf16.mxu0 %v1568
    %1820 = vmatmul.mubr.bf16.gmra.mxu0 %v1567
    %v1821 = vpop.f32.mrf.mxu0
    %v1822 = vadd.f32 %v1578, %v1821
    %v1823 = vpop.f32.mrf.mxu0
    %v1824 = vpop.f32.mrf.mxu0
    %v1825 = vadd.f32 %v1578, %v1824
    %v1826 = vpop.f32.mrf.mxu0
    %1827 = vmatprep.mubr.bf16.mxu0 %v1572
    %1828 = vmatmul.mubr.bf16.gmra.mxu0 %v1571
    %v1829 = vpop.f32.mrf.mxu0
    %v1830 = vadd.f32 %v1578, %v1829
    %v1831 = vpop.f32.mrf.mxu0
    %v1832 = vpop.f32.mrf.mxu0
    %v1833 = vadd.f32 %v1578, %v1832
    %v1834 = vpop.f32.mrf.mxu0
    %1835 = vdwg.mxu0
    %1836 = vmatprep.subr.bf16.mxu0 0
    %1837 = vmatpush1.bf16.msra.mxu0 %v1730
    %1838 = vmatprep.subr.bf16.mxu0 0
    %1839 = vmatpush1.bf16.msra.mxu0 %v1729
    %1840 = vmatprep.subr.bf16.mxu0 0
    %1841 = vmatpush1.bf16.msra.mxu0 %v1728
    %1842 = vmatprep.subr.bf16.mxu0 0
    %1843 = vmatpush1.bf16.msra.mxu0 %v1727
    %1844 = vmatprep.subr.bf16.mxu0 0
    %1845 = vmatpush1.bf16.msra.mxu0 %v1726
    %1846 = vmatprep.subr.bf16.mxu0 0
    %1847 = vmatpush1.bf16.msra.mxu0 %v1725
    %1848 = vmatprep.subr.bf16.mxu0 0
    %1849 = vmatpush1.bf16.msra.mxu0 %v1724
    %1850 = vmatprep.subr.bf16.mxu0 0
    %1851 = vmatpush1.bf16.msra.mxu0 %v1723
    %1852 = vmatprep.subr.bf16.mxu0 0
    %1853 = vmatpush2.bf16.msra.mxu0 %v1738
    %1854 = vmatprep.subr.bf16.mxu0 0
    %1855 = vmatpush2.bf16.msra.mxu0 %v1737
    %1856 = vmatprep.subr.bf16.mxu0 0
    %1857 = vmatpush2.bf16.msra.mxu0 %v1736
    %1858 = vmatprep.subr.bf16.mxu0 0
    %1859 = vmatpush2.bf16.msra.mxu0 %v1735
    %1860 = vmatprep.subr.bf16.mxu0 0
    %1861 = vmatpush2.bf16.msra.mxu0 %v1734
    %1862 = vmatprep.subr.bf16.mxu0 0
    %1863 = vmatpush2.bf16.msra.mxu0 %v1733
    %1864 = vmatprep.subr.bf16.mxu0 0
    %1865 = vmatpush2.bf16.msra.mxu0 %v1732
    %1866 = vmatprep.subr.bf16.mxu0 0
    %1867 = vmatpush2.bf16.msra.mxu0 %v1731
    %1868 = vmatprep.mubr.bf16.mxu0 %v1562
    %1869 = vmatmul.mubr.bf16.gmra.mxu0 %v1561
    %v1870 = vpop.f32.mrf.mxu0
    %v1871 = vadd.f32 %v1806, %v1870
    %v1872 = vpop.f32.mrf.mxu0
    %v1873 = vpop.f32.mrf.mxu0
    %v1874 = vadd.f32 %v1809, %v1873
    %v1875 = vpop.f32.mrf.mxu0
    %1876 = vmatprep.mubr.bf16.mxu0 %v1566
    %1877 = vmatmul.mubr.bf16.gmra.mxu0 %v1565
    %v1878 = vpop.f32.mrf.mxu0
    %v1879 = vadd.f32 %v1814, %v1878
    %v1880 = vpop.f32.mrf.mxu0
    %v1881 = vpop.f32.mrf.mxu0
    %v1882 = vadd.f32 %v1817, %v1881
    %v1883 = vpop.f32.mrf.mxu0
    %1884 = vmatprep.mubr.bf16.mxu0 %v1570
    %1885 = vmatmul.mubr.bf16.gmra.mxu0 %v1569
    %v1886 = vpop.f32.mrf.mxu0
    %v1887 = vadd.f32 %v1822, %v1886
    %v1888 = vpop.f32.mrf.mxu0
    %v1889 = vpop.f32.mrf.mxu0
    %v1890 = vadd.f32 %v1825, %v1889
    %v1891 = vpop.f32.mrf.mxu0
    %1892 = vmatprep.mubr.bf16.mxu0 %v1574
    %1893 = vmatmul.mubr.bf16.gmra.mxu0 %v1573
    %v1894 = vpop.f32.mrf.mxu0
    %v1895 = vadd.f32 %v1830, %v1894
    %v1896 = vpop.f32.mrf.mxu0
    %v1897 = vpop.f32.mrf.mxu0
    %v1898 = vadd.f32 %v1833, %v1897
    %v1899 = vpop.f32.mrf.mxu0
    %1900 = vdwg.mxu0
    %v1901 = vadd.f32 %v860, %v1871
    %v1902 = vadd.f32 %v861, %v1874
    %v1903 = vadd.f32 %v862, %v1879
    %v1904 = vadd.f32 %v863, %v1882
    %v1905 = vadd.f32 %v864, %v1887
    %v1906 = vadd.f32 %v865, %v1890
    %v1907 = vadd.f32 %v866, %v1895
    %v1908 = vadd.f32 %v867, %v1898
    %1909 = vst [vmem:[#allocation13] sm:$0xff] %v1901
    %1910 = vst [vmem:[#allocation13 + $0x8] sm:$0xff] %v1902
    %1911 = vst [vmem:[#allocation13 + $0x10] sm:$0xff] %v1903
    %1912 = vst [vmem:[#allocation13 + $0x18] sm:$0xff] %v1904
    %1913 = vst [vmem:[#allocation13 + $0x20] sm:$0xff] %v1905
    %1914 = vst [vmem:[#allocation13 + $0x28] sm:$0xff] %v1906
    %1915 = vst [vmem:[#allocation13 + $0x30] sm:$0xff] %v1907
    %1916 = vst [vmem:[#allocation13 + $0x38] sm:$0xff] %v1908
    // Predicated region
    $region66: #{tpu_custom_call.1} parent=1 // pred_check
      _
    $region67: #{tpu_custom_call.1} parent=1 // pred_check_branch
      %1918 = sbr.rel (0) target = $region69
    $region68: #{tpu_custom_call.1} parent=1 // pred_region
      %s1920 = ssub.s32 1024, 1024
      %1921 = vsyncadd [#allocation4], %s1920
      %s1922 = sshll.u32 [#allocation13], 4
      %s1923 = int_to_ptr.vmem [resolvable:$true] %s1922
      %1928 = dma.vmem_to_hbm [thread:$0]  %s1923, 1024, %s10, [#allocation4], 128, 128, 8
    $region69: #{tpu_custom_call.1} parent=1 // pred_fallthru
      _
    // Predicated region
    $region70: #{tpu_custom_call.1} parent=1 // pred_check
      _
    $region71: #{tpu_custom_call.1} parent=1 // pred_check_branch
      %1930 = sbr.rel (0) target = $region73
    $region72: #{tpu_custom_call.1} parent=1 // pred_region
      %1931 = dma.done [#allocation4], 1024
    $region73: #{tpu_custom_call.1} parent=1 // pred_fallthru
      _
    %1932 = vsyncpa [#allocation3], 1
    %1933 = vsyncpa [#allocation6], 1
    %1934 = vsyncpa [#allocation9], 1
    %1935 = vsyncpa [#allocation12], 1
    %1936 = vsyncpa [#allocation4], 1

// kernel: tpu_custom_call.1
$region0: #{tpu_custom_call.1}
  #allocation0 [shape = 'u32[]', space=smem, size = 0x4, offset = 0x4, fixed_abs, tag = 'smem constant byte address 0x4 - core index']
  #allocation1 [shape = 'u32[144,128]{1,0:T(1,128)}', space=vmem, size = 0x12000, scoped, tag = 'internal scratch']
  %s0 = inlined_call_operand.hbm [shape: f32[4,16,128], index: 0, kind: input, shape index: {}]
  %s1 = inlined_call_operand.hbm [shape: f32[4,16,128], index: 1, kind: input, shape index: {}]
  %s2 = inlined_call_operand.vmem [shape: f32[5,128], index: 2, kind: input, shape index: {}]
  %s3 = inlined_call_operand.vmem [shape: f32[1,512], index: 3, kind: input, shape index: {}]
  %s4 = inlined_call_operand.vmem [shape: f32[16,3], index: 4, kind: input, shape index: {}]
  %s5 = inlined_call_operand.vmem [shape: bf16[16,16], index: 5, kind: input, shape index: {}]
  %s6 = inlined_call_operand.hbm [shape: bf16[128,128], index: 6, kind: input, shape index: {}]
  %s7 = inlined_call_operand.hbm [shape: bf16[128,128], index: 7, kind: input, shape index: {}]
  %s8 = inlined_call_operand.hbm [shape: bf16[128,512], index: 8, kind: input, shape index: {}]
  %s9 = inlined_call_operand.hbm [shape: bf16[512,128], index: 9, kind: input, shape index: {}]
  %s10 = inlined_call_operand.hbm [shape: f32[4,16,128], index: 10, kind: output, shape index: {}]
  %s11 = sld [smem:[#allocation0]]
  $region74: #{tpu_custom_call.1} parent=0
    _
  %s13 = ssub.s32 1, %s11
  %s14 = scalar_select 0, %s13, %s11
  $region1: #{tpu_custom_call.1} parent=0
    #allocation2 [shape = 'u8[32768]{0}', space=vmem, size = 0x8000, scoped, tag = 'input window, operand 0, single buffered']
    #allocation3 [shape = 's32[1]{0}', space=sflag, size = 0x4, scoped, tag = 'scoped memory for tpu_custom_call.1']
    #allocation4 [shape = 's32[1]{0}', space=sflag, size = 0x4, scoped, tag = 'scoped memory for tpu_custom_call.1']
    #allocation5 [shape = 'u8[32768]{0}', space=vmem, size = 0x8000, scoped, tag = 'input window, operand 1, single buffered']
    #allocation6 [shape = 's32[1]{0}', space=sflag, size = 0x4, scoped, tag = 'scoped memory for tpu_custom_call.1']
    #allocation7 [shape = 'u8[32768]{0}', space=vmem, size = 0x8000, scoped, tag = 'input window, operand 6, single buffered']
    #allocation8 [shape = 'u8[32768]{0}', space=vmem, size = 0x8000, scoped, tag = 'input window, operand 7, single buffered']
    #allocation9 [shape = 's32[1]{0}', space=sflag, size = 0x4, scoped, tag = 'scoped memory for tpu_custom_call.1']
    #allocation10 [shape = 'u8[131072]{0}', space=vmem, size = 0x20000, scoped, tag = 'input window, operand 8, single buffered']
    #allocation11 [shape = 'u8[131072]{0}', space=vmem, size = 0x20000, scoped, tag = 'input window, operand 9, single buffered']
    #allocation12 [shape = 's32[1]{0}', space=sflag, size = 0x4, scoped, tag = 'scoped memory for tpu_custom_call.1']
    #allocation13 [shape = 'u8[32768]{0}', space=vmem, size = 0x8000, scoped, tag = 'output window, operand 0, single buffered']
    %15 = vsyncpa [#allocation3], 0
    %16 = vsyncpa [#allocation6], 0
    %17 = vsyncpa [#allocation9], 0
    %18 = vsyncpa [#allocation12], 0
    %19 = vsyncpa [#allocation4], 0
    // Predicated region
    $region2: #{tpu_custom_call.1} parent=1 // pred_check
      _
    $region3: #{tpu_custom_call.1} parent=1 // pred_check_branch
      %21 = sbr.rel (0) target = $region5
    $region4: #{tpu_custom_call.1} parent=1 // pred_region
      %s23 = ssub.s32 1024, 1024
      %24 = vsyncadd [#allocation3], %s23
      %s25 = sshll.u32 [#allocation2], 4
      %s26 = int_to_ptr.vmem [resolvable:$true] %s25
      %31 = dma.hbm_to_vmem [thread:$0]  %s0, 1024, %s26, [#allocation3], 128, 128, 8
    $region5: #{tpu_custom_call.1} parent=1 // pred_fallthru
      _
    // Predicated region
    $region6: #{tpu_custom_call.1} parent=1 // pred_check
      _
    $region7: #{tpu_custom_call.1} parent=1 // pred_check_branch
      %33 = sbr.rel (0) target = $region9
    $region8: #{tpu_custom_call.1} parent=1 // pred_region
      %s35 = ssub.s32 1024, 1024
      %36 = vsyncadd [#allocation6], %s35
      %s37 = sshll.u32 [#allocation5], 4
      %s38 = int_to_ptr.vmem [resolvable:$true] %s37
      %43 = dma.hbm_to_vmem [thread:$0]  %s1, 1024, %s38, [#allocation6], 128, 128, 8
    $region9: #{tpu_custom_call.1} parent=1 // pred_fallthru
      _
    // Predicated region
    $region10: #{tpu_custom_call.1} parent=1 // pred_check
      _
    $region11: #{tpu_custom_call.1} parent=1 // pred_check_branch
      %45 = sbr.rel (0) target = $region13
    $region12: #{tpu_custom_call.1} parent=1 // pred_region
      _
    $region13: #{tpu_custom_call.1} parent=1 // pred_fallthru
      _
    // Predicated region
    $region14: #{tpu_custom_call.1} parent=1 // pred_check
      _
    $region15: #{tpu_custom_call.1} parent=1 // pred_check_branch
      %47 = sbr.rel (0) target = $region17
    $region16: #{tpu_custom_call.1} parent=1 // pred_region
      _
    $region17: #{tpu_custom_call.1} parent=1 // pred_fallthru
      _
    // Predicated region
    $region18: #{tpu_custom_call.1} parent=1 // pred_check
      _
    $region19: #{tpu_custom_call.1} parent=1 // pred_check_branch
      %49 = sbr.rel (0) target = $region21
    $region20: #{tpu_custom_call.1} parent=1 // pred_region
      _
    $region21: #{tpu_custom_call.1} parent=1 // pred_fallthru
      _
    // Predicated region
    $region22: #{tpu_custom_call.1} parent=1 // pred_check
      _
    $region23: #{tpu_custom_call.1} parent=1 // pred_check_branch
      %51 = sbr.rel (0) target = $region25
    $region24: #{tpu_custom_call.1} parent=1 // pred_region
      _
    $region25: #{tpu_custom_call.1} parent=1 // pred_fallthru
      _
    // Predicated region
    $region26: #{tpu_custom_call.1} parent=1 // pred_check
      _
    $region27: #{tpu_custom_call.1} parent=1 // pred_check_branch
      %53 = sbr.rel (0) target = $region29
    $region28: #{tpu_custom_call.1} parent=1 // pred_region
      %s55 = ssub.s32 1024, 1024
      %56 = vsyncadd [#allocation6], %s55
      %s57 = sshll.u32 [#allocation7], 4
      %s58 = int_to_ptr.vmem [resolvable:$true] %s57
      %63 = dma.hbm_to_vmem [thread:$0]  %s6, 1024, %s58, [#allocation6], 64, 64, 4
    $region29: #{tpu_custom_call.1} parent=1 // pred_fallthru
      _
    // Predicated region
    $region30: #{tpu_custom_call.1} parent=1 // pred_check
      _
    $region31: #{tpu_custom_call.1} parent=1 // pred_check_branch
      %65 = sbr.rel (0) target = $region33
    $region32: #{tpu_custom_call.1} parent=1 // pred_region
      %s67 = ssub.s32 1024, 1024
      %68 = vsyncadd [#allocation9], %s67
      %s69 = sshll.u32 [#allocation8], 4
      %s70 = int_to_ptr.vmem [resolvable:$true] %s69
      %75 = dma.hbm_to_vmem [thread:$0]  %s7, 1024, %s70, [#allocation9], 64, 64, 4
    $region33: #{tpu_custom_call.1} parent=1 // pred_fallthru
      _
    // Predicated region
    $region34: #{tpu_custom_call.1} parent=1 // pred_check
      _
    $region35: #{tpu_custom_call.1} parent=1 // pred_check_branch
      %77 = sbr.rel (0) target = $region37
    $region36: #{tpu_custom_call.1} parent=1 // pred_region
      %s79 = ssub.s32 4096, 4096
      %80 = vsyncadd [#allocation9], %s79
      %s81 = sshll.u32 [#allocation10], 4
      %s82 = int_to_ptr.vmem [resolvable:$true] %s81
      %87 = dma.hbm_to_vmem [thread:$0]  %s8, 4096, %s82, [#allocation9], 256, 256, 16
    $region37: #{tpu_custom_call.1} parent=1 // pred_fallthru
      _
    // Predicated region
    $region38: #{tpu_custom_call.1} parent=1 // pred_check
      _
    $region39: #{tpu_custom_call.1} parent=1 // pred_check_branch
      %89 = sbr.rel (0) target = $region41
    $region40: #{tpu_custom_call.1} parent=1 // pred_region
      %s91 = ssub.s32 4096, 4096
      %92 = vsyncadd [#allocation12], %s91
      %s93 = sshll.u32 [#allocation11], 4
      %s94 = int_to_ptr.vmem [resolvable:$true] %s93
      %99 = dma.hbm_to_vmem [thread:$0]  %s9, 4096, %s94, [#allocation12], 64, 64, 4
    $region41: #{tpu_custom_call.1} parent=1 // pred_fallthru
      _
    // Predicated region
    $region42: #{tpu_custom_call.1} parent=1 // pred_check
      _
    $region43: #{tpu_custom_call.1} parent=1 // pred_check_branch
      %101 = sbr.rel (0) target = $region45
    $region44: #{tpu_custom_call.1} parent=1 // pred_region
      %102 = dma.done [#allocation3], 1024
    $region45: #{tpu_custom_call.1} parent=1 // pred_fallthru
      _
    // Predicated region
    $region46: #{tpu_custom_call.1} parent=1 // pred_check
      _
    $region47: #{tpu_custom_call.1} parent=1 // pred_check_branch
      %104 = sbr.rel (0) target = $region49
    $region48: #{tpu_custom_call.1} parent=1 // pred_region
      %105 = dma.done [#allocation6], 1024
    $region49: #{tpu_custom_call.1} parent=1 // pred_fallthru
      _
    // Predicated region
    $region50: #{tpu_custom_call.1} parent=1 // pred_check
      _
    $region51: #{tpu_custom_call.1} parent=1 // pred_check_branch
      %107 = sbr.rel (0) target = $region53
    $region52: #{tpu_custom_call.1} parent=1 // pred_region
      %108 = dma.done [#allocation6], 1024
    $region53: #{tpu_custom_call.1} parent=1 // pred_fallthru
      _
    // Predicated region
    $region54: #{tpu_custom_call.1} parent=1 // pred_check
      _
    $region55: #{tpu_custom_call.1} parent=1 // pred_check_branch
      %110 = sbr.rel (0) target = $region57
    $region56: #{tpu_custom_call.1} parent=1 // pred_region
      %111 = dma.done [#allocation9], 1024
    $region57: #{tpu_custom_call.1} parent=1 // pred_fallthru
      _
    // Predicated region
    $region58: #{tpu_custom_call.1} parent=1 // pred_check
      _
    $region59: #{tpu_custom_call.1} parent=1 // pred_check_branch
      %113 = sbr.rel (0) target = $region61
    $region60: #{tpu_custom_call.1} parent=1 // pred_region
      %114 = dma.done [#allocation9], 4096
    $region61: #{tpu_custom_call.1} parent=1 // pred_fallthru
      _
    // Predicated region
    $region62: #{tpu_custom_call.1} parent=1 // pred_check
      _
    $region63: #{tpu_custom_call.1} parent=1 // pred_check_branch
      %116 = sbr.rel (0) target = $region65
    $region64: #{tpu_custom_call.1} parent=1 // pred_region
      %117 = dma.done [#allocation12], 4096
    $region65: #{tpu_custom_call.1} parent=1 // pred_fallthru
      _
    %v119 = vld [vmem:[#allocation2] sm:$0xff]
    %v120 = vld [vmem:[#allocation2 + $0x8] sm:$0xff]
    %v121 = vld [vmem:[#allocation2 + $0x10] sm:$0xff]
    %v122 = vld [vmem:[#allocation2 + $0x18] sm:$0xff]
    %v123 = vld [vmem:[#allocation2 + $0x20] sm:$0xff]
    %v124 = vld [vmem:[#allocation2 + $0x28] sm:$0xff]
    %v125 = vld [vmem:[#allocation2 + $0x30] sm:$0xff]
    %v126 = vld [vmem:[#allocation2 + $0x38] sm:$0xff]
    %v127 = vld [vmem:[#allocation5] sm:$0xff]
    %v128 = vld [vmem:[#allocation5 + $0x8] sm:$0xff]
    %v129 = vld [vmem:[#allocation5 + $0x10] sm:$0xff]
    %v130 = vld [vmem:[#allocation5 + $0x18] sm:$0xff]
    %v131 = vld [vmem:[#allocation5 + $0x20] sm:$0xff]
    %v132 = vld [vmem:[#allocation5 + $0x28] sm:$0xff]
    %v133 = vld [vmem:[#allocation5 + $0x30] sm:$0xff]
    %v134 = vld [vmem:[#allocation5 + $0x38] sm:$0xff]
    %v135 = vadd.f32 %v119, %v127
    %v136 = vadd.f32 %v120, %v128
    %v137 = vadd.f32 %v121, %v129
    %v138 = vadd.f32 %v122, %v130
    %v139 = vadd.f32 %v123, %v131
    %v140 = vadd.f32 %v124, %v132
    %v141 = vadd.f32 %v125, %v133
    %v142 = vadd.f32 %v126, %v134
    %v143 = vld [vmem:[%s2] sm:$0x1f]
    %v144 = vld [vmem:[%s3] sm:$0xf]
    %v145 = vld [vmem:[%s4] sm:$0xff]
    %v146 = vld [vmem:[%s4 + $0x8] sm:$0xff]
    %147 = vadd.xlane.f32.xlu0 %v135
    %v148 = vpop.xlane.xlu0 %147
    %149 = vadd.xlane.f32.xlu0 %v136
    %v150 = vpop.xlane.xlu0 %149
    %151 = vadd.xlane.f32.xlu0 %v137
    %v152 = vpop.xlane.xlu0 %151
    %153 = vadd.xlane.f32.xlu0 %v138
    %v154 = vpop.xlane.xlu0 %153
    %155 = vadd.xlane.f32.xlu0 %v139
    %v156 = vpop.xlane.xlu0 %155
    %157 = vadd.xlane.f32.xlu0 %v140
    %v158 = vpop.xlane.xlu0 %157
    %159 = vadd.xlane.f32.xlu0 %v141
    %v160 = vpop.xlane.xlu0 %159
    %161 = vadd.xlane.f32.xlu0 %v142
    %v162 = vpop.xlane.xlu0 %161
    %v163 = vrcp.pop 128.0
    %v164 = vmul.f32 %v148, %v163
    %v165 = vmul.f32 %v150, %v163
    %v166 = vmul.f32 %v152, %v163
    %v167 = vmul.f32 %v154, %v163
    %v168 = vmul.f32 %v156, %v163
    %v169 = vmul.f32 %v158, %v163
    %v170 = vmul.f32 %v160, %v163
    %v171 = vmul.f32 %v162, %v163
    %v172 = vsub.f32 %v135, %v164
    %v173 = vsub.f32 %v136, %v165
    %v174 = vsub.f32 %v137, %v166
    %v175 = vsub.f32 %v138, %v167
    %v176 = vsub.f32 %v139, %v168
    %v177 = vsub.f32 %v140, %v169
    %v178 = vsub.f32 %v141, %v170
    %v179 = vsub.f32 %v142, %v171
    %v180 = vmul.f32 %v172, %v172
    %v181 = vmul.f32 %v173, %v173
    %v182 = vmul.f32 %v174, %v174
    %v183 = vmul.f32 %v175, %v175
    %v184 = vmul.f32 %v176, %v176
    %v185 = vmul.f32 %v177, %v177
    %v186 = vmul.f32 %v178, %v178
    %v187 = vmul.f32 %v179, %v179
    %188 = vadd.xlane.f32.xlu0 %v180
    %v189 = vpop.xlane.xlu0 %188
    %190 = vadd.xlane.f32.xlu0 %v181
    %v191 = vpop.xlane.xlu0 %190
    %192 = vadd.xlane.f32.xlu0 %v182
    %v193 = vpop.xlane.xlu0 %192
    %194 = vadd.xlane.f32.xlu0 %v183
    %v195 = vpop.xlane.xlu0 %194
    %196 = vadd.xlane.f32.xlu0 %v184
    %v197 = vpop.xlane.xlu0 %196
    %198 = vadd.xlane.f32.xlu0 %v185
    %v199 = vpop.xlane.xlu0 %198
    %200 = vadd.xlane.f32.xlu0 %v186
    %v201 = vpop.xlane.xlu0 %200
    %202 = vadd.xlane.f32.xlu0 %v187
    %v203 = vpop.xlane.xlu0 %202
    %v204 = vmul.f32 %v189, %v163
    %v205 = vmul.f32 %v191, %v163
    %v206 = vmul.f32 %v193, %v163
    %v207 = vmul.f32 %v195, %v163
    %v208 = vmul.f32 %v197, %v163
    %v209 = vmul.f32 %v199, %v163
    %v210 = vmul.f32 %v201, %v163
    %v211 = vmul.f32 %v203, %v163
    %v212 = vadd.f32 %v204, 1e-05
    %v213 = vadd.f32 %v205, 1e-05
    %v214 = vadd.f32 %v206, 1e-05
    %v215 = vadd.f32 %v207, 1e-05
    %v216 = vadd.f32 %v208, 1e-05
    %v217 = vadd.f32 %v209, 1e-05
    %v218 = vadd.f32 %v210, 1e-05
    %v219 = vadd.f32 %v211, 1e-05
    %v220 = vrsqrt.pop %v212
    %v221 = vrsqrt.pop %v213
    %v222 = vrsqrt.pop %v214
    %v223 = vrsqrt.pop %v215
    %v224 = vrsqrt.pop %v216
    %v225 = vrsqrt.pop %v217
    %v226 = vrsqrt.pop %v218
    %v227 = vrsqrt.pop %v219
    %v228 = vmul.f32 %v172, %v220
    %v229 = vmul.f32 %v173, %v221
    %v230 = vmul.f32 %v174, %v222
    %v231 = vmul.f32 %v175, %v223
    %v232 = vmul.f32 %v176, %v224
    %v233 = vmul.f32 %v177, %v225
    %v234 = vmul.f32 %v178, %v226
    %v235 = vmul.f32 %v179, %v227
    %v236 = vlaneseq
    %v237 = vshrl.u32 %v236, 7
    %v238 = vsub.s32 0, %v237
    %v239 = vrot.slane %v143, %v238
    %v240 = vmul.f32 %v228, %v239
    %v241 = vmul.f32 %v229, %v239
    %v242 = vmul.f32 %v230, %v239
    %v243 = vmul.f32 %v231, %v239
    %v244 = vmul.f32 %v232, %v239
    %v245 = vmul.f32 %v233, %v239
    %v246 = vmul.f32 %v234, %v239
    %v247 = vmul.f32 %v235, %v239
    %v248 = vlaneseq
    %v249 = vshrl.u32 %v248, 7
    %v250 = vsub.s32 1, %v249
    %v251 = vrot.slane %v143, %v250
    %v252 = vadd.f32 %v240, %v251
    %v253 = vadd.f32 %v241, %v251
    %v254 = vadd.f32 %v242, %v251
    %v255 = vadd.f32 %v243, %v251
    %v256 = vadd.f32 %v244, %v251
    %v257 = vadd.f32 %v245, %v251
    %v258 = vadd.f32 %v246, %v251
    %v259 = vadd.f32 %v247, %v251
    %v260 = vld [vmem:[#allocation7] sm:$0xf]
    %v261 = vld [vmem:[#allocation7 + $0x4] sm:$0xf]
    %v262 = vld [vmem:[#allocation7 + $0x8] sm:$0xf]
    %v263 = vld [vmem:[#allocation7 + $0xc] sm:$0xf]
    %v264 = vld [vmem:[#allocation7 + $0x10] sm:$0xf]
    %v265 = vld [vmem:[#allocation7 + $0x14] sm:$0xf]
    %v266 = vld [vmem:[#allocation7 + $0x18] sm:$0xf]
    %v267 = vld [vmem:[#allocation7 + $0x1c] sm:$0xf]
    %v268 = vld [vmem:[#allocation7 + $0x20] sm:$0xf]
    %v269 = vld [vmem:[#allocation7 + $0x24] sm:$0xf]
    %v270 = vld [vmem:[#allocation7 + $0x28] sm:$0xf]
    %v271 = vld [vmem:[#allocation7 + $0x2c] sm:$0xf]
    %v272 = vld [vmem:[#allocation7 + $0x30] sm:$0xf]
    %v273 = vld [vmem:[#allocation7 + $0x34] sm:$0xf]
    %v274 = vld [vmem:[#allocation7 + $0x38] sm:$0xf]
    %v275 = vld [vmem:[#allocation7 + $0x3c] sm:$0xf]
    %v276 = vpack.c.bf16 %v253, %v252
    %v277 = vpack.c.bf16 %v255, %v254
    %v278 = vpack.c.bf16 %v257, %v256
    %v279 = vpack.c.bf16 %v259, %v258
    %v280 = vlaneseq
    %v281 = vshrl.u32 %v280, 7
    %v282 = vsub.s32 2, %v281
    %v283 = vrot.slane %v143, %v282
    %v300 = vunpack.c.l.b16 %v260
    %v301 = vunpack.c.l.b16 %v261
    %v302 = vunpack.c.l.b16 %v262
    %v303 = vunpack.c.l.b16 %v263
    %v304 = vunpack.c.l.b16 %v264
    %v305 = vunpack.c.l.b16 %v265
    %v306 = vunpack.c.l.b16 %v266
    %v307 = vunpack.c.l.b16 %v267
    %v308 = vunpack.c.l.b16 %v268
    %v309 = vunpack.c.l.b16 %v269
    %v310 = vunpack.c.l.b16 %v270
    %v311 = vunpack.c.l.b16 %v271
    %v312 = vunpack.c.l.b16 %v272
    %v313 = vunpack.c.l.b16 %v273
    %v314 = vunpack.c.l.b16 %v274
    %v315 = vunpack.c.l.b16 %v275
    %v316 = vpack.c.b16 %v301, %v300
    %v317 = vpack.c.b16 %v303, %v302
    %v318 = vpack.c.b16 %v305, %v304
    %v319 = vpack.c.b16 %v307, %v306
    %v320 = vpack.c.b16 %v309, %v308
    %v321 = vpack.c.b16 %v311, %v310
    %v322 = vpack.c.b16 %v313, %v312
    %v323 = vpack.c.b16 %v315, %v314
    %332 = vmatprep.subr.bf16.mxu0 0
    %333 = vmatpush1.bf16.msra.mxu0 %v323
    %334 = vmatprep.subr.bf16.mxu0 0
    %335 = vmatpush1.bf16.msra.mxu0 %v322
    %336 = vmatprep.subr.bf16.mxu0 0
    %337 = vmatpush1.bf16.msra.mxu0 %v321
    %338 = vmatprep.subr.bf16.mxu0 0
    %339 = vmatpush1.bf16.msra.mxu0 %v320
    %340 = vmatprep.subr.bf16.mxu0 0
    %341 = vmatpush1.bf16.msra.mxu0 %v319
    %342 = vmatprep.subr.bf16.mxu0 0
    %343 = vmatpush1.bf16.msra.mxu0 %v318
    %344 = vmatprep.subr.bf16.mxu0 0
    %345 = vmatpush1.bf16.msra.mxu0 %v317
    %346 = vmatprep.subr.bf16.mxu0 0
    %347 = vmatpush1.bf16.msra.mxu0 %v316
    %348 = vmatprep.subr.bf16.mxu0 0
    %349 = vmatpush2.bf16.msra.mxu0 0
    %350 = vmatprep.subr.bf16.mxu0 0
    %351 = vmatpush2.bf16.msra.mxu0 0
    %352 = vmatprep.subr.bf16.mxu0 0
    %353 = vmatpush2.bf16.msra.mxu0 0
    %354 = vmatprep.subr.bf16.mxu0 0
    %355 = vmatpush2.bf16.msra.mxu0 0
    %356 = vmatprep.subr.bf16.mxu0 0
    %357 = vmatpush2.bf16.msra.mxu0 0
    %358 = vmatprep.subr.bf16.mxu0 0
    %359 = vmatpush2.bf16.msra.mxu0 0
    %360 = vmatprep.subr.bf16.mxu0 0
    %361 = vmatpush2.bf16.msra.mxu0 0
    %362 = vmatprep.subr.bf16.mxu0 0
    %363 = vmatpush2.bf16.msra.mxu0 0
    %364 = vmatprep.mubr.bf16.mxu0 0
    %365 = vmatmul.mubr.bf16.gmra.mxu0 %v276
    %v366 = vpop.f32.mrf.mxu0
    %v367 = vadd.f32 %v283, %v366
    %v368 = vpop.f32.mrf.mxu0
    %v369 = vpop.f32.mrf.mxu0
    %v370 = vadd.f32 %v283, %v369
    %v371 = vpop.f32.mrf.mxu0
    %372 = vmatprep.mubr.bf16.mxu0 0
    %373 = vmatmul.mubr.bf16.gmra.mxu0 %v277
    %v374 = vpop.f32.mrf.mxu0
    %v375 = vadd.f32 %v283, %v374
    %v376 = vpop.f32.mrf.mxu0
    %v377 = vpop.f32.mrf.mxu0
    %v378 = vadd.f32 %v283, %v377
    %v379 = vpop.f32.mrf.mxu0
    %380 = vmatprep.mubr.bf16.mxu0 0
    %381 = vmatmul.mubr.bf16.gmra.mxu0 %v278
    %v382 = vpop.f32.mrf.mxu0
    %v383 = vadd.f32 %v283, %v382
    %v384 = vpop.f32.mrf.mxu0
    %v385 = vpop.f32.mrf.mxu0
    %v386 = vadd.f32 %v283, %v385
    %v387 = vpop.f32.mrf.mxu0
    %388 = vmatprep.mubr.bf16.mxu0 0
    %389 = vmatmul.mubr.bf16.gmra.mxu0 %v279
    %v390 = vpop.f32.mrf.mxu0
    %v391 = vadd.f32 %v283, %v390
    %v392 = vpop.f32.mrf.mxu0
    %v393 = vpop.f32.mrf.mxu0
    %v394 = vadd.f32 %v283, %v393
    %v395 = vpop.f32.mrf.mxu0
    %396 = vdwg.mxu0
    %v397 = vadd.f32 %v135, %v136
    %v398 = vrot.slane %v397, 4
    %v399 = vadd.f32 %v397, %v398
    %v400 = vrot.slane %v399, 2
    %v401 = vadd.f32 %v399, %v400
    %v402 = vrot.slane %v401, 1
    %v403 = vadd.f32 %v401, %v402
    %v404 = vadd.f32 %v137, %v138
    %v405 = vrot.slane %v404, 4
    %v406 = vadd.f32 %v404, %v405
    %v407 = vrot.slane %v406, 2
    %v408 = vadd.f32 %v406, %v407
    %v409 = vrot.slane %v408, 1
    %v410 = vadd.f32 %v408, %v409
    %v411 = vadd.f32 %v139, %v140
    %v412 = vrot.slane %v411, 4
    %v413 = vadd.f32 %v411, %v412
    %v414 = vrot.slane %v413, 2
    %v415 = vadd.f32 %v413, %v414
    %v416 = vrot.slane %v415, 1
    %v417 = vadd.f32 %v415, %v416
    %v418 = vadd.f32 %v141, %v142
    %v419 = vrot.slane %v418, 4
    %v420 = vadd.f32 %v418, %v419
    %v421 = vrot.slane %v420, 2
    %v422 = vadd.f32 %v420, %v421
    %v423 = vrot.slane %v422, 1
    %v424 = vadd.f32 %v422, %v423
    %v425 = vrcp.pop 16.0
    %v426 = vmul.f32 %v403, %v425
    %v427 = vmul.f32 %v410, %v425
    %v428 = vmul.f32 %v417, %v425
    %v429 = vmul.f32 %v424, %v425
    %v430 = vsub.f32 %v135, %v426
    %v431 = vsub.f32 %v136, %v426
    %v432 = vsub.f32 %v137, %v427
    %v433 = vsub.f32 %v138, %v427
    %v434 = vsub.f32 %v139, %v428
    %v435 = vsub.f32 %v140, %v428
    %v436 = vsub.f32 %v141, %v429
    %v437 = vsub.f32 %v142, %v429
    %v438 = vmul.f32 %v430, %v430
    %v439 = vmul.f32 %v431, %v431
    %v440 = vmul.f32 %v432, %v432
    %v441 = vmul.f32 %v433, %v433
    %v442 = vmul.f32 %v434, %v434
    %v443 = vmul.f32 %v435, %v435
    %v444 = vmul.f32 %v436, %v436
    %v445 = vmul.f32 %v437, %v437
    %v446 = vadd.f32 %v438, %v439
    %v447 = vrot.slane %v446, 4
    %v448 = vadd.f32 %v446, %v447
    %v449 = vrot.slane %v448, 2
    %v450 = vadd.f32 %v448, %v449
    %v451 = vrot.slane %v450, 1
    %v452 = vadd.f32 %v450, %v451
    %v453 = vadd.f32 %v440, %v441
    %v454 = vrot.slane %v453, 4
    %v455 = vadd.f32 %v453, %v454
    %v456 = vrot.slane %v455, 2
    %v457 = vadd.f32 %v455, %v456
    %v458 = vrot.slane %v457, 1
    %v459 = vadd.f32 %v457, %v458
    %v460 = vadd.f32 %v442, %v443
    %v461 = vrot.slane %v460, 4
    %v462 = vadd.f32 %v460, %v461
    %v463 = vrot.slane %v462, 2
    %v464 = vadd.f32 %v462, %v463
    %v465 = vrot.slane %v464, 1
    %v466 = vadd.f32 %v464, %v465
    %v467 = vadd.f32 %v444, %v445
    %v468 = vrot.slane %v467, 4
    %v469 = vadd.f32 %v467, %v468
    %v470 = vrot.slane %v469, 2
    %v471 = vadd.f32 %v469, %v470
    %v472 = vrot.slane %v471, 1
    %v473 = vadd.f32 %v471, %v472
    %v474 = vmul.f32 %v452, %v425
    %v475 = vmul.f32 %v459, %v425
    %v476 = vmul.f32 %v466, %v425
    %v477 = vmul.f32 %v473, %v425
    %v478 = vadd.f32 %v474, 1e-05
    %v479 = vadd.f32 %v475, 1e-05
    %v480 = vadd.f32 %v476, 1e-05
    %v481 = vadd.f32 %v477, 1e-05
    %v482 = vrsqrt.pop %v478
    %v483 = vrsqrt.pop %v479
    %v484 = vrsqrt.pop %v480
    %v485 = vrsqrt.pop %v481
    %v486 = vmul.f32 %v430, %v482
    %v487 = vmul.f32 %v431, %v482
    %v488 = vmul.f32 %v432, %v483
    %v489 = vmul.f32 %v433, %v483
    %v490 = vmul.f32 %v434, %v484
    %v491 = vmul.f32 %v435, %v484
    %v492 = vmul.f32 %v436, %v485
    %v493 = vmul.f32 %v437, %v485
    %495 = vset.pattern.permute.xlu0 0
    %496 = vperm.xlu0 %495, %v145
    %v497 = vpop.permute.xlu0 %496
    %500 = vset.pattern.permute.xlu0 0
    %501 = vperm.xlu0 %500, %v146
    %v502 = vpop.permute.xlu0 %501
    %v504 = vmul.f32 %v486, %v497
    %v505 = vmul.f32 %v487, %v502
    %v506 = vmul.f32 %v488, %v497
    %v507 = vmul.f32 %v489, %v502
    %v508 = vmul.f32 %v490, %v497
    %v509 = vmul.f32 %v491, %v502
    %v510 = vmul.f32 %v492, %v497
    %v511 = vmul.f32 %v493, %v502
    %512 = vset.pattern.permute.xlu0 1
    %513 = vperm.xlu0 %512, %v145
    %v514 = vpop.permute.xlu0 %513
    %516 = vset.pattern.permute.xlu0 1
    %517 = vperm.xlu0 %516, %v146
    %v518 = vpop.permute.xlu0 %517
    %v520 = vadd.f32 %v504, %v514
    %v521 = vadd.f32 %v505, %v518
    %v522 = vadd.f32 %v506, %v514
    %v523 = vadd.f32 %v507, %v518
    %v524 = vadd.f32 %v508, %v514
    %v525 = vadd.f32 %v509, %v518
    %v526 = vadd.f32 %v510, %v514
    %v527 = vadd.f32 %v511, %v518
    %v528 = vld [vmem:[%s5] sm:$0xf]
    %v529 = vld [vmem:[%s5 + $0x4] sm:$0xf]
    %v530 = vpack.c.bf16 %v521, %v520
    %v531 = vpack.c.bf16 %v523, %v522
    %v532 = vpack.c.bf16 %v525, %v524
    %v533 = vpack.c.bf16 %v527, %v526
    %534 = vset.pattern.permute.xlu0 2
    %535 = vperm.xlu0 %534, %v145
    %v536 = vpop.permute.xlu0 %535
    %538 = vset.pattern.permute.xlu0 2
    %539 = vperm.xlu0 %538, %v146
    %v540 = vpop.permute.xlu0 %539
    %v544 = vunpack.c.l.b16 %v528
    %v545 = vunpack.c.l.b16 %v529
    %v546 = vpack.c.b16 %v545, %v544
    %vm547 = vcmask 130048
    %v549 = vsel %vm547, %v546, 0
    %551 = vmatprep.subr.bf16.mxu0 0
    %552 = vmatpush1.bf16.msra.mxu0 0
    %553 = vmatprep.subr.bf16.mxu0 0
    %554 = vmatpush1.bf16.msra.mxu0 0
    %555 = vmatprep.subr.bf16.mxu0 0
    %556 = vmatpush1.bf16.msra.mxu0 0
    %557 = vmatprep.subr.bf16.mxu0 0
    %558 = vmatpush1.bf16.msra.mxu0 0
    %559 = vmatprep.subr.bf16.mxu0 0
    %560 = vmatpush1.bf16.msra.mxu0 0
    %561 = vmatprep.subr.bf16.mxu0 0
    %562 = vmatpush1.bf16.msra.mxu0 0
    %563 = vmatprep.subr.bf16.mxu0 0
    %564 = vmatpush1.bf16.msra.mxu0 0
    %565 = vmatprep.subr.bf16.mxu0 0
    %566 = vmatpush1.bf16.msra.mxu0 %v530
    %567 = vmatprep.subr.bf16.mxu0 0
    %568 = vmatpush2.bf16.msra.mxu0 0
    %569 = vmatprep.subr.bf16.mxu0 0
    %570 = vmatpush2.bf16.msra.mxu0 0
    %571 = vmatprep.subr.bf16.mxu0 0
    %572 = vmatpush2.bf16.msra.mxu0 0
    %573 = vmatprep.subr.bf16.mxu0 0
    %574 = vmatpush2.bf16.msra.mxu0 0
    %575 = vmatprep.subr.bf16.mxu0 0
    %576 = vmatpush2.bf16.msra.mxu0 0
    %577 = vmatprep.subr.bf16.mxu0 0
    %578 = vmatpush2.bf16.msra.mxu0 0
    %579 = vmatprep.subr.bf16.mxu0 0
    %580 = vmatpush2.bf16.msra.mxu0 0
    %581 = vmatprep.subr.bf16.mxu0 0
    %582 = vmatpush2.bf16.msra.mxu0 0
    %583 = vmatprep.mubr.bf16.mxu0 0
    %584 = vmatmul.mubr.bf16.gmra.mxu0 %v549
    %v585 = vpop.f32.mrf.mxu0
    %v586 = vadd.f32 %v536, %v585
    %v587 = vpop.f32.mrf.mxu0
    %v588 = vpop.f32.mrf.mxu0
    %v589 = vadd.f32 %v540, %v588
    %v590 = vpop.f32.mrf.mxu0
    %591 = vdwg.mxu0
    %592 = vmatprep.subr.bf16.mxu0 0
    %593 = vmatpush1.bf16.msra.mxu0 0
    %594 = vmatprep.subr.bf16.mxu0 0
    %595 = vmatpush1.bf16.msra.mxu0 0
    %596 = vmatprep.subr.bf16.mxu0 0
    %597 = vmatpush1.bf16.msra.mxu0 0
    %598 = vmatprep.subr.bf16.mxu0 0
    %599 = vmatpush1.bf16.msra.mxu0 0
    %600 = vmatprep.subr.bf16.mxu0 0
    %601 = vmatpush1.bf16.msra.mxu0 0
    %602 = vmatprep.subr.bf16.mxu0 0
    %603 = vmatpush1.bf16.msra.mxu0 0
    %604 = vmatprep.subr.bf16.mxu0 0
    %605 = vmatpush1.bf16.msra.mxu0 0
    %606 = vmatprep.subr.bf16.mxu0 0
    %607 = vmatpush1.bf16.msra.mxu0 %v531
    %608 = vmatprep.subr.bf16.mxu0 0
    %609 = vmatpush2.bf16.msra.mxu0 0
    %610 = vmatprep.subr.bf16.mxu0 0
    %611 = vmatpush2.bf16.msra.mxu0 0
    %612 = vmatprep.subr.bf16.mxu0 0
    %613 = vmatpush2.bf16.msra.mxu0 0
    %614 = vmatprep.subr.bf16.mxu0 0
    %615 = vmatpush2.bf16.msra.mxu0 0
    %616 = vmatprep.subr.bf16.mxu0 0
    %617 = vmatpush2.bf16.msra.mxu0 0
    %618 = vmatprep.subr.bf16.mxu0 0
    %619 = vmatpush2.bf16.msra.mxu0 0
    %620 = vmatprep.subr.bf16.mxu0 0
    %621 = vmatpush2.bf16.msra.mxu0 0
    %622 = vmatprep.subr.bf16.mxu0 0
    %623 = vmatpush2.bf16.msra.mxu0 0
    %624 = vmatprep.mubr.bf16.mxu0 0
    %625 = vmatmul.mubr.bf16.gmra.mxu0 %v549
    %v626 = vpop.f32.mrf.mxu0
    %v627 = vadd.f32 %v536, %v626
    %v628 = vpop.f32.mrf.mxu0
    %v629 = vpop.f32.mrf.mxu0
    %v630 = vadd.f32 %v540, %v629
    %v631 = vpop.f32.mrf.mxu0
    %632 = vdwg.mxu0
    %633 = vmatprep.subr.bf16.mxu0 0
    %634 = vmatpush1.bf16.msra.mxu0 0
    %635 = vmatprep.subr.bf16.mxu0 0
    %636 = vmatpush1.bf16.msra.mxu0 0
    %637 = vmatprep.subr.bf16.mxu0 0
    %638 = vmatpush1.bf16.msra.mxu0 0
    %639 = vmatprep.subr.bf16.mxu0 0
    %640 = vmatpush1.bf16.msra.mxu0 0
    %641 = vmatprep.subr.bf16.mxu0 0
    %642 = vmatpush1.bf16.msra.mxu0 0
    %643 = vmatprep.subr.bf16.mxu0 0
    %644 = vmatpush1.bf16.msra.mxu0 0
    %645 = vmatprep.subr.bf16.mxu0 0
    %646 = vmatpush1.bf16.msra.mxu0 0
    %647 = vmatprep.subr.bf16.mxu0 0
    %648 = vmatpush1.bf16.msra.mxu0 %v532
    %649 = vmatprep.subr.bf16.mxu0 0
    %650 = vmatpush2.bf16.msra.mxu0 0
    %651 = vmatprep.subr.bf16.mxu0 0
    %652 = vmatpush2.bf16.msra.mxu0 0
    %653 = vmatprep.subr.bf16.mxu0 0
    %654 = vmatpush2.bf16.msra.mxu0 0
    %655 = vmatprep.subr.bf16.mxu0 0
    %656 = vmatpush2.bf16.msra.mxu0 0
    %657 = vmatprep.subr.bf16.mxu0 0
    %658 = vmatpush2.bf16.msra.mxu0 0
    %659 = vmatprep.subr.bf16.mxu0 0
    %660 = vmatpush2.bf16.msra.mxu0 0
    %661 = vmatprep.subr.bf16.mxu0 0
    %662 = vmatpush2.bf16.msra.mxu0 0
    %663 = vmatprep.subr.bf16.mxu0 0
    %664 = vmatpush2.bf16.msra.mxu0 0
    %665 = vmatprep.mubr.bf16.mxu0 0
    %666 = vmatmul.mubr.bf16.gmra.mxu0 %v549
    %v667 = vpop.f32.mrf.mxu0
    %v668 = vadd.f32 %v536, %v667
    %v669 = vpop.f32.mrf.mxu0
    %v670 = vpop.f32.mrf.mxu0
    %v671 = vadd.f32 %v540, %v670
    %v672 = vpop.f32.mrf.mxu0
    %673 = vdwg.mxu0
    %674 = vmatprep.subr.bf16.mxu0 0
    %675 = vmatpush1.bf16.msra.mxu0 0
    %676 = vmatprep.subr.bf16.mxu0 0
    %677 = vmatpush1.bf16.msra.mxu0 0
    %678 = vmatprep.subr.bf16.mxu0 0
    %679 = vmatpush1.bf16.msra.mxu0 0
    %680 = vmatprep.subr.bf16.mxu0 0
    %681 = vmatpush1.bf16.msra.mxu0 0
    %682 = vmatprep.subr.bf16.mxu0 0
    %683 = vmatpush1.bf16.msra.mxu0 0
    %684 = vmatprep.subr.bf16.mxu0 0
    %685 = vmatpush1.bf16.msra.mxu0 0
    %686 = vmatprep.subr.bf16.mxu0 0
    %687 = vmatpush1.bf16.msra.mxu0 0
    %688 = vmatprep.subr.bf16.mxu0 0
    %689 = vmatpush1.bf16.msra.mxu0 %v533
    %690 = vmatprep.subr.bf16.mxu0 0
    %691 = vmatpush2.bf16.msra.mxu0 0
    %692 = vmatprep.subr.bf16.mxu0 0
    %693 = vmatpush2.bf16.msra.mxu0 0
    %694 = vmatprep.subr.bf16.mxu0 0
    %695 = vmatpush2.bf16.msra.mxu0 0
    %696 = vmatprep.subr.bf16.mxu0 0
    %697 = vmatpush2.bf16.msra.mxu0 0
    %698 = vmatprep.subr.bf16.mxu0 0
    %699 = vmatpush2.bf16.msra.mxu0 0
    %700 = vmatprep.subr.bf16.mxu0 0
    %701 = vmatpush2.bf16.msra.mxu0 0
    %702 = vmatprep.subr.bf16.mxu0 0
    %703 = vmatpush2.bf16.msra.mxu0 0
    %704 = vmatprep.subr.bf16.mxu0 0
    %705 = vmatpush2.bf16.msra.mxu0 0
    %706 = vmatprep.mubr.bf16.mxu0 0
    %707 = vmatmul.mubr.bf16.gmra.mxu0 %v549
    %v708 = vpop.f32.mrf.mxu0
    %v709 = vadd.f32 %v536, %v708
    %v710 = vpop.f32.mrf.mxu0
    %v711 = vpop.f32.mrf.mxu0
    %v712 = vadd.f32 %v540, %v711
    %v713 = vpop.f32.mrf.mxu0
    %714 = vdwg.mxu0
    %v715 = vadd.f32 %v586, %v367
    %v716 = vadd.f32 %v589, %v370
    %v717 = vadd.f32 %v627, %v375
    %v718 = vadd.f32 %v630, %v378
    %v719 = vadd.f32 %v668, %v383
    %v720 = vadd.f32 %v671, %v386
    %v721 = vadd.f32 %v709, %v391
    %v722 = vadd.f32 %v712, %v394
    %v723 = vld [vmem:[#allocation8] sm:$0xf]
    %v724 = vld [vmem:[#allocation8 + $0x4] sm:$0xf]
    %v725 = vld [vmem:[#allocation8 + $0x8] sm:$0xf]
    %v726 = vld [vmem:[#allocation8 + $0xc] sm:$0xf]
    %v727 = vld [vmem:[#allocation8 + $0x10] sm:$0xf]
    %v728 = vld [vmem:[#allocation8 + $0x14] sm:$0xf]
    %v729 = vld [vmem:[#allocation8 + $0x18] sm:$0xf]
    %v730 = vld [vmem:[#allocation8 + $0x1c] sm:$0xf]
    %v731 = vld [vmem:[#allocation8 + $0x20] sm:$0xf]
    %v732 = vld [vmem:[#allocation8 + $0x24] sm:$0xf]
    %v733 = vld [vmem:[#allocation8 + $0x28] sm:$0xf]
    %v734 = vld [vmem:[#allocation8 + $0x2c] sm:$0xf]
    %v735 = vld [vmem:[#allocation8 + $0x30] sm:$0xf]
    %v736 = vld [vmem:[#allocation8 + $0x34] sm:$0xf]
    %v737 = vld [vmem:[#allocation8 + $0x38] sm:$0xf]
    %v738 = vld [vmem:[#allocation8 + $0x3c] sm:$0xf]
    %v739 = vpack.c.bf16 %v716, %v715
    %v740 = vpack.c.bf16 %v718, %v717
    %v741 = vpack.c.bf16 %v720, %v719
    %v742 = vpack.c.bf16 %v722, %v721
    %v743 = vlaneseq
    %v744 = vshrl.u32 %v743, 7
    %v745 = vsub.s32 3, %v744
    %v746 = vrot.slane %v143, %v745
    %v763 = vunpack.c.l.b16 %v723
    %v764 = vunpack.c.l.b16 %v724
    %v765 = vunpack.c.l.b16 %v725
    %v766 = vunpack.c.l.b16 %v726
    %v767 = vunpack.c.l.b16 %v727
    %v768 = vunpack.c.l.b16 %v728
    %v769 = vunpack.c.l.b16 %v729
    %v770 = vunpack.c.l.b16 %v730
    %v771 = vunpack.c.l.b16 %v731
    %v772 = vunpack.c.l.b16 %v732
    %v773 = vunpack.c.l.b16 %v733
    %v774 = vunpack.c.l.b16 %v734
    %v775 = vunpack.c.l.b16 %v735
    %v776 = vunpack.c.l.b16 %v736
    %v777 = vunpack.c.l.b16 %v737
    %v778 = vunpack.c.l.b16 %v738
    %v779 = vpack.c.b16 %v764, %v763
    %v780 = vpack.c.b16 %v766, %v765
    %v781 = vpack.c.b16 %v768, %v767
    %v782 = vpack.c.b16 %v770, %v769
    %v783 = vpack.c.b16 %v772, %v771
    %v784 = vpack.c.b16 %v774, %v773
    %v785 = vpack.c.b16 %v776, %v775
    %v786 = vpack.c.b16 %v778, %v777
    %795 = vmatprep.subr.bf16.mxu0 0
    %796 = vmatpush1.bf16.msra.mxu0 %v786
    %797 = vmatprep.subr.bf16.mxu0 0
    %798 = vmatpush1.bf16.msra.mxu0 %v785
    %799 = vmatprep.subr.bf16.mxu0 0
    %800 = vmatpush1.bf16.msra.mxu0 %v784
    %801 = vmatprep.subr.bf16.mxu0 0
    %802 = vmatpush1.bf16.msra.mxu0 %v783
    %803 = vmatprep.subr.bf16.mxu0 0
    %804 = vmatpush1.bf16.msra.mxu0 %v782
    %805 = vmatprep.subr.bf16.mxu0 0
    %806 = vmatpush1.bf16.msra.mxu0 %v781
    %807 = vmatprep.subr.bf16.mxu0 0
    %808 = vmatpush1.bf16.msra.mxu0 %v780
    %809 = vmatprep.subr.bf16.mxu0 0
    %810 = vmatpush1.bf16.msra.mxu0 %v779
    %811 = vmatprep.subr.bf16.mxu0 0
    %812 = vmatpush2.bf16.msra.mxu0 0
    %813 = vmatprep.subr.bf16.mxu0 0
    %814 = vmatpush2.bf16.msra.mxu0 0
    %815 = vmatprep.subr.bf16.mxu0 0
    %816 = vmatpush2.bf16.msra.mxu0 0
    %817 = vmatprep.subr.bf16.mxu0 0
    %818 = vmatpush2.bf16.msra.mxu0 0
    %819 = vmatprep.subr.bf16.mxu0 0
    %820 = vmatpush2.bf16.msra.mxu0 0
    %821 = vmatprep.subr.bf16.mxu0 0
    %822 = vmatpush2.bf16.msra.mxu0 0
    %823 = vmatprep.subr.bf16.mxu0 0
    %824 = vmatpush2.bf16.msra.mxu0 0
    %825 = vmatprep.subr.bf16.mxu0 0
    %826 = vmatpush2.bf16.msra.mxu0 0
    %827 = vmatprep.mubr.bf16.mxu0 0
    %828 = vmatmul.mubr.bf16.gmra.mxu0 %v739
    %v829 = vpop.f32.mrf.mxu0
    %v830 = vadd.f32 %v746, %v829
    %v831 = vpop.f32.mrf.mxu0
    %v832 = vpop.f32.mrf.mxu0
    %v833 = vadd.f32 %v746, %v832
    %v834 = vpop.f32.mrf.mxu0
    %835 = vmatprep.mubr.bf16.mxu0 0
    %836 = vmatmul.mubr.bf16.gmra.mxu0 %v740
    %v837 = vpop.f32.mrf.mxu0
    %v838 = vadd.f32 %v746, %v837
    %v839 = vpop.f32.mrf.mxu0
    %v840 = vpop.f32.mrf.mxu0
    %v841 = vadd.f32 %v746, %v840
    %v842 = vpop.f32.mrf.mxu0
    %843 = vmatprep.mubr.bf16.mxu0 0
    %844 = vmatmul.mubr.bf16.gmra.mxu0 %v741
    %v845 = vpop.f32.mrf.mxu0
    %v846 = vadd.f32 %v746, %v845
    %v847 = vpop.f32.mrf.mxu0
    %v848 = vpop.f32.mrf.mxu0
    %v849 = vadd.f32 %v746, %v848
    %v850 = vpop.f32.mrf.mxu0
    %851 = vmatprep.mubr.bf16.mxu0 0
    %852 = vmatmul.mubr.bf16.gmra.mxu0 %v742
    %v853 = vpop.f32.mrf.mxu0
    %v854 = vadd.f32 %v746, %v853
    %v855 = vpop.f32.mrf.mxu0
    %v856 = vpop.f32.mrf.mxu0
    %v857 = vadd.f32 %v746, %v856
    %v858 = vpop.f32.mrf.mxu0
    %859 = vdwg.mxu0
    %v860 = vadd.f32 %v252, %v830
    %v861 = vadd.f32 %v253, %v833
    %v862 = vadd.f32 %v254, %v838
    %v863 = vadd.f32 %v255, %v841
    %v864 = vadd.f32 %v256, %v846
    %v865 = vadd.f32 %v257, %v849
    %v866 = vadd.f32 %v258, %v854
    %v867 = vadd.f32 %v259, %v857
    %868 = vadd.xlane.f32.xlu0 %v860
    %v869 = vpop.xlane.xlu0 %868
    %870 = vadd.xlane.f32.xlu0 %v861
    %v871 = vpop.xlane.xlu0 %870
    %872 = vadd.xlane.f32.xlu0 %v862
    %v873 = vpop.xlane.xlu0 %872
    %874 = vadd.xlane.f32.xlu0 %v863
    %v875 = vpop.xlane.xlu0 %874
    %876 = vadd.xlane.f32.xlu0 %v864
    %v877 = vpop.xlane.xlu0 %876
    %878 = vadd.xlane.f32.xlu0 %v865
    %v879 = vpop.xlane.xlu0 %878
    %880 = vadd.xlane.f32.xlu0 %v866
    %v881 = vpop.xlane.xlu0 %880
    %882 = vadd.xlane.f32.xlu0 %v867
    %v883 = vpop.xlane.xlu0 %882
    %v884 = vmul.f32 %v869, %v163
    %v885 = vmul.f32 %v871, %v163
    %v886 = vmul.f32 %v873, %v163
    %v887 = vmul.f32 %v875, %v163
    %v888 = vmul.f32 %v877, %v163
    %v889 = vmul.f32 %v879, %v163
    %v890 = vmul.f32 %v881, %v163
    %v891 = vmul.f32 %v883, %v163
    %v892 = vsub.f32 %v860, %v884
    %v893 = vsub.f32 %v861, %v885
    %v894 = vsub.f32 %v862, %v886
    %v895 = vsub.f32 %v863, %v887
    %v896 = vsub.f32 %v864, %v888
    %v897 = vsub.f32 %v865, %v889
    %v898 = vsub.f32 %v866, %v890
    %v899 = vsub.f32 %v867, %v891
    %v900 = vmul.f32 %v892, %v892
    %v901 = vmul.f32 %v893, %v893
    %v902 = vmul.f32 %v894, %v894
    %v903 = vmul.f32 %v895, %v895
    %v904 = vmul.f32 %v896, %v896
    %v905 = vmul.f32 %v897, %v897
    %v906 = vmul.f32 %v898, %v898
    %v907 = vmul.f32 %v899, %v899
    %908 = vadd.xlane.f32.xlu0 %v900
    %v909 = vpop.xlane.xlu0 %908
    %910 = vadd.xlane.f32.xlu0 %v901
    %v911 = vpop.xlane.xlu0 %910
    %912 = vadd.xlane.f32.xlu0 %v902
    %v913 = vpop.xlane.xlu0 %912
    %914 = vadd.xlane.f32.xlu0 %v903
    %v915 = vpop.xlane.xlu0 %914
    %916 = vadd.xlane.f32.xlu0 %v904
    %v917 = vpop.xlane.xlu0 %916
    %918 = vadd.xlane.f32.xlu0 %v905
    %v919 = vpop.xlane.xlu0 %918
    %920 = vadd.xlane.f32.xlu0 %v906
    %v921 = vpop.xlane.xlu0 %920
    %922 = vadd.xlane.f32.xlu0 %v907
    %v923 = vpop.xlane.xlu0 %922
    %v924 = vmul.f32 %v909, %v163
    %v925 = vmul.f32 %v911, %v163
    %v926 = vmul.f32 %v913, %v163
    %v927 = vmul.f32 %v915, %v163
    %v928 = vmul.f32 %v917, %v163
    %v929 = vmul.f32 %v919, %v163
    %v930 = vmul.f32 %v921, %v163
    %v931 = vmul.f32 %v923, %v163
    %v932 = vadd.f32 %v924, 1e-05
    %v933 = vadd.f32 %v925, 1e-05
    %v934 = vadd.f32 %v926, 1e-05
    %v935 = vadd.f32 %v927, 1e-05
    %v936 = vadd.f32 %v928, 1e-05
    %v937 = vadd.f32 %v929, 1e-05
    %v938 = vadd.f32 %v930, 1e-05
    %v939 = vadd.f32 %v931, 1e-05
    %v940 = vrsqrt.pop %v932
    %v941 = vrsqrt.pop %v933
    %v942 = vrsqrt.pop %v934
    %v943 = vrsqrt.pop %v935
    %v944 = vrsqrt.pop %v936
    %v945 = vrsqrt.pop %v937
    %v946 = vrsqrt.pop %v938
    %v947 = vrsqrt.pop %v939
    %v948 = vmul.f32 %v892, %v940
    %v949 = vmul.f32 %v893, %v941
    %v950 = vmul.f32 %v894, %v942
    %v951 = vmul.f32 %v895, %v943
    %v952 = vmul.f32 %v896, %v944
    %v953 = vmul.f32 %v897, %v945
    %v954 = vmul.f32 %v898, %v946
    %v955 = vmul.f32 %v899, %v947
    %v956 = vmul.f32 %v948, %v239
    %v957 = vmul.f32 %v949, %v239
    %v958 = vmul.f32 %v950, %v239
    %v959 = vmul.f32 %v951, %v239
    %v960 = vmul.f32 %v952, %v239
    %v961 = vmul.f32 %v953, %v239
    %v962 = vmul.f32 %v954, %v239
    %v963 = vmul.f32 %v955, %v239
    %v964 = vadd.f32 %v956, %v251
    %v965 = vadd.f32 %v957, %v251
    %v966 = vadd.f32 %v958, %v251
    %v967 = vadd.f32 %v959, %v251
    %v968 = vadd.f32 %v960, %v251
    %v969 = vadd.f32 %v961, %v251
    %v970 = vadd.f32 %v962, %v251
    %v971 = vadd.f32 %v963, %v251
    %v972 = vld [vmem:[#allocation10] sm:$0xff]
    %v973 = vld [vmem:[#allocation10 + $0x8] sm:$0xff]
    %v974 = vld [vmem:[#allocation10 + $0x10] sm:$0xff]
    %v975 = vld [vmem:[#allocation10 + $0x18] sm:$0xff]
    %v976 = vld [vmem:[#allocation10 + $0x20] sm:$0xff]
    %v977 = vld [vmem:[#allocation10 + $0x28] sm:$0xff]
    %v978 = vld [vmem:[#allocation10 + $0x30] sm:$0xff]
    %v979 = vld [vmem:[#allocation10 + $0x38] sm:$0xff]
    %v980 = vld [vmem:[#allocation10 + $0x40] sm:$0xff]
    %v981 = vld [vmem:[#allocation10 + $0x48] sm:$0xff]
    %v982 = vld [vmem:[#allocation10 + $0x50] sm:$0xff]
    %v983 = vld [vmem:[#allocation10 + $0x58] sm:$0xff]
    %v984 = vld [vmem:[#allocation10 + $0x60] sm:$0xff]
    %v985 = vld [vmem:[#allocation10 + $0x68] sm:$0xff]
    %v986 = vld [vmem:[#allocation10 + $0x70] sm:$0xff]
    %v987 = vld [vmem:[#allocation10 + $0x78] sm:$0xff]
    %v988 = vld [vmem:[#allocation10 + $0x80] sm:$0xff]
    %v989 = vld [vmem:[#allocation10 + $0x88] sm:$0xff]
    %v990 = vld [vmem:[#allocation10 + $0x90] sm:$0xff]
    %v991 = vld [vmem:[#allocation10 + $0x98] sm:$0xff]
    %v992 = vld [vmem:[#allocation10 + $0xa0] sm:$0xff]
    %v993 = vld [vmem:[#allocation10 + $0xa8] sm:$0xff]
    %v994 = vld [vmem:[#allocation10 + $0xb0] sm:$0xff]
    %v995 = vld [vmem:[#allocation10 + $0xb8] sm:$0xff]
    %v996 = vld [vmem:[#allocation10 + $0xc0] sm:$0xff]
    %v997 = vld [vmem:[#allocation10 + $0xc8] sm:$0xff]
    %v998 = vld [vmem:[#allocation10 + $0xd0] sm:$0xff]
    %v999 = vld [vmem:[#allocation10 + $0xd8] sm:$0xff]
    %v1000 = vld [vmem:[#allocation10 + $0xe0] sm:$0xff]
    %v1001 = vld [vmem:[#allocation10 + $0xe8] sm:$0xff]
    %v1002 = vld [vmem:[#allocation10 + $0xf0] sm:$0xff]
    %v1003 = vld [vmem:[#allocation10 + $0xf8] sm:$0xff]
    %v1004 = vpack.c.bf16 %v965, %v964
    %v1005 = vpack.c.bf16 %v967, %v966
    %v1006 = vpack.c.bf16 %v969, %v968
    %v1007 = vpack.c.bf16 %v971, %v970
    %v1009 = vlaneseq
    %v1010 = vshrl.u32 %v1009, 7
    %v1011 = vsub.s32 0, %v1010
    %v1012 = vrot.slane %v144, %v1011
    %v1013 = vlaneseq
    %v1014 = vshrl.u32 %v1013, 7
    %v1015 = vsub.s32 1, %v1014
    %v1016 = vrot.slane %v144, %v1015
    %v1017 = vlaneseq
    %v1018 = vshrl.u32 %v1017, 7
    %v1019 = vsub.s32 2, %v1018
    %v1020 = vrot.slane %v144, %v1019
    %v1021 = vlaneseq
    %v1022 = vshrl.u32 %v1021, 7
    %v1023 = vsub.s32 3, %v1022
    %v1024 = vrot.slane %v144, %v1023
    %v1061 = vunpack.c.l.b16 %v972
    %v1062 = vunpack.c.h.b16 %v972
    %v1063 = vunpack.c.l.b16 %v973
    %v1064 = vunpack.c.h.b16 %v973
    %v1065 = vunpack.c.l.b16 %v974
    %v1066 = vunpack.c.h.b16 %v974
    %v1067 = vunpack.c.l.b16 %v975
    %v1068 = vunpack.c.h.b16 %v975
    %v1069 = vunpack.c.l.b16 %v976
    %v1070 = vunpack.c.h.b16 %v976
    %v1071 = vunpack.c.l.b16 %v977
    %v1072 = vunpack.c.h.b16 %v977
    %v1073 = vunpack.c.l.b16 %v978
    %v1074 = vunpack.c.h.b16 %v978
    %v1075 = vunpack.c.l.b16 %v979
    %v1076 = vunpack.c.h.b16 %v979
    %v1077 = vunpack.c.l.b16 %v980
    %v1078 = vunpack.c.h.b16 %v980
    %v1079 = vunpack.c.l.b16 %v981
    %v1080 = vunpack.c.h.b16 %v981
    %v1081 = vunpack.c.l.b16 %v982
    %v1082 = vunpack.c.h.b16 %v982
    %v1083 = vunpack.c.l.b16 %v983
    %v1084 = vunpack.c.h.b16 %v983
    %v1085 = vunpack.c.l.b16 %v984
    %v1086 = vunpack.c.h.b16 %v984
    %v1087 = vunpack.c.l.b16 %v985
    %v1088 = vunpack.c.h.b16 %v985
    %v1089 = vunpack.c.l.b16 %v986
    %v1090 = vunpack.c.h.b16 %v986
    %v1091 = vunpack.c.l.b16 %v987
    %v1092 = vunpack.c.h.b16 %v987
    %v1093 = vunpack.c.l.b16 %v988
    %v1094 = vunpack.c.h.b16 %v988
    %v1095 = vunpack.c.l.b16 %v989
    %v1096 = vunpack.c.h.b16 %v989
    %v1097 = vunpack.c.l.b16 %v990
    %v1098 = vunpack.c.h.b16 %v990
    %v1099 = vunpack.c.l.b16 %v991
    %v1100 = vunpack.c.h.b16 %v991
    %v1101 = vunpack.c.l.b16 %v992
    %v1102 = vunpack.c.h.b16 %v992
    %v1103 = vunpack.c.l.b16 %v993
    %v1104 = vunpack.c.h.b16 %v993
    %v1105 = vunpack.c.l.b16 %v994
    %v1106 = vunpack.c.h.b16 %v994
    %v1107 = vunpack.c.l.b16 %v995
    %v1108 = vunpack.c.h.b16 %v995
    %v1109 = vunpack.c.l.b16 %v996
    %v1110 = vunpack.c.h.b16 %v996
    %v1111 = vunpack.c.l.b16 %v997
    %v1112 = vunpack.c.h.b16 %v997
    %v1113 = vunpack.c.l.b16 %v998
    %v1114 = vunpack.c.h.b16 %v998
    %v1115 = vunpack.c.l.b16 %v999
    %v1116 = vunpack.c.h.b16 %v999
    %v1117 = vunpack.c.l.b16 %v1000
    %v1118 = vunpack.c.h.b16 %v1000
    %v1119 = vunpack.c.l.b16 %v1001
    %v1120 = vunpack.c.h.b16 %v1001
    %v1121 = vunpack.c.l.b16 %v1002
    %v1122 = vunpack.c.h.b16 %v1002
    %v1123 = vunpack.c.l.b16 %v1003
    %v1124 = vunpack.c.h.b16 %v1003
    %v1125 = vpack.c.b16 %v1065, %v1061
    %v1126 = vpack.c.b16 %v1066, %v1062
    %v1127 = vpack.c.b16 %v1067, %v1063
    %v1128 = vpack.c.b16 %v1068, %v1064
    %v1129 = vpack.c.b16 %v1073, %v1069
    %v1130 = vpack.c.b16 %v1074, %v1070
    %v1131 = vpack.c.b16 %v1075, %v1071
    %v1132 = vpack.c.b16 %v1076, %v1072
    %v1133 = vpack.c.b16 %v1081, %v1077
    %v1134 = vpack.c.b16 %v1082, %v1078
    %v1135 = vpack.c.b16 %v1083, %v1079
    %v1136 = vpack.c.b16 %v1084, %v1080
    %v1137 = vpack.c.b16 %v1089, %v1085
    %v1138 = vpack.c.b16 %v1090, %v1086
    %v1139 = vpack.c.b16 %v1091, %v1087
    %v1140 = vpack.c.b16 %v1092, %v1088
    %v1141 = vpack.c.b16 %v1097, %v1093
    %v1142 = vpack.c.b16 %v1098, %v1094
    %v1143 = vpack.c.b16 %v1099, %v1095
    %v1144 = vpack.c.b16 %v1100, %v1096
    %v1145 = vpack.c.b16 %v1105, %v1101
    %v1146 = vpack.c.b16 %v1106, %v1102
    %v1147 = vpack.c.b16 %v1107, %v1103
    %v1148 = vpack.c.b16 %v1108, %v1104
    %v1149 = vpack.c.b16 %v1113, %v1109
    %v1150 = vpack.c.b16 %v1114, %v1110
    %v1151 = vpack.c.b16 %v1115, %v1111
    %v1152 = vpack.c.b16 %v1116, %v1112
    %v1153 = vpack.c.b16 %v1121, %v1117
    %v1154 = vpack.c.b16 %v1122, %v1118
    %v1155 = vpack.c.b16 %v1123, %v1119
    %v1156 = vpack.c.b16 %v1124, %v1120
    %1189 = vmatprep.subr.bf16.mxu0 %v1154
    %1190 = vmatpush1.bf16.msra.mxu0 %v1153
    %1191 = vmatprep.subr.bf16.mxu0 %v1150
    %1192 = vmatpush1.bf16.msra.mxu0 %v1149
    %1193 = vmatprep.subr.bf16.mxu0 %v1146
    %1194 = vmatpush1.bf16.msra.mxu0 %v1145
    %1195 = vmatprep.subr.bf16.mxu0 %v1142
    %1196 = vmatpush1.bf16.msra.mxu0 %v1141
    %1197 = vmatprep.subr.bf16.mxu0 %v1138
    %1198 = vmatpush1.bf16.msra.mxu0 %v1137
    %1199 = vmatprep.subr.bf16.mxu0 %v1134
    %1200 = vmatpush1.bf16.msra.mxu0 %v1133
    %1201 = vmatprep.subr.bf16.mxu0 %v1130
    %1202 = vmatpush1.bf16.msra.mxu0 %v1129
    %1203 = vmatprep.subr.bf16.mxu0 %v1126
    %1204 = vmatpush1.bf16.msra.mxu0 %v1125
    %1205 = vmatprep.subr.bf16.mxu0 0
    %1206 = vmatpush2.bf16.msra.mxu0 0
    %1207 = vmatprep.subr.bf16.mxu0 0
    %1208 = vmatpush2.bf16.msra.mxu0 0
    %1209 = vmatprep.subr.bf16.mxu0 0
    %1210 = vmatpush2.bf16.msra.mxu0 0
    %1211 = vmatprep.subr.bf16.mxu0 0
    %1212 = vmatpush2.bf16.msra.mxu0 0
    %1213 = vmatprep.subr.bf16.mxu0 0
    %1214 = vmatpush2.bf16.msra.mxu0 0
    %1215 = vmatprep.subr.bf16.mxu0 0
    %1216 = vmatpush2.bf16.msra.mxu0 0
    %1217 = vmatprep.subr.bf16.mxu0 0
    %1218 = vmatpush2.bf16.msra.mxu0 0
    %1219 = vmatprep.subr.bf16.mxu0 0
    %1220 = vmatpush2.bf16.msra.mxu0 0
    %1221 = vmatprep.mubr.bf16.mxu0 0
    %1222 = vmatmul.mubr.bf16.gmra.mxu0 %v1004
    %v1223 = vpop.f32.mrf.mxu0
    %v1224 = vadd.f32 %v1012, %v1223
    %v1225 = vpop.f32.mrf.mxu0
    %v1226 = vadd.f32 %v1016, %v1225
    %v1227 = vpop.f32.mrf.mxu0
    %v1228 = vadd.f32 %v1012, %v1227
    %v1229 = vpop.f32.mrf.mxu0
    %v1230 = vadd.f32 %v1016, %v1229
    %1231 = vmatprep.mubr.bf16.mxu0 0
    %1232 = vmatmul.mubr.bf16.gmra.mxu0 %v1005
    %v1233 = vpop.f32.mrf.mxu0
    %v1234 = vadd.f32 %v1012, %v1233
    %v1235 = vpop.f32.mrf.mxu0
    %v1236 = vadd.f32 %v1016, %v1235
    %v1237 = vpop.f32.mrf.mxu0
    %v1238 = vadd.f32 %v1012, %v1237
    %v1239 = vpop.f32.mrf.mxu0
    %v1240 = vadd.f32 %v1016, %v1239
    %1241 = vmatprep.mubr.bf16.mxu0 0
    %1242 = vmatmul.mubr.bf16.gmra.mxu0 %v1006
    %v1243 = vpop.f32.mrf.mxu0
    %v1244 = vadd.f32 %v1012, %v1243
    %v1245 = vpop.f32.mrf.mxu0
    %v1246 = vadd.f32 %v1016, %v1245
    %v1247 = vpop.f32.mrf.mxu0
    %v1248 = vadd.f32 %v1012, %v1247
    %v1249 = vpop.f32.mrf.mxu0
    %v1250 = vadd.f32 %v1016, %v1249
    %1251 = vmatprep.mubr.bf16.mxu0 0
    %1252 = vmatmul.mubr.bf16.gmra.mxu0 %v1007
    %v1253 = vpop.f32.mrf.mxu0
    %v1254 = vadd.f32 %v1012, %v1253
    %v1255 = vpop.f32.mrf.mxu0
    %v1256 = vadd.f32 %v1016, %v1255
    %v1257 = vpop.f32.mrf.mxu0
    %v1258 = vadd.f32 %v1012, %v1257
    %v1259 = vpop.f32.mrf.mxu0
    %v1260 = vadd.f32 %v1016, %v1259
    %1261 = vdwg.mxu0
    %1262 = vmatprep.subr.bf16.mxu0 %v1156
    %1263 = vmatpush1.bf16.msra.mxu0 %v1155
    %1264 = vmatprep.subr.bf16.mxu0 %v1152
    %1265 = vmatpush1.bf16.msra.mxu0 %v1151
    %1266 = vmatprep.subr.bf16.mxu0 %v1148
    %1267 = vmatpush1.bf16.msra.mxu0 %v1147
    %1268 = vmatprep.subr.bf16.mxu0 %v1144
    %1269 = vmatpush1.bf16.msra.mxu0 %v1143
    %1270 = vmatprep.subr.bf16.mxu0 %v1140
    %1271 = vmatpush1.bf16.msra.mxu0 %v1139
    %1272 = vmatprep.subr.bf16.mxu0 %v1136
    %1273 = vmatpush1.bf16.msra.mxu0 %v1135
    %1274 = vmatprep.subr.bf16.mxu0 %v1132
    %1275 = vmatpush1.bf16.msra.mxu0 %v1131
    %1276 = vmatprep.subr.bf16.mxu0 %v1128
    %1277 = vmatpush1.bf16.msra.mxu0 %v1127
    %1278 = vmatprep.subr.bf16.mxu0 0
    %1279 = vmatpush2.bf16.msra.mxu0 0
    %1280 = vmatprep.subr.bf16.mxu0 0
    %1281 = vmatpush2.bf16.msra.mxu0 0
    %1282 = vmatprep.subr.bf16.mxu0 0
    %1283 = vmatpush2.bf16.msra.mxu0 0
    %1284 = vmatprep.subr.bf16.mxu0 0
    %1285 = vmatpush2.bf16.msra.mxu0 0
    %1286 = vmatprep.subr.bf16.mxu0 0
    %1287 = vmatpush2.bf16.msra.mxu0 0
    %1288 = vmatprep.subr.bf16.mxu0 0
    %1289 = vmatpush2.bf16.msra.mxu0 0
    %1290 = vmatprep.subr.bf16.mxu0 0
    %1291 = vmatpush2.bf16.msra.mxu0 0
    %1292 = vmatprep.subr.bf16.mxu0 0
    %1293 = vmatpush2.bf16.msra.mxu0 0
    %1294 = vmatprep.mubr.bf16.mxu0 0
    %1295 = vmatmul.mubr.bf16.gmra.mxu0 %v1004
    %v1296 = vpop.f32.mrf.mxu0
    %v1297 = vadd.f32 %v1020, %v1296
    %v1298 = vpop.f32.mrf.mxu0
    %v1299 = vadd.f32 %v1024, %v1298
    %v1300 = vpop.f32.mrf.mxu0
    %v1301 = vadd.f32 %v1020, %v1300
    %v1302 = vpop.f32.mrf.mxu0
    %v1303 = vadd.f32 %v1024, %v1302
    %1304 = vmatprep.mubr.bf16.mxu0 0
    %1305 = vmatmul.mubr.bf16.gmra.mxu0 %v1005
    %v1306 = vpop.f32.mrf.mxu0
    %v1307 = vadd.f32 %v1020, %v1306
    %v1308 = vpop.f32.mrf.mxu0
    %v1309 = vadd.f32 %v1024, %v1308
    %v1310 = vpop.f32.mrf.mxu0
    %v1311 = vadd.f32 %v1020, %v1310
    %v1312 = vpop.f32.mrf.mxu0
    %v1313 = vadd.f32 %v1024, %v1312
    %1314 = vmatprep.mubr.bf16.mxu0 0
    %1315 = vmatmul.mubr.bf16.gmra.mxu0 %v1006
    %v1316 = vpop.f32.mrf.mxu0
    %v1317 = vadd.f32 %v1020, %v1316
    %v1318 = vpop.f32.mrf.mxu0
    %v1319 = vadd.f32 %v1024, %v1318
    %v1320 = vpop.f32.mrf.mxu0
    %v1321 = vadd.f32 %v1020, %v1320
    %v1322 = vpop.f32.mrf.mxu0
    %v1323 = vadd.f32 %v1024, %v1322
    %1324 = vmatprep.mubr.bf16.mxu0 0
    %1325 = vmatmul.mubr.bf16.gmra.mxu0 %v1007
    %v1326 = vpop.f32.mrf.mxu0
    %v1327 = vadd.f32 %v1020, %v1326
    %v1328 = vpop.f32.mrf.mxu0
    %v1329 = vadd.f32 %v1024, %v1328
    %v1330 = vpop.f32.mrf.mxu0
    %v1331 = vadd.f32 %v1020, %v1330
    %v1332 = vpop.f32.mrf.mxu0
    %v1333 = vadd.f32 %v1024, %v1332
    %1334 = vdwg.mxu0
    %v1335 = vmul.f32 %v1224, 0.5
    %v1336 = vmul.f32 %v1226, 0.5
    %v1337 = vmul.f32 %v1297, 0.5
    %v1338 = vmul.f32 %v1299, 0.5
    %v1339 = vmul.f32 %v1228, 0.5
    %v1340 = vmul.f32 %v1230, 0.5
    %v1341 = vmul.f32 %v1301, 0.5
    %v1342 = vmul.f32 %v1303, 0.5
    %v1343 = vmul.f32 %v1234, 0.5
    %v1344 = vmul.f32 %v1236, 0.5
    %v1345 = vmul.f32 %v1307, 0.5
    %v1346 = vmul.f32 %v1309, 0.5
    %v1347 = vmul.f32 %v1238, 0.5
    %v1348 = vmul.f32 %v1240, 0.5
    %v1349 = vmul.f32 %v1311, 0.5
    %v1350 = vmul.f32 %v1313, 0.5
    %v1351 = vmul.f32 %v1244, 0.5
    %v1352 = vmul.f32 %v1246, 0.5
    %v1353 = vmul.f32 %v1317, 0.5
    %v1354 = vmul.f32 %v1319, 0.5
    %v1355 = vmul.f32 %v1248, 0.5
    %v1356 = vmul.f32 %v1250, 0.5
    %v1357 = vmul.f32 %v1321, 0.5
    %v1358 = vmul.f32 %v1323, 0.5
    %v1359 = vmul.f32 %v1254, 0.5
    %v1360 = vmul.f32 %v1256, 0.5
    %v1361 = vmul.f32 %v1327, 0.5
    %v1362 = vmul.f32 %v1329, 0.5
    %v1363 = vmul.f32 %v1258, 0.5
    %v1364 = vmul.f32 %v1260, 0.5
    %v1365 = vmul.f32 %v1331, 0.5
    %v1366 = vmul.f32 %v1333, 0.5
    %v1367 = vmul.f32 %v1224, 0.70710677
    %v1368 = vmul.f32 %v1226, 0.70710677
    %v1369 = vmul.f32 %v1297, 0.70710677
    %v1370 = vmul.f32 %v1299, 0.70710677
    %v1371 = vmul.f32 %v1228, 0.70710677
    %v1372 = vmul.f32 %v1230, 0.70710677
    %v1373 = vmul.f32 %v1301, 0.70710677
    %v1374 = vmul.f32 %v1303, 0.70710677
    %v1375 = vmul.f32 %v1234, 0.70710677
    %v1376 = vmul.f32 %v1236, 0.70710677
    %v1377 = vmul.f32 %v1307, 0.70710677
    %v1378 = vmul.f32 %v1309, 0.70710677
    %v1379 = vmul.f32 %v1238, 0.70710677
    %v1380 = vmul.f32 %v1240, 0.70710677
    %v1381 = vmul.f32 %v1311, 0.70710677
    %v1382 = vmul.f32 %v1313, 0.70710677
    %v1383 = vmul.f32 %v1244, 0.70710677
    %v1384 = vmul.f32 %v1246, 0.70710677
    %v1385 = vmul.f32 %v1317, 0.70710677
    %v1386 = vmul.f32 %v1319, 0.70710677
    %v1387 = vmul.f32 %v1248, 0.70710677
    %v1388 = vmul.f32 %v1250, 0.70710677
    %v1389 = vmul.f32 %v1321, 0.70710677
    %v1390 = vmul.f32 %v1323, 0.70710677
    %v1391 = vmul.f32 %v1254, 0.70710677
    %v1392 = vmul.f32 %v1256, 0.70710677
    %v1393 = vmul.f32 %v1327, 0.70710677
    %v1394 = vmul.f32 %v1329, 0.70710677
    %v1395 = vmul.f32 %v1258, 0.70710677
    %v1396 = vmul.f32 %v1260, 0.70710677
    %v1397 = vmul.f32 %v1331, 0.70710677
    %v1398 = vmul.f32 %v1333, 0.70710677
    %v1399 = verf.f32.pop %v1367
    %v1400 = verf.f32.pop %v1368
    %v1401 = verf.f32.pop %v1369
    %v1402 = verf.f32.pop %v1370
    %v1403 = verf.f32.pop %v1371
    %v1404 = verf.f32.pop %v1372
    %v1405 = verf.f32.pop %v1373
    %v1406 = verf.f32.pop %v1374
    %v1407 = verf.f32.pop %v1375
    %v1408 = verf.f32.pop %v1376
    %v1409 = verf.f32.pop %v1377
    %v1410 = verf.f32.pop %v1378
    %v1411 = verf.f32.pop %v1379
    %v1412 = verf.f32.pop %v1380
    %v1413 = verf.f32.pop %v1381
    %v1414 = verf.f32.pop %v1382
    %v1415 = verf.f32.pop %v1383
    %v1416 = verf.f32.pop %v1384
    %v1417 = verf.f32.pop %v1385
    %v1418 = verf.f32.pop %v1386
    %v1419 = verf.f32.pop %v1387
    %v1420 = verf.f32.pop %v1388
    %v1421 = verf.f32.pop %v1389
    %v1422 = verf.f32.pop %v1390
    %v1423 = verf.f32.pop %v1391
    %v1424 = verf.f32.pop %v1392
    %v1425 = verf.f32.pop %v1393
    %v1426 = verf.f32.pop %v1394
    %v1427 = verf.f32.pop %v1395
    %v1428 = verf.f32.pop %v1396
    %v1429 = verf.f32.pop %v1397
    %v1430 = verf.f32.pop %v1398
    %v1431 = vadd.f32 %v1399, 1.0
    %v1432 = vadd.f32 %v1400, 1.0
    %v1433 = vadd.f32 %v1401, 1.0
    %v1434 = vadd.f32 %v1402, 1.0
    %v1435 = vadd.f32 %v1403, 1.0
    %v1436 = vadd.f32 %v1404, 1.0
    %v1437 = vadd.f32 %v1405, 1.0
    %v1438 = vadd.f32 %v1406, 1.0
    %v1439 = vadd.f32 %v1407, 1.0
    %v1440 = vadd.f32 %v1408, 1.0
    %v1441 = vadd.f32 %v1409, 1.0
    %v1442 = vadd.f32 %v1410, 1.0
    %v1443 = vadd.f32 %v1411, 1.0
    %v1444 = vadd.f32 %v1412, 1.0
    %v1445 = vadd.f32 %v1413, 1.0
    %v1446 = vadd.f32 %v1414, 1.0
    %v1447 = vadd.f32 %v1415, 1.0
    %v1448 = vadd.f32 %v1416, 1.0
    %v1449 = vadd.f32 %v1417, 1.0
    %v1450 = vadd.f32 %v1418, 1.0
    %v1451 = vadd.f32 %v1419, 1.0
    %v1452 = vadd.f32 %v1420, 1.0
    %v1453 = vadd.f32 %v1421, 1.0
    %v1454 = vadd.f32 %v1422, 1.0
    %v1455 = vadd.f32 %v1423, 1.0
    %v1456 = vadd.f32 %v1424, 1.0
    %v1457 = vadd.f32 %v1425, 1.0
    %v1458 = vadd.f32 %v1426, 1.0
    %v1459 = vadd.f32 %v1427, 1.0
    %v1460 = vadd.f32 %v1428, 1.0
    %v1461 = vadd.f32 %v1429, 1.0
    %v1462 = vadd.f32 %v1430, 1.0
    %v1463 = vmul.f32 %v1335, %v1431
    %v1464 = vmul.f32 %v1336, %v1432
    %v1465 = vmul.f32 %v1337, %v1433
    %v1466 = vmul.f32 %v1338, %v1434
    %v1467 = vmul.f32 %v1339, %v1435
    %v1468 = vmul.f32 %v1340, %v1436
    %v1469 = vmul.f32 %v1341, %v1437
    %v1470 = vmul.f32 %v1342, %v1438
    %v1471 = vmul.f32 %v1343, %v1439
    %v1472 = vmul.f32 %v1344, %v1440
    %v1473 = vmul.f32 %v1345, %v1441
    %v1474 = vmul.f32 %v1346, %v1442
    %v1475 = vmul.f32 %v1347, %v1443
    %v1476 = vmul.f32 %v1348, %v1444
    %v1477 = vmul.f32 %v1349, %v1445
    %v1478 = vmul.f32 %v1350, %v1446
    %v1479 = vmul.f32 %v1351, %v1447
    %v1480 = vmul.f32 %v1352, %v1448
    %v1481 = vmul.f32 %v1353, %v1449
    %v1482 = vmul.f32 %v1354, %v1450
    %v1483 = vmul.f32 %v1355, %v1451
    %v1484 = vmul.f32 %v1356, %v1452
    %v1485 = vmul.f32 %v1357, %v1453
    %v1486 = vmul.f32 %v1358, %v1454
    %v1487 = vmul.f32 %v1359, %v1455
    %v1488 = vmul.f32 %v1360, %v1456
    %v1489 = vmul.f32 %v1361, %v1457
    %v1490 = vmul.f32 %v1362, %v1458
    %v1491 = vmul.f32 %v1363, %v1459
    %v1492 = vmul.f32 %v1364, %v1460
    %v1493 = vmul.f32 %v1365, %v1461
    %v1494 = vmul.f32 %v1366, %v1462
    %v1495 = vld [vmem:[#allocation11] sm:$0xf]
    %v1496 = vld [vmem:[#allocation11 + $0x4] sm:$0xf]
    %v1497 = vld [vmem:[#allocation11 + $0x8] sm:$0xf]
    %v1498 = vld [vmem:[#allocation11 + $0xc] sm:$0xf]
    %v1499 = vld [vmem:[#allocation11 + $0x10] sm:$0xf]
    %v1500 = vld [vmem:[#allocation11 + $0x14] sm:$0xf]
    %v1501 = vld [vmem:[#allocation11 + $0x18] sm:$0xf]
    %v1502 = vld [vmem:[#allocation11 + $0x1c] sm:$0xf]
    %v1503 = vld [vmem:[#allocation11 + $0x20] sm:$0xf]
    %v1504 = vld [vmem:[#allocation11 + $0x24] sm:$0xf]
    %v1505 = vld [vmem:[#allocation11 + $0x28] sm:$0xf]
    %v1506 = vld [vmem:[#allocation11 + $0x2c] sm:$0xf]
    %v1507 = vld [vmem:[#allocation11 + $0x30] sm:$0xf]
    %v1508 = vld [vmem:[#allocation11 + $0x34] sm:$0xf]
    %v1509 = vld [vmem:[#allocation11 + $0x38] sm:$0xf]
    %v1510 = vld [vmem:[#allocation11 + $0x3c] sm:$0xf]
    %v1511 = vld [vmem:[#allocation11 + $0x40] sm:$0xf]
    %v1512 = vld [vmem:[#allocation11 + $0x44] sm:$0xf]
    %v1513 = vld [vmem:[#allocation11 + $0x48] sm:$0xf]
    %v1514 = vld [vmem:[#allocation11 + $0x4c] sm:$0xf]
    %v1515 = vld [vmem:[#allocation11 + $0x50] sm:$0xf]
    %v1516 = vld [vmem:[#allocation11 + $0x54] sm:$0xf]
    %v1517 = vld [vmem:[#allocation11 + $0x58] sm:$0xf]
    %v1518 = vld [vmem:[#allocation11 + $0x5c] sm:$0xf]
    %v1519 = vld [vmem:[#allocation11 + $0x60] sm:$0xf]
    %v1520 = vld [vmem:[#allocation11 + $0x64] sm:$0xf]
    %v1521 = vld [vmem:[#allocation11 + $0x68] sm:$0xf]
    %v1522 = vld [vmem:[#allocation11 + $0x6c] sm:$0xf]
    %v1523 = vld [vmem:[#allocation11 + $0x70] sm:$0xf]
    %v1524 = vld [vmem:[#allocation11 + $0x74] sm:$0xf]
    %v1525 = vld [vmem:[#allocation11 + $0x78] sm:$0xf]
    %v1526 = vld [vmem:[#allocation11 + $0x7c] sm:$0xf]
    %v1527 = vld [vmem:[#allocation11 + $0x80] sm:$0xf]
    %v1528 = vld [vmem:[#allocation11 + $0x84] sm:$0xf]
    %v1529 = vld [vmem:[#allocation11 + $0x88] sm:$0xf]
    %v1530 = vld [vmem:[#allocation11 + $0x8c] sm:$0xf]
    %v1531 = vld [vmem:[#allocation11 + $0x90] sm:$0xf]
    %v1532 = vld [vmem:[#allocation11 + $0x94] sm:$0xf]
    %v1533 = vld [vmem:[#allocation11 + $0x98] sm:$0xf]
    %v1534 = vld [vmem:[#allocation11 + $0x9c] sm:$0xf]
    %v1535 = vld [vmem:[#allocation11 + $0xa0] sm:$0xf]
    %v1536 = vld [vmem:[#allocation11 + $0xa4] sm:$0xf]
    %v1537 = vld [vmem:[#allocation11 + $0xa8] sm:$0xf]
    %v1538 = vld [vmem:[#allocation11 + $0xac] sm:$0xf]
    %v1539 = vld [vmem:[#allocation11 + $0xb0] sm:$0xf]
    %v1540 = vld [vmem:[#allocation11 + $0xb4] sm:$0xf]
    %v1541 = vld [vmem:[#allocation11 + $0xb8] sm:$0xf]
    %v1542 = vld [vmem:[#allocation11 + $0xbc] sm:$0xf]
    %v1543 = vld [vmem:[#allocation11 + $0xc0] sm:$0xf]
    %v1544 = vld [vmem:[#allocation11 + $0xc4] sm:$0xf]
    %v1545 = vld [vmem:[#allocation11 + $0xc8] sm:$0xf]
    %v1546 = vld [vmem:[#allocation11 + $0xcc] sm:$0xf]
    %v1547 = vld [vmem:[#allocation11 + $0xd0] sm:$0xf]
    %v1548 = vld [vmem:[#allocation11 + $0xd4] sm:$0xf]
    %v1549 = vld [vmem:[#allocation11 + $0xd8] sm:$0xf]
    %v1550 = vld [vmem:[#allocation11 + $0xdc] sm:$0xf]
    %v1551 = vld [vmem:[#allocation11 + $0xe0] sm:$0xf]
    %v1552 = vld [vmem:[#allocation11 + $0xe4] sm:$0xf]
    %v1553 = vld [vmem:[#allocation11 + $0xe8] sm:$0xf]
    %v1554 = vld [vmem:[#allocation11 + $0xec] sm:$0xf]
    %v1555 = vld [vmem:[#allocation11 + $0xf0] sm:$0xf]
    %v1556 = vld [vmem:[#allocation11 + $0xf4] sm:$0xf]
    %v1557 = vld [vmem:[#allocation11 + $0xf8] sm:$0xf]
    %v1558 = vld [vmem:[#allocation11 + $0xfc] sm:$0xf]
    %v1559 = vpack.c.bf16 %v1467, %v1463
    %v1560 = vpack.c.bf16 %v1468, %v1464
    %v1561 = vpack.c.bf16 %v1469, %v1465
    %v1562 = vpack.c.bf16 %v1470, %v1466
    %v1563 = vpack.c.bf16 %v1475, %v1471
    %v1564 = vpack.c.bf16 %v1476, %v1472
    %v1565 = vpack.c.bf16 %v1477, %v1473
    %v1566 = vpack.c.bf16 %v1478, %v1474
    %v1567 = vpack.c.bf16 %v1483, %v1479
    %v1568 = vpack.c.bf16 %v1484, %v1480
    %v1569 = vpack.c.bf16 %v1485, %v1481
    %v1570 = vpack.c.bf16 %v1486, %v1482
    %v1571 = vpack.c.bf16 %v1491, %v1487
    %v1572 = vpack.c.bf16 %v1492, %v1488
    %v1573 = vpack.c.bf16 %v1493, %v1489
    %v1574 = vpack.c.bf16 %v1494, %v1490
    %v1575 = vlaneseq
    %v1576 = vshrl.u32 %v1575, 7
    %v1577 = vsub.s32 4, %v1576
    %v1578 = vrot.slane %v143, %v1577
    %v1643 = vunpack.c.l.b16 %v1495
    %v1644 = vunpack.c.l.b16 %v1496
    %v1645 = vunpack.c.l.b16 %v1497
    %v1646 = vunpack.c.l.b16 %v1498
    %v1647 = vunpack.c.l.b16 %v1499
    %v1648 = vunpack.c.l.b16 %v1500
    %v1649 = vunpack.c.l.b16 %v1501
    %v1650 = vunpack.c.l.b16 %v1502
    %v1651 = vunpack.c.l.b16 %v1503
    %v1652 = vunpack.c.l.b16 %v1504
    %v1653 = vunpack.c.l.b16 %v1505
    %v1654 = vunpack.c.l.b16 %v1506
    %v1655 = vunpack.c.l.b16 %v1507
    %v1656 = vunpack.c.l.b16 %v1508
    %v1657 = vunpack.c.l.b16 %v1509
    %v1658 = vunpack.c.l.b16 %v1510
    %v1659 = vunpack.c.l.b16 %v1511
    %v1660 = vunpack.c.l.b16 %v1512
    %v1661 = vunpack.c.l.b16 %v1513
    %v1662 = vunpack.c.l.b16 %v1514
    %v1663 = vunpack.c.l.b16 %v1515
    %v1664 = vunpack.c.l.b16 %v1516
    %v1665 = vunpack.c.l.b16 %v1517
    %v1666 = vunpack.c.l.b16 %v1518
    %v1667 = vunpack.c.l.b16 %v1519
    %v1668 = vunpack.c.l.b16 %v1520
    %v1669 = vunpack.c.l.b16 %v1521
    %v1670 = vunpack.c.l.b16 %v1522
    %v1671 = vunpack.c.l.b16 %v1523
    %v1672 = vunpack.c.l.b16 %v1524
    %v1673 = vunpack.c.l.b16 %v1525
    %v1674 = vunpack.c.l.b16 %v1526
    %v1675 = vunpack.c.l.b16 %v1527
    %v1676 = vunpack.c.l.b16 %v1528
    %v1677 = vunpack.c.l.b16 %v1529
    %v1678 = vunpack.c.l.b16 %v1530
    %v1679 = vunpack.c.l.b16 %v1531
    %v1680 = vunpack.c.l.b16 %v1532
    %v1681 = vunpack.c.l.b16 %v1533
    %v1682 = vunpack.c.l.b16 %v1534
    %v1683 = vunpack.c.l.b16 %v1535
    %v1684 = vunpack.c.l.b16 %v1536
    %v1685 = vunpack.c.l.b16 %v1537
    %v1686 = vunpack.c.l.b16 %v1538
    %v1687 = vunpack.c.l.b16 %v1539
    %v1688 = vunpack.c.l.b16 %v1540
    %v1689 = vunpack.c.l.b16 %v1541
    %v1690 = vunpack.c.l.b16 %v1542
    %v1691 = vunpack.c.l.b16 %v1543
    %v1692 = vunpack.c.l.b16 %v1544
    %v1693 = vunpack.c.l.b16 %v1545
    %v1694 = vunpack.c.l.b16 %v1546
    %v1695 = vunpack.c.l.b16 %v1547
    %v1696 = vunpack.c.l.b16 %v1548
    %v1697 = vunpack.c.l.b16 %v1549
    %v1698 = vunpack.c.l.b16 %v1550
    %v1699 = vunpack.c.l.b16 %v1551
    %v1700 = vunpack.c.l.b16 %v1552
    %v1701 = vunpack.c.l.b16 %v1553
    %v1702 = vunpack.c.l.b16 %v1554
    %v1703 = vunpack.c.l.b16 %v1555
    %v1704 = vunpack.c.l.b16 %v1556
    %v1705 = vunpack.c.l.b16 %v1557
    %v1706 = vunpack.c.l.b16 %v1558
    %v1707 = vpack.c.b16 %v1644, %v1643
    %v1708 = vpack.c.b16 %v1646, %v1645
    %v1709 = vpack.c.b16 %v1648, %v1647
    %v1710 = vpack.c.b16 %v1650, %v1649
    %v1711 = vpack.c.b16 %v1652, %v1651
    %v1712 = vpack.c.b16 %v1654, %v1653
    %v1713 = vpack.c.b16 %v1656, %v1655
    %v1714 = vpack.c.b16 %v1658, %v1657
    %v1715 = vpack.c.b16 %v1660, %v1659
    %v1716 = vpack.c.b16 %v1662, %v1661
    %v1717 = vpack.c.b16 %v1664, %v1663
    %v1718 = vpack.c.b16 %v1666, %v1665
    %v1719 = vpack.c.b16 %v1668, %v1667
    %v1720 = vpack.c.b16 %v1670, %v1669
    %v1721 = vpack.c.b16 %v1672, %v1671
    %v1722 = vpack.c.b16 %v1674, %v1673
    %v1723 = vpack.c.b16 %v1676, %v1675
    %v1724 = vpack.c.b16 %v1678, %v1677
    %v1725 = vpack.c.b16 %v1680, %v1679
    %v1726 = vpack.c.b16 %v1682, %v1681
    %v1727 = vpack.c.b16 %v1684, %v1683
    %v1728 = vpack.c.b16 %v1686, %v1685
    %v1729 = vpack.c.b16 %v1688, %v1687
    %v1730 = vpack.c.b16 %v1690, %v1689
    %v1731 = vpack.c.b16 %v1692, %v1691
    %v1732 = vpack.c.b16 %v1694, %v1693
    %v1733 = vpack.c.b16 %v1696, %v1695
    %v1734 = vpack.c.b16 %v1698, %v1697
    %v1735 = vpack.c.b16 %v1700, %v1699
    %v1736 = vpack.c.b16 %v1702, %v1701
    %v1737 = vpack.c.b16 %v1704, %v1703
    %v1738 = vpack.c.b16 %v1706, %v1705
    %1771 = vmatprep.subr.bf16.mxu0 0
    %1772 = vmatpush1.bf16.msra.mxu0 %v1714
    %1773 = vmatprep.subr.bf16.mxu0 0
    %1774 = vmatpush1.bf16.msra.mxu0 %v1713
    %1775 = vmatprep.subr.bf16.mxu0 0
    %1776 = vmatpush1.bf16.msra.mxu0 %v1712
    %1777 = vmatprep.subr.bf16.mxu0 0
    %1778 = vmatpush1.bf16.msra.mxu0 %v1711
    %1779 = vmatprep.subr.bf16.mxu0 0
    %1780 = vmatpush1.bf16.msra.mxu0 %v1710
    %1781 = vmatprep.subr.bf16.mxu0 0
    %1782 = vmatpush1.bf16.msra.mxu0 %v1709
    %1783 = vmatprep.subr.bf16.mxu0 0
    %1784 = vmatpush1.bf16.msra.mxu0 %v1708
    %1785 = vmatprep.subr.bf16.mxu0 0
    %1786 = vmatpush1.bf16.msra.mxu0 %v1707
    %1787 = vmatprep.subr.bf16.mxu0 0
    %1788 = vmatpush2.bf16.msra.mxu0 %v1722
    %1789 = vmatprep.subr.bf16.mxu0 0
    %1790 = vmatpush2.bf16.msra.mxu0 %v1721
    %1791 = vmatprep.subr.bf16.mxu0 0
    %1792 = vmatpush2.bf16.msra.mxu0 %v1720
    %1793 = vmatprep.subr.bf16.mxu0 0
    %1794 = vmatpush2.bf16.msra.mxu0 %v1719
    %1795 = vmatprep.subr.bf16.mxu0 0
    %1796 = vmatpush2.bf16.msra.mxu0 %v1718
    %1797 = vmatprep.subr.bf16.mxu0 0
    %1798 = vmatpush2.bf16.msra.mxu0 %v1717
    %1799 = vmatprep.subr.bf16.mxu0 0
    %1800 = vmatpush2.bf16.msra.mxu0 %v1716
    %1801 = vmatprep.subr.bf16.mxu0 0
    %1802 = vmatpush2.bf16.msra.mxu0 %v1715
    %1803 = vmatprep.mubr.bf16.mxu0 %v1560
    %1804 = vmatmul.mubr.bf16.gmra.mxu0 %v1559
    %v1805 = vpop.f32.mrf.mxu0
    %v1806 = vadd.f32 %v1578, %v1805
    %v1807 = vpop.f32.mrf.mxu0
    %v1808 = vpop.f32.mrf.mxu0
    %v1809 = vadd.f32 %v1578, %v1808
    %v1810 = vpop.f32.mrf.mxu0
    %1811 = vmatprep.mubr.bf16.mxu0 %v1564
    %1812 = vmatmul.mubr.bf16.gmra.mxu0 %v1563
    %v1813 = vpop.f32.mrf.mxu0
    %v1814 = vadd.f32 %v1578, %v1813
    %v1815 = vpop.f32.mrf.mxu0
    %v1816 = vpop.f32.mrf.mxu0
    %v1817 = vadd.f32 %v1578, %v1816
    %v1818 = vpop.f32.mrf.mxu0
    %1819 = vmatprep.mubr.bf16.mxu0 %v1568
    %1820 = vmatmul.mubr.bf16.gmra.mxu0 %v1567
    %v1821 = vpop.f32.mrf.mxu0
    %v1822 = vadd.f32 %v1578, %v1821
    %v1823 = vpop.f32.mrf.mxu0
    %v1824 = vpop.f32.mrf.mxu0
    %v1825 = vadd.f32 %v1578, %v1824
    %v1826 = vpop.f32.mrf.mxu0
    %1827 = vmatprep.mubr.bf16.mxu0 %v1572
    %1828 = vmatmul.mubr.bf16.gmra.mxu0 %v1571
    %v1829 = vpop.f32.mrf.mxu0
    %v1830 = vadd.f32 %v1578, %v1829
    %v1831 = vpop.f32.mrf.mxu0
    %v1832 = vpop.f32.mrf.mxu0
    %v1833 = vadd.f32 %v1578, %v1832
    %v1834 = vpop.f32.mrf.mxu0
    %1835 = vdwg.mxu0
    %1836 = vmatprep.subr.bf16.mxu0 0
    %1837 = vmatpush1.bf16.msra.mxu0 %v1730
    %1838 = vmatprep.subr.bf16.mxu0 0
    %1839 = vmatpush1.bf16.msra.mxu0 %v1729
    %1840 = vmatprep.subr.bf16.mxu0 0
    %1841 = vmatpush1.bf16.msra.mxu0 %v1728
    %1842 = vmatprep.subr.bf16.mxu0 0
    %1843 = vmatpush1.bf16.msra.mxu0 %v1727
    %1844 = vmatprep.subr.bf16.mxu0 0
    %1845 = vmatpush1.bf16.msra.mxu0 %v1726
    %1846 = vmatprep.subr.bf16.mxu0 0
    %1847 = vmatpush1.bf16.msra.mxu0 %v1725
    %1848 = vmatprep.subr.bf16.mxu0 0
    %1849 = vmatpush1.bf16.msra.mxu0 %v1724
    %1850 = vmatprep.subr.bf16.mxu0 0
    %1851 = vmatpush1.bf16.msra.mxu0 %v1723
    %1852 = vmatprep.subr.bf16.mxu0 0
    %1853 = vmatpush2.bf16.msra.mxu0 %v1738
    %1854 = vmatprep.subr.bf16.mxu0 0
    %1855 = vmatpush2.bf16.msra.mxu0 %v1737
    %1856 = vmatprep.subr.bf16.mxu0 0
    %1857 = vmatpush2.bf16.msra.mxu0 %v1736
    %1858 = vmatprep.subr.bf16.mxu0 0
    %1859 = vmatpush2.bf16.msra.mxu0 %v1735
    %1860 = vmatprep.subr.bf16.mxu0 0
    %1861 = vmatpush2.bf16.msra.mxu0 %v1734
    %1862 = vmatprep.subr.bf16.mxu0 0
    %1863 = vmatpush2.bf16.msra.mxu0 %v1733
    %1864 = vmatprep.subr.bf16.mxu0 0
    %1865 = vmatpush2.bf16.msra.mxu0 %v1732
    %1866 = vmatprep.subr.bf16.mxu0 0
    %1867 = vmatpush2.bf16.msra.mxu0 %v1731
    %1868 = vmatprep.mubr.bf16.mxu0 %v1562
    %1869 = vmatmul.mubr.bf16.gmra.mxu0 %v1561
    %v1870 = vpop.f32.mrf.mxu0
    %v1871 = vadd.f32 %v1806, %v1870
    %v1872 = vpop.f32.mrf.mxu0
    %v1873 = vpop.f32.mrf.mxu0
    %v1874 = vadd.f32 %v1809, %v1873
    %v1875 = vpop.f32.mrf.mxu0
    %1876 = vmatprep.mubr.bf16.mxu0 %v1566
    %1877 = vmatmul.mubr.bf16.gmra.mxu0 %v1565
    %v1878 = vpop.f32.mrf.mxu0
    %v1879 = vadd.f32 %v1814, %v1878
    %v1880 = vpop.f32.mrf.mxu0
    %v1881 = vpop.f32.mrf.mxu0
    %v1882 = vadd.f32 %v1817, %v1881
    %v1883 = vpop.f32.mrf.mxu0
    %1884 = vmatprep.mubr.bf16.mxu0 %v1570
    %1885 = vmatmul.mubr.bf16.gmra.mxu0 %v1569
    %v1886 = vpop.f32.mrf.mxu0
    %v1887 = vadd.f32 %v1822, %v1886
    %v1888 = vpop.f32.mrf.mxu0
    %v1889 = vpop.f32.mrf.mxu0
    %v1890 = vadd.f32 %v1825, %v1889
    %v1891 = vpop.f32.mrf.mxu0
    %1892 = vmatprep.mubr.bf16.mxu0 %v1574
    %1893 = vmatmul.mubr.bf16.gmra.mxu0 %v1573
    %v1894 = vpop.f32.mrf.mxu0
    %v1895 = vadd.f32 %v1830, %v1894
    %v1896 = vpop.f32.mrf.mxu0
    %v1897 = vpop.f32.mrf.mxu0
    %v1898 = vadd.f32 %v1833, %v1897
    %v1899 = vpop.f32.mrf.mxu0
    %1900 = vdwg.mxu0
    %v1901 = vadd.f32 %v860, %v1871
    %v1902 = vadd.f32 %v861, %v1874
    %v1903 = vadd.f32 %v862, %v1879
    %v1904 = vadd.f32 %v863, %v1882
    %v1905 = vadd.f32 %v864, %v1887
    %v1906 = vadd.f32 %v865, %v1890
    %v1907 = vadd.f32 %v866, %v1895
    %v1908 = vadd.f32 %v867, %v1898
    %1909 = vst [vmem:[#allocation13] sm:$0xff] %v1901
    %1910 = vst [vmem:[#allocation13 + $0x8] sm:$0xff] %v1902
    %1911 = vst [vmem:[#allocation13 + $0x10] sm:$0xff] %v1903
    %1912 = vst [vmem:[#allocation13 + $0x18] sm:$0xff] %v1904
    %1913 = vst [vmem:[#allocation13 + $0x20] sm:$0xff] %v1905
    %1914 = vst [vmem:[#allocation13 + $0x28] sm:$0xff] %v1906
    %1915 = vst [vmem:[#allocation13 + $0x30] sm:$0xff] %v1907
    %1916 = vst [vmem:[#allocation13 + $0x38] sm:$0xff] %v1908
    // Predicated region
    $region66: #{tpu_custom_call.1} parent=1 // pred_check
      _
    $region67: #{tpu_custom_call.1} parent=1 // pred_check_branch
      %1918 = sbr.rel (0) target = $region69
    $region68: #{tpu_custom_call.1} parent=1 // pred_region
      %s1920 = ssub.s32 1024, 1024
      %1921 = vsyncadd [#allocation4], %s1920
      %s1922 = sshll.u32 [#allocation13], 4
      %s1923 = int_to_ptr.vmem [resolvable:$true] %s1922
      %1928 = dma.vmem_to_hbm [thread:$0]  %s1923, 1024, %s10, [#allocation4], 128, 128, 8
    $region69: #{tpu_custom_call.1} parent=1 // pred_fallthru
      _
    // Predicated region
    $region70: #{tpu_custom_call.1} parent=1 // pred_check
      _
    $region71: #{tpu_custom_call.1} parent=1 // pred_check_branch
      %1930 = sbr.rel (0) target = $region73
    $region72: #{tpu_custom_call.1} parent=1 // pred_region
      %1931 = dma.done [#allocation4], 1024
    $region73: #{tpu_custom_call.1} parent=1 // pred_fallthru
      _
    %1932 = vsyncpa [#allocation3], 1
    %1933 = vsyncpa [#allocation6], 1
    %1934 = vsyncpa [#allocation9], 1
    %1935 = vsyncpa [#allocation12], 1
    %1936 = vsyncpa [#allocation4], 1

</llo_original>
